<compile_context>
chip_gen: v7x
topology: tpu7x:2x2x1
jax: 0.10.0
libtpu: 0.0.40
codegen_flags: <defaults>
</compile_context>

<pallas_src>
import jax
import jax.numpy as jnp
import numpy as np
from jax import lax
from jax.experimental import pallas as pl
from jax.experimental.pallas import tpu as pltpu


# ---------------------------------------------------------------------------
# Pallas kernel: one (batch, N-tile) block per grid step, channels-first layout
# ---------------------------------------------------------------------------
def _make_kernel(num_mlp: int, skip: bool, c2: int):
    def kernel(*refs):
        (xyz2_ref, xyz1cf_ref, sq2_ref, sq1_ref, p1_ref, p2a_ref,
         aW1, ab1, aW2, ab2, bW1, bb1, bW2, bb2) = refs[:14]
        mlp_refs = refs[14:14 + 2 * num_mlp]
        out_ref = refs[14 + 2 * num_mlp]

        f32 = jnp.float32
        bf16 = jnp.bfloat16

        xyz2 = xyz2_ref[0]       # (S, 3)   f32  (native layout)
        xyz1cf = xyz1cf_ref[0]   # (3, TN)  f32  (channels-first)
        sq2 = sq2_ref[0]         # (S, 1)   f32  = ||xyz2||^2
        sq1 = sq1_ref[0]         # (1, TN)  f32  = ||xyz1||^2
        p1 = p1_ref[0]           # (C1, TN) bf16 (native channels-first)
        p2a = p2a_ref[0]         # (C2+1, S) bf16 = [points2 ; ones]

        s = xyz2.shape[0]
        tn = xyz1cf.shape[1]

        # ---- square_distance -> (S, TN): S on sublanes, N-tile on lanes ----
        d = -2.0 * lax.dot_general(xyz2, xyz1cf, (((1,), (0,)), ((), ())),
                                   preferred_element_type=f32)
        d = d + sq2              # broadcast over lanes
        d = d + sq1              # broadcast over sublanes
        d = jnp.maximum(d, 0.0)  # robustness for near-coincident points

        # ---- 4 nearest neighbours -> UNNORMALIZED inv-distance weights (S,TN)
        # One min-reduction + 3 elementwise passes per k; exact f32 distances so the
        # selected points match the reference.  (Exact ties -> both columns selected;
        # only matters for exactly duplicated source points.)
        def knn_body(_, carry):
            dd, w_mat = carry
            m = jnp.min(dd, axis=0, keepdims=True)          # (1, TN)
            w_k = pl.reciprocal(m + 1e-8, approx=True)      # EUP slot
            sel = dd == m
            w_mat = w_mat + jnp.where(sel, w_k, 0.0)
            dd = jnp.where(sel, jnp.inf, dd)
            return dd, w_mat

        _, w_mat = lax.fori_loop(0, 4, knn_body,
                                 (d, jnp.zeros((s, tn), f32)), unroll=True)

        # ---- interpolation: one matmul gives weighted features AND weight sum
        # acc = [points2 ; ones] @ w_mat -> rows 0..C2-1 unnormalized, row C2 = norm.
        acc = lax.dot_general(p2a, w_mat.astype(bf16), (((1,), (0,)), ((), ())),
                              preferred_element_type=f32)           # (C2+1, TN)
        inv_norm = pl.reciprocal(acc[c2:c2 + 1, :], approx=True)    # (1, TN)
        interp = acc[:c2, :] * inv_norm                             # (C2, TN)

        # concat skip features along channels (sublane axis -> cheap)
        new_f = jnp.concatenate([p1.astype(f32), interp], axis=0)   # (in_ch, TN) f32
        new_b = new_f.astype(bf16)

        def mm(w, x):  # plain (Cout,Cin) @ (Cin,TN), bf16 operands, f32 accumulate
            return lax.dot_general(w, x, (((1,), (0,)), ((), ())),
                                   preferred_element_type=f32)

        # ---- channel attention: Conv1d+BN(fold)+ReLU, Conv1d, Sigmoid ------
        h = jnp.maximum(mm(aW1[...], new_b) + ab1[...], 0.0)
        att = jax.nn.sigmoid(mm(aW2[...], h.astype(bf16)) + ab2[...])
        x = new_f * att
        identity = x

        # ---- boundary-aware branch on raw xyz ------------------------------
        hb = jnp.maximum(mm(bW1[...], xyz1cf.astype(bf16)) + bb1[...], 0.0)
        edge = mm(bW2[...], hb.astype(bf16)) + bb2[...]

        # ---- MLP stack: Conv1d(k=1)+BN(fold)+ReLU --------------------------
        for li in range(num_mlp):
            w = mlp_refs[2 * li][...]
            b = mlp_refs[2 * li + 1][...]
            x = jnp.maximum(mm(w, x.astype(bf16)) + b, 0.0)

        if skip:
            x = x + identity
        x = x + edge
        out_ref[0] = x.astype(out_ref.dtype)

    return kernel


# ---------------------------------------------------------------------------
# Tile / VMEM helpers
# ---------------------------------------------------------------------------
def _round_up(x: int, m: int) -> int:
    return ((x + m - 1) // m) * m


def _vmem_limit_bytes() -> int:
    """Scoped-VMEM limit: physical capacity minus headroom (v7x has only 64 MiB/TC)."""
    try:
        cap = int(pltpu.get_tpu_info().vmem_capacity_bytes)
    except Exception:
        cap = 64 * 1024 * 1024  # conservative fallback: smallest current generation
    return int(min(max(cap - 16 * 1024 * 1024, 32 * 1024 * 1024), 112 * 1024 * 1024))


def _pick_tile_n(n: int, s: int, target: int) -> int:
    """Multiple-of-128 tile over N; capped so the (S, TN) f32 temporaries stay bounded."""
    budget = 12 * 1024 * 1024                               # ~3-4 live (S,TN) f32 arrays
    max_tn = max(128, (budget // (4 * 4 * max(s, 8)) // 128) * 128)
    tn = min(max(int(target) // 128, 1) * 128, _round_up(n, 128), max_tn)
    return max(tn, 128)


# ---------------------------------------------------------------------------
# Wrapper (PyTorch layouts in / out; all relayout done once, outside the kernel)
# ---------------------------------------------------------------------------
def enhanced_feature_propagation(xyz1, xyz2, points1, points2, params, mlp, tile_n=1024):
    """xyz1 [B,N,3], xyz2 [B,S,3], points1 [B,C1,N], points2 [B,C2,S].
    Returns [B, mlp[-1], N] (matching the PyTorch module)."""
    B, N, _ = xyz1.shape
    S = xyz2.shape[1]
    # TODO(synk): S == 1 branch (points2.repeat) and points1 is None not implemented.
    assert S >= 4 and points1 is not None, "need >= 4 source points and skip features"

    f32, bf16 = jnp.float32, jnp.bfloat16
    C1, C2 = points1.shape[1], points2.shape[1]
    in_ch = C1 + C2
    out_ch = mlp[-1]
    skip = (in_ch == out_ch)
    num_mlp = len(mlp)

    # ---- tile / grid selection ------------------------------------------------
    tn = _pick_tile_n(N, S, tile_n)
    n_pad = _round_up(N, tn)
    # keep >= 2 grid steps so both TensorCores (v7x) get work under "parallel"
    while B * (n_pad // tn) < 2 and tn > 128:
        tn = max(128, ((tn // 2) // 128) * 128)
        n_pad = _round_up(N, tn)
    n_tiles = n_pad // tn

    # ---- layout prep (tiny; avoids per-grid-step in-kernel transposes) ---------
    xyz1_f = jnp.asarray(xyz1, f32)
    p1 = jnp.asarray(points1, f32)
    if n_pad != N:
        xyz1_f = jnp.pad(xyz1_f, ((0, 0), (0, n_pad - N), (0, 0)))
        p1 = jnp.pad(p1, ((0, 0), (0, 0), (0, n_pad - N)))
    xyz2_f = jnp.asarray(xyz2, f32)                                   # (B, S, 3)
    xyz1_cf = jnp.transpose(xyz1_f, (0, 2, 1))                        # (B, 3, Np) f32
    sq1 = jnp.sum(xyz1_f * xyz1_f, axis=-1)[:, None, :]               # (B, 1, Np)
    sq2 = jnp.sum(xyz2_f * xyz2_f, axis=-1, keepdims=True)            # (B, S, 1)
    p1_b = p1.astype(bf16)                                            # (B, C1, Np)
    p2a = jnp.concatenate([jnp.asarray(points2, f32),
                           jnp.ones((B, 1, S), f32)], axis=1).astype(bf16)  # (B, C2+1, S)

    # Weights pre-transposed to (Cout, Cin) bf16; biases as f32 (Cout, 1) columns.
    def mat(w):
        return jnp.asarray(w, f32).T.astype(bf16)

    def col(b):
        return jnp.asarray(b, f32).reshape(-1, 1)

    aW1, ab1, aW2, ab2, bW1, bb1, bW2, bb2 = params[:8]
    flat_w = [mat(aW1), col(ab1), mat(aW2), col(ab2),
              mat(bW1), col(bb1), mat(bW2), col(bb2)]
    for li in range(num_mlp):
        flat_w += [mat(params[8 + 2 * li]), col(params[9 + 2 * li])]

    in_specs = [
        pl.BlockSpec((1, S, 3), lambda b, t: (b, 0, 0)),         # xyz2 (native [B,S,3])
        pl.BlockSpec((1, 3, tn), lambda b, t: (b, 0, t)),        # xyz1 channels-first tile
        pl.BlockSpec((1, S, 1), lambda b, t: (b, 0, 0)),         # ||xyz2||^2 (S,1)
        pl.BlockSpec((1, 1, tn), lambda b, t: (b, 0, t)),        # ||xyz1||^2 (1,TN)
        pl.BlockSpec((1, C1, tn), lambda b, t: (b, 0, t)),       # points1 (native [B,C,N])
        pl.BlockSpec((1, C2 + 1, S), lambda b, t: (b, 0, 0)),    # points2 + ones row
    ]
    for w in flat_w:                                             # weights: whole-array blocks
        nd = w.ndim
        in_specs.append(pl.BlockSpec(w.shape, lambda b, t, _nd=nd: (0,) * _nd))

    out_spec = pl.BlockSpec((1, out_ch, tn), lambda b, t: (b, 0, t))  # lane-dense output

    out = pl.pallas_call(
        _make_kernel(num_mlp, skip, C2),
        out_shape=jax.ShapeDtypeStruct((B, out_ch, n_pad), f32),
        grid=(B, n_tiles),
        in_specs=in_specs,
        out_specs=out_spec,
        compiler_params=pltpu.CompilerParams(
            dimension_semantics=("parallel", "parallel"),
            vmem_limit_bytes=_vmem_limit_bytes(),
        ),
    )(xyz2_f, xyz1_cf, sq2, sq1, p1_b, p2a, *flat_w)

    return out[:, :, :N] if n_pad != N else out


# ---------------------------------------------------------------------------
# Deterministic parameter construction (BN folded, inference mode)
# ---------------------------------------------------------------------------
def _fold_bn(w, b, gamma, beta, mean, var, eps=1e-5):
    scale = gamma / jnp.sqrt(var + eps)
    return w * scale[None, :], (b - mean) * scale + beta


def make_params(key, in_ch, mlp):
    ks = iter(jax.random.split(key, 64))

    def nrm(shape, scale=0.2):
        return scale * jax.random.normal(next(ks), shape, dtype=jnp.float32)

    def conv_bn(cin, cout):
        w, b = nrm((cin, cout)), nrm((cout,))
        gamma = 1.0 + nrm((cout,), 0.1)
        beta = nrm((cout,), 0.1)
        # BN folded in inference mode with running_mean=0, running_var=1.
        return _fold_bn(w, b, gamma, beta, jnp.zeros((cout,)), jnp.ones((cout,)))

    hid = in_ch // 4
    aW1, ab1 = conv_bn(in_ch, hid)
    aW2, ab2 = nrm((hid, in_ch)), nrm((in_ch,))
    bW1, bb1 = conv_bn(3, 16)
    bW2, bb2 = nrm((16, mlp[-1])), nrm((mlp[-1],))
    flat = [aW1, ab1, aW2, ab2, bW1, bb1, bW2, bb2]
    last = in_ch
    for oc in mlp:
        w, b = conv_bn(last, oc)
        flat += [w, b]
        last = oc
    return flat


# ---------------------------------------------------------------------------
# Pure-JAX f32 reference (mirrors the PyTorch forward with folded BN)
# ---------------------------------------------------------------------------
def reference(xyz1, xyz2, points1, points2, params, mlp):
    aW1, ab1, aW2, ab2, bW1, bb1, bW2, bb2 = params[:8]
    mlp_params = [(params[8 + 2 * i], params[9 + 2 * i]) for i in range(len(mlp))]
    B, N, _ = xyz1.shape
    d = (-2.0 * jnp.einsum('bnc,bmc->bnm', xyz1, xyz2)
         + jnp.sum(xyz1 ** 2, -1)[:, :, None]
         + jnp.sum(xyz2 ** 2, -1)[:, None, :])
    idx = jnp.argsort(d, axis=-1)[:, :, :4]
    dists = jnp.take_along_axis(d, idx, axis=-1)
    recip = 1.0 / (dists + 1e-8)
    weight = recip / jnp.sum(recip, axis=2, keepdims=True)
    p2t = jnp.transpose(points2, (0, 2, 1))
    gathered = p2t[jnp.arange(B)[:, None, None], idx]                # (B, N, 4, C2)
    interp = jnp.sum(gathered * weight[..., None], axis=2)
    new_pts = jnp.concatenate([jnp.transpose(points1, (0, 2, 1)), interp], axis=-1)
    h = jax.nn.relu(new_pts @ aW1 + ab1)
    att = jax.nn.sigmoid(h @ aW2 + ab2)
    x = new_pts * att
    identity = x
    hb = jax.nn.relu(xyz1 @ bW1 + bb1)
    edge = hb @ bW2 + bb2
    for w, b in mlp_params:
        x = jax.nn.relu(x @ w + b)
    if new_pts.shape[-1] == mlp[-1]:
        x = x + identity
    x = x + edge
    return jnp.transpose(x, (0, 2, 1))


if __name__ == "__main__":
    B, N, S = 2, 512, 64
    C1, C2 = 16, 16
    in_ch = C1 + C2          # concat(points1, interpolated) channels
    mlp = [32, 32]           # skip_connection = (in_ch == mlp[-1]) -> True

    key = jax.random.PRNGKey(0)
    k_xyz1, k_xyz2, k_p1, k_p2, k_par = jax.random.split(key, 5)
    xyz1 = jax.random.normal(k_xyz1, (B, N, 3), dtype=jnp.float32)
    xyz2 = jax.random.normal(k_xyz2, (B, S, 3), dtype=jnp.float32)
    points1 = jax.random.normal(k_p1, (B, C1, N), dtype=jnp.float32)   # [B, C, N]
    points2 = jax.random.normal(k_p2, (B, C2, S), dtype=jnp.float32)   # [B, C, S]
    params = make_params(k_par, in_ch, mlp)

    out = enhanced_feature_propagation(xyz1, xyz2, points1, points2, params, mlp)
    out = jax.block_until_ready(out)

    ref = reference(xyz1, xyz2, points1, points2, params, mlp)
    # bf16 MXU operands (per perf review) vs pure-f32 reference -> 3e-2 tolerance.
    np.testing.assert_allclose(np.asarray(out), np.asarray(ref), rtol=3e-2, atol=3e-2)
    assert out.shape == (B, mlp[-1], N)
    print("KERNEL_OK")
</pallas_src>

<mosaic_0001>
module attributes {stable_mosaic.version = 11 : i64} {
  func.func @kernel(%arg0: i32, %arg1: i32, %arg2: memref<1x64x3xf32, #tpu.memory_space<vmem>>, %arg3: memref<1x3x512xf32, #tpu.memory_space<vmem>>, %arg4: memref<1x64x1xf32, #tpu.memory_space<vmem>>, %arg5: memref<1x1x512xf32, #tpu.memory_space<vmem>>, %arg6: memref<1x16x512xbf16, #tpu.memory_space<vmem>>, %arg7: memref<1x17x64xbf16, #tpu.memory_space<vmem>>, %arg8: memref<8x32xbf16, #tpu.memory_space<vmem>>, %arg9: memref<8x1xf32, #tpu.memory_space<vmem>>, %arg10: memref<32x8xbf16, #tpu.memory_space<vmem>>, %arg11: memref<32x1xf32, #tpu.memory_space<vmem>>, %arg12: memref<16x3xbf16, #tpu.memory_space<vmem>>, %arg13: memref<16x1xf32, #tpu.memory_space<vmem>>, %arg14: memref<32x16xbf16, #tpu.memory_space<vmem>>, %arg15: memref<32x1xf32, #tpu.memory_space<vmem>>, %arg16: memref<32x32xbf16, #tpu.memory_space<vmem>>, %arg17: memref<32x1xf32, #tpu.memory_space<vmem>>, %arg18: memref<32x32xbf16, #tpu.memory_space<vmem>>, %arg19: memref<32x1xf32, #tpu.memory_space<vmem>>, %arg20: memref<1x32x512xf32, #tpu.memory_space<vmem>>) attributes {dimension_semantics = [#tpu.dimension_semantics<parallel>, #tpu.dimension_semantics<parallel>], iteration_bounds = array<i64: 2, 1>, scalar_prefetch = 0 : i64, scratch_operands = 0 : i64, tpu.core_type = #tpu.core_type<tc>, window_params = [{transform_indices = @transform_0, window_bounds = array<i64: 1, 64, 3>}, {transform_indices = @transform_1, window_bounds = array<i64: 1, 3, 512>}, {transform_indices = @transform_2, window_bounds = array<i64: 1, 64, 1>}, {transform_indices = @transform_3, window_bounds = array<i64: 1, 1, 512>}, {transform_indices = @transform_4, window_bounds = array<i64: 1, 16, 512>}, {transform_indices = @transform_5, window_bounds = array<i64: 1, 17, 64>}, {pipeline_mode = #tpu.pipeline_mode<synchronous>, transform_indices = @transform_6, window_bounds = array<i64: 8, 32>}, {pipeline_mode = #tpu.pipeline_mode<synchronous>, transform_indices = @transform_7, window_bounds = array<i64: 8, 1>}, {pipeline_mode = #tpu.pipeline_mode<synchronous>, transform_indices = @transform_8, window_bounds = array<i64: 32, 8>}, {pipeline_mode = #tpu.pipeline_mode<synchronous>, transform_indices = @transform_9, window_bounds = array<i64: 32, 1>}, {pipeline_mode = #tpu.pipeline_mode<synchronous>, transform_indices = @transform_10, window_bounds = array<i64: 16, 3>}, {pipeline_mode = #tpu.pipeline_mode<synchronous>, transform_indices = @transform_11, window_bounds = array<i64: 16, 1>}, {pipeline_mode = #tpu.pipeline_mode<synchronous>, transform_indices = @transform_12, window_bounds = array<i64: 32, 16>}, {pipeline_mode = #tpu.pipeline_mode<synchronous>, transform_indices = @transform_13, window_bounds = array<i64: 32, 1>}, {pipeline_mode = #tpu.pipeline_mode<synchronous>, transform_indices = @transform_14, window_bounds = array<i64: 32, 32>}, {pipeline_mode = #tpu.pipeline_mode<synchronous>, transform_indices = @transform_15, window_bounds = array<i64: 32, 1>}, {pipeline_mode = #tpu.pipeline_mode<synchronous>, transform_indices = @transform_16, window_bounds = array<i64: 32, 32>}, {pipeline_mode = #tpu.pipeline_mode<synchronous>, transform_indices = @transform_17, window_bounds = array<i64: 32, 1>}, {transform_indices = @transform_18, window_bounds = array<i64: 1, 32, 512>}]} {
    %c0 = arith.constant 0 : index
    %c0_0 = arith.constant 0 : index
    %c0_1 = arith.constant 0 : index
    %0 = vector.load %arg2[%c0, %c0_0, %c0_1] : memref<1x64x3xf32, #tpu.memory_space<vmem>>, vector<1x64x3xf32>
    %1 = vector.shape_cast %0 : vector<1x64x3xf32> to vector<64x3xf32>
    %c0_2 = arith.constant 0 : index
    %c0_3 = arith.constant 0 : index
    %c0_4 = arith.constant 0 : index
    %2 = vector.load %arg3[%c0_2, %c0_3, %c0_4] : memref<1x3x512xf32, #tpu.memory_space<vmem>>, vector<1x3x512xf32>
    %3 = vector.shape_cast %2 : vector<1x3x512xf32> to vector<3x512xf32>
    %c0_5 = arith.constant 0 : index
    %c0_6 = arith.constant 0 : index
    %c0_7 = arith.constant 0 : index
    %4 = vector.load %arg4[%c0_5, %c0_6, %c0_7] : memref<1x64x1xf32, #tpu.memory_space<vmem>>, vector<1x64x1xf32>
    %5 = vector.shape_cast %4 : vector<1x64x1xf32> to vector<64x1xf32>
    %c0_8 = arith.constant 0 : index
    %c0_9 = arith.constant 0 : index
    %c0_10 = arith.constant 0 : index
    %6 = vector.load %arg5[%c0_8, %c0_9, %c0_10] : memref<1x1x512xf32, #tpu.memory_space<vmem>>, vector<1x1x512xf32>
    %7 = vector.shape_cast %6 : vector<1x1x512xf32> to vector<1x512xf32>
    %c0_11 = arith.constant 0 : index
    %c0_12 = arith.constant 0 : index
    %c0_13 = arith.constant 0 : index
    %8 = vector.load %arg6[%c0_11, %c0_12, %c0_13] : memref<1x16x512xbf16, #tpu.memory_space<vmem>>, vector<1x16x512xbf16>
    %9 = vector.shape_cast %8 : vector<1x16x512xbf16> to vector<16x512xbf16>
    %c0_14 = arith.constant 0 : index
    %c0_15 = arith.constant 0 : index
    %c0_16 = arith.constant 0 : index
    %10 = vector.load %arg7[%c0_14, %c0_15, %c0_16] : memref<1x17x64xbf16, #tpu.memory_space<vmem>>, vector<1x17x64xbf16>
    %11 = vector.shape_cast %10 : vector<1x17x64xbf16> to vector<17x64xbf16>
    %cst = arith.constant dense<0.000000e+00> : vector<64x512xf32>
    %12 = tpu.matmul %1, %3, %cst {dimension_numbers = #tpu.dot_dimension_numbers<[1], [0], [0], [1], [0, 0, 1, 1], [], []>} : vector<64x3xf32>, vector<3x512xf32>, vector<64x512xf32> -> vector<64x512xf32>
    %cst_17 = arith.constant -2.000000e+00 : f32
    %13 = vector.broadcast %cst_17 : f32 to vector<64x512xf32>
    %14 = arith.mulf %13, %12 : vector<64x512xf32>
    %15 = vector.broadcast %5 : vector<64x1xf32> to vector<64x512xf32>
    %16 = arith.addf %14, %15 : vector<64x512xf32>
    %17 = vector.broadcast %7 : vector<1x512xf32> to vector<64x512xf32>
    %18 = arith.addf %16, %17 : vector<64x512xf32>
    %cst_18 = arith.constant 0.000000e+00 : f32
    %19 = vector.broadcast %cst_18 : f32 to vector<64x512xf32>
    %20 = arith.maximumf %18, %19 : vector<64x512xf32>
    %cst_19 = arith.constant 0.000000e+00 : f32
    %21 = vector.broadcast %cst_19 : f32 to vector<64x512xf32>
    %c0_i32 = arith.constant 0 : i32
    %cst_20 = arith.constant dense<0x7F800000> : vector<512xf32>
    %22 = vector.multi_reduction <minimumf>, %20, %cst_20 [0] : vector<64x512xf32> to vector<512xf32>
    %23 = vector.shape_cast %22 : vector<512xf32> to vector<1x512xf32>
    %cst_21 = arith.constant 9.99999993E-9 : f32
    %24 = vector.broadcast %cst_21 : f32 to vector<1x512xf32>
    %25 = arith.addf %23, %24 : vector<1x512xf32>
    %26 = tpu.reciprocal %25 {approx = true} : vector<1x512xf32> -> vector<1x512xf32>
    %27 = vector.broadcast %23 : vector<1x512xf32> to vector<64x512xf32>
    %28 = arith.cmpf oeq, %20, %27 : vector<64x512xf32>
    %cst_22 = arith.constant 0.000000e+00 : f32
    %29 = vector.shape_cast %26 : vector<1x512xf32> to vector<1x512xf32>
    %30 = vector.broadcast %29 : vector<1x512xf32> to vector<64x512xf32>
    %31 = vector.broadcast %cst_22 : f32 to vector<64x512xf32>
    %32 = arith.select %28, %30, %31 : vector<64x512xi1>, vector<64x512xf32>
    %33 = arith.addf %21, %32 : vector<64x512xf32>
    %cst_23 = arith.constant 0x7F800000 : f32
    %34 = vector.broadcast %cst_23 : f32 to vector<64x512xf32>
    %35 = arith.select %28, %34, %20 : vector<64x512xi1>, vector<64x512xf32>
    %c1_i32 = arith.constant 1 : i32
    %cst_24 = arith.constant dense<0x7F800000> : vector<512xf32>
    %36 = vector.multi_reduction <minimumf>, %35, %cst_24 [0] : vector<64x512xf32> to vector<512xf32>
    %37 = vector.shape_cast %36 : vector<512xf32> to vector<1x512xf32>
    %cst_25 = arith.constant 9.99999993E-9 : f32
    %38 = vector.broadcast %cst_25 : f32 to vector<1x512xf32>
    %39 = arith.addf %37, %38 : vector<1x512xf32>
    %40 = tpu.reciprocal %39 {approx = true} : vector<1x512xf32> -> vector<1x512xf32>
    %41 = vector.broadcast %37 : vector<1x512xf32> to vector<64x512xf32>
    %42 = arith.cmpf oeq, %35, %41 : vector<64x512xf32>
    %cst_26 = arith.constant 0.000000e+00 : f32
    %43 = vector.shape_cast %40 : vector<1x512xf32> to vector<1x512xf32>
    %44 = vector.broadcast %43 : vector<1x512xf32> to vector<64x512xf32>
    %45 = vector.broadcast %cst_26 : f32 to vector<64x512xf32>
    %46 = arith.select %42, %44, %45 : vector<64x512xi1>, vector<64x512xf32>
    %47 = arith.addf %33, %46 : vector<64x512xf32>
    %cst_27 = arith.constant 0x7F800000 : f32
    %48 = vector.broadcast %cst_27 : f32 to vector<64x512xf32>
    %49 = arith.select %42, %48, %35 : vector<64x512xi1>, vector<64x512xf32>
    %c2_i32 = arith.constant 2 : i32
    %cst_28 = arith.constant dense<0x7F800000> : vector<512xf32>
    %50 = vector.multi_reduction <minimumf>, %49, %cst_28 [0] : vector<64x512xf32> to vector<512xf32>
    %51 = vector.shape_cast %50 : vector<512xf32> to vector<1x512xf32>
    %cst_29 = arith.constant 9.99999993E-9 : f32
    %52 = vector.broadcast %cst_29 : f32 to vector<1x512xf32>
    %53 = arith.addf %51, %52 : vector<1x512xf32>
    %54 = tpu.reciprocal %53 {approx = true} : vector<1x512xf32> -> vector<1x512xf32>
    %55 = vector.broadcast %51 : vector<1x512xf32> to vector<64x512xf32>
    %56 = arith.cmpf oeq, %49, %55 : vector<64x512xf32>
    %cst_30 = arith.constant 0.000000e+00 : f32
    %57 = vector.shape_cast %54 : vector<1x512xf32> to vector<1x512xf32>
    %58 = vector.broadcast %57 : vector<1x512xf32> to vector<64x512xf32>
    %59 = vector.broadcast %cst_30 : f32 to vector<64x512xf32>
    %60 = arith.select %56, %58, %59 : vector<64x512xi1>, vector<64x512xf32>
    %61 = arith.addf %47, %60 : vector<64x512xf32>
    %cst_31 = arith.constant 0x7F800000 : f32
    %62 = vector.broadcast %cst_31 : f32 to vector<64x512xf32>
    %63 = arith.select %56, %62, %49 : vector<64x512xi1>, vector<64x512xf32>
    %c3_i32 = arith.constant 3 : i32
    %cst_32 = arith.constant dense<0x7F800000> : vector<512xf32>
    %64 = vector.multi_reduction <minimumf>, %63, %cst_32 [0] : vector<64x512xf32> to vector<512xf32>
    %65 = vector.shape_cast %64 : vector<512xf32> to vector<1x512xf32>
    %cst_33 = arith.constant 9.99999993E-9 : f32
    %66 = vector.broadcast %cst_33 : f32 to vector<1x512xf32>
    %67 = arith.addf %65, %66 : vector<1x512xf32>
    %68 = tpu.reciprocal %67 {approx = true} : vector<1x512xf32> -> vector<1x512xf32>
    %69 = vector.broadcast %65 : vector<1x512xf32> to vector<64x512xf32>
    %70 = arith.cmpf oeq, %63, %69 : vector<64x512xf32>
    %cst_34 = arith.constant 0.000000e+00 : f32
    %71 = vector.shape_cast %68 : vector<1x512xf32> to vector<1x512xf32>
    %72 = vector.broadcast %71 : vector<1x512xf32> to vector<64x512xf32>
    %73 = vector.broadcast %cst_34 : f32 to vector<64x512xf32>
    %74 = arith.select %70, %72, %73 : vector<64x512xi1>, vector<64x512xf32>
    %75 = arith.addf %61, %74 : vector<64x512xf32>
    %cst_35 = arith.constant 0x7F800000 : f32
    %76 = vector.broadcast %cst_35 : f32 to vector<64x512xf32>
    %77 = arith.select %70, %76, %63 : vector<64x512xi1>, vector<64x512xf32>
    %78 = arith.truncf %75 : vector<64x512xf32> to vector<64x512xbf16>
    %cst_36 = arith.constant dense<0.000000e+00> : vector<17x512xf32>
    %79 = tpu.matmul %11, %78, %cst_36 {dimension_numbers = #tpu.dot_dimension_numbers<[1], [0], [0], [1], [0, 0, 1, 1], [], []>} : vector<17x64xbf16>, vector<64x512xbf16>, vector<17x512xf32> -> vector<17x512xf32>
    %80 = vector.extract_strided_slice %79 {offsets = [16, 0], sizes = [1, 512], strides = [1, 1]} : vector<17x512xf32> to vector<1x512xf32>
    %81 = tpu.reciprocal %80 {approx = true} : vector<1x512xf32> -> vector<1x512xf32>
    %82 = vector.extract_strided_slice %79 {offsets = [0, 0], sizes = [16, 512], strides = [1, 1]} : vector<17x512xf32> to vector<16x512xf32>
    %83 = vector.broadcast %81 : vector<1x512xf32> to vector<16x512xf32>
    %84 = arith.mulf %82, %83 : vector<16x512xf32>
    %85 = arith.extf %9 : vector<16x512xbf16> to vector<16x512xf32>
    %86 = tpu.concatenate %85, %84 in 0 : vector<16x512xf32>, vector<16x512xf32> -> vector<32x512xf32>
    %87 = arith.truncf %86 : vector<32x512xf32> to vector<32x512xbf16>
    %c0_37 = arith.constant 0 : index
    %c0_38 = arith.constant 0 : index
    %88 = vector.load %arg8[%c0_37, %c0_38] : memref<8x32xbf16, #tpu.memory_space<vmem>>, vector<8x32xbf16>
    %cst_39 = arith.constant dense<0.000000e+00> : vector<8x512xf32>
    %89 = tpu.matmul %88, %87, %cst_39 {dimension_numbers = #tpu.dot_dimension_numbers<[1], [0], [0], [1], [0, 0, 1, 1], [], []>} : vector<8x32xbf16>, vector<32x512xbf16>, vector<8x512xf32> -> vector<8x512xf32>
    %c0_40 = arith.constant 0 : index
    %c0_41 = arith.constant 0 : index
    %90 = vector.load %arg9[%c0_40, %c0_41] : memref<8x1xf32, #tpu.memory_space<vmem>>, vector<8x1xf32>
    %91 = vector.broadcast %90 : vector<8x1xf32> to vector<8x512xf32>
    %92 = arith.addf %89, %91 : vector<8x512xf32>
    %cst_42 = arith.constant 0.000000e+00 : f32
    %93 = vector.broadcast %cst_42 : f32 to vector<8x512xf32>
    %94 = arith.maximumf %92, %93 : vector<8x512xf32>
    %c0_43 = arith.constant 0 : index
    %c0_44 = arith.constant 0 : index
    %95 = vector.load %arg10[%c0_43, %c0_44] : memref<32x8xbf16, #tpu.memory_space<vmem>>, vector<32x8xbf16>
    %96 = arith.truncf %94 : vector<8x512xf32> to vector<8x512xbf16>
    %cst_45 = arith.constant dense<0.000000e+00> : vector<32x512xf32>
    %97 = tpu.matmul %95, %96, %cst_45 {dimension_numbers = #tpu.dot_dimension_numbers<[1], [0], [0], [1], [0, 0, 1, 1], [], []>} : vector<32x8xbf16>, vector<8x512xbf16>, vector<32x512xf32> -> vector<32x512xf32>
    %c0_46 = arith.constant 0 : index
    %c0_47 = arith.constant 0 : index
    %98 = vector.load %arg11[%c0_46, %c0_47] : memref<32x1xf32, #tpu.memory_space<vmem>>, vector<32x1xf32>
    %99 = vector.broadcast %98 : vector<32x1xf32> to vector<32x512xf32>
    %100 = arith.addf %97, %99 : vector<32x512xf32>
    %101 = arith.negf %100 : vector<32x512xf32>
    %102 = math.exp %101 : vector<32x512xf32>
    %cst_48 = arith.constant 1.000000e+00 : f32
    %103 = vector.broadcast %cst_48 : f32 to vector<32x512xf32>
    %104 = arith.addf %103, %102 : vector<32x512xf32>
    %105 = arith.divf %103, %104 : vector<32x512xf32>
    %106 = arith.mulf %86, %105 : vector<32x512xf32>
    %c0_49 = arith.constant 0 : index
    %c0_50 = arith.constant 0 : index
    %107 = vector.load %arg12[%c0_49, %c0_50] : memref<16x3xbf16, #tpu.memory_space<vmem>>, vector<16x3xbf16>
    %108 = arith.truncf %3 : vector<3x512xf32> to vector<3x512xbf16>
    %cst_51 = arith.constant dense<0.000000e+00> : vector<16x512xf32>
    %109 = tpu.matmul %107, %108, %cst_51 {dimension_numbers = #tpu.dot_dimension_numbers<[1], [0], [0], [1], [0, 0, 1, 1], [], []>} : vector<16x3xbf16>, vector<3x512xbf16>, vector<16x512xf32> -> vector<16x512xf32>
    %c0_52 = arith.constant 0 : index
    %c0_53 = arith.constant 0 : index
    %110 = vector.load %arg13[%c0_52, %c0_53] : memref<16x1xf32, #tpu.memory_space<vmem>>, vector<16x1xf32>
    %111 = vector.broadcast %110 : vector<16x1xf32> to vector<16x512xf32>
    %112 = arith.addf %109, %111 : vector<16x512xf32>
    %cst_54 = arith.constant 0.000000e+00 : f32
    %113 = vector.broadcast %cst_54 : f32 to vector<16x512xf32>
    %114 = arith.maximumf %112, %113 : vector<16x512xf32>
    %c0_55 = arith.constant 0 : index
    %c0_56 = arith.constant 0 : index
    %115 = vector.load %arg14[%c0_55, %c0_56] : memref<32x16xbf16, #tpu.memory_space<vmem>>, vector<32x16xbf16>
    %116 = arith.truncf %114 : vector<16x512xf32> to vector<16x512xbf16>
    %cst_57 = arith.constant dense<0.000000e+00> : vector<32x512xf32>
    %117 = tpu.matmul %115, %116, %cst_57 {dimension_numbers = #tpu.dot_dimension_numbers<[1], [0], [0], [1], [0, 0, 1, 1], [], []>} : vector<32x16xbf16>, vector<16x512xbf16>, vector<32x512xf32> -> vector<32x512xf32>
    %c0_58 = arith.constant 0 : index
    %c0_59 = arith.constant 0 : index
    %118 = vector.load %arg15[%c0_58, %c0_59] : memref<32x1xf32, #tpu.memory_space<vmem>>, vector<32x1xf32>
    %119 = vector.broadcast %118 : vector<32x1xf32> to vector<32x512xf32>
    %120 = arith.addf %117, %119 : vector<32x512xf32>
    %c0_60 = arith.constant 0 : index
    %c0_61 = arith.constant 0 : index
    %121 = vector.load %arg16[%c0_60, %c0_61] : memref<32x32xbf16, #tpu.memory_space<vmem>>, vector<32x32xbf16>
    %c0_62 = arith.constant 0 : index
    %c0_63 = arith.constant 0 : index
    %122 = vector.load %arg17[%c0_62, %c0_63] : memref<32x1xf32, #tpu.memory_space<vmem>>, vector<32x1xf32>
    %123 = arith.truncf %106 : vector<32x512xf32> to vector<32x512xbf16>
    %cst_64 = arith.constant dense<0.000000e+00> : vector<32x512xf32>
    %124 = tpu.matmul %121, %123, %cst_64 {dimension_numbers = #tpu.dot_dimension_numbers<[1], [0], [0], [1], [0, 0, 1, 1], [], []>} : vector<32x32xbf16>, vector<32x512xbf16>, vector<32x512xf32> -> vector<32x512xf32>
    %125 = vector.broadcast %122 : vector<32x1xf32> to vector<32x512xf32>
    %126 = arith.addf %124, %125 : vector<32x512xf32>
    %cst_65 = arith.constant 0.000000e+00 : f32
    %127 = vector.broadcast %cst_65 : f32 to vector<32x512xf32>
    %128 = arith.maximumf %126, %127 : vector<32x512xf32>
    %c0_66 = arith.constant 0 : index
    %c0_67 = arith.constant 0 : index
    %129 = vector.load %arg18[%c0_66, %c0_67] : memref<32x32xbf16, #tpu.memory_space<vmem>>, vector<32x32xbf16>
    %c0_68 = arith.constant 0 : index
    %c0_69 = arith.constant 0 : index
    %130 = vector.load %arg19[%c0_68, %c0_69] : memref<32x1xf32, #tpu.memory_space<vmem>>, vector<32x1xf32>
    %131 = arith.truncf %128 : vector<32x512xf32> to vector<32x512xbf16>
    %cst_70 = arith.constant dense<0.000000e+00> : vector<32x512xf32>
    %132 = tpu.matmul %129, %131, %cst_70 {dimension_numbers = #tpu.dot_dimension_numbers<[1], [0], [0], [1], [0, 0, 1, 1], [], []>} : vector<32x32xbf16>, vector<32x512xbf16>, vector<32x512xf32> -> vector<32x512xf32>
    %133 = vector.broadcast %130 : vector<32x1xf32> to vector<32x512xf32>
    %134 = arith.addf %132, %133 : vector<32x512xf32>
    %cst_71 = arith.constant 0.000000e+00 : f32
    %135 = vector.broadcast %cst_71 : f32 to vector<32x512xf32>
    %136 = arith.maximumf %134, %135 : vector<32x512xf32>
    %137 = arith.addf %136, %106 : vector<32x512xf32>
    %138 = arith.addf %137, %120 : vector<32x512xf32>
    %c0_72 = arith.constant 0 : index
    %c0_73 = arith.constant 0 : index
    %c0_74 = arith.constant 0 : index
    %139 = vector.load %arg20[%c0_72, %c0_73, %c0_74] : memref<1x32x512xf32, #tpu.memory_space<vmem>>, vector<1x32x512xf32>
    %140 = vector.shape_cast %139 : vector<1x32x512xf32> to vector<32x512xf32>
    %141 = vector.shape_cast %138 : vector<32x512xf32> to vector<1x32x512xf32>
    tpu.vector_store %arg20[%c0_72, %c0_73, %c0_74], %141 {strides = array<i32>} : memref<1x32x512xf32, #tpu.memory_space<vmem>>, vector<1x32x512xf32>,
    return
  }
  func.func @transform_0(%arg0: i32, %arg1: i32) -> (i32, i32, i32) {
    %c0_i32 = arith.constant 0 : i32
    %c0_i32_0 = arith.constant 0 : i32
    %c0_i32_1 = arith.constant 0 : i32
    return %arg0, %c0_i32, %c0_i32_0 : i32, i32, i32
  }
  func.func @transform_1(%arg0: i32, %arg1: i32) -> (i32, i32, i32) {
    %c0_i32 = arith.constant 0 : i32
    %c0_i32_0 = arith.constant 0 : i32
    return %arg0, %c0_i32, %arg1 : i32, i32, i32
  }
  func.func @transform_2(%arg0: i32, %arg1: i32) -> (i32, i32, i32) {
    %c0_i32 = arith.constant 0 : i32
    %c0_i32_0 = arith.constant 0 : i32
    %c0_i32_1 = arith.constant 0 : i32
    return %arg0, %c0_i32, %c0_i32_0 : i32, i32, i32
  }
  func.func @transform_3(%arg0: i32, %arg1: i32) -> (i32, i32, i32) {
    %c0_i32 = arith.constant 0 : i32
    %c0_i32_0 = arith.constant 0 : i32
    return %arg0, %c0_i32, %arg1 : i32, i32, i32
  }
  func.func @transform_4(%arg0: i32, %arg1: i32) -> (i32, i32, i32) {
    %c0_i32 = arith.constant 0 : i32
    %c0_i32_0 = arith.constant 0 : i32
    return %arg0, %c0_i32, %arg1 : i32, i32, i32
  }
  func.func @transform_5(%arg0: i32, %arg1: i32) -> (i32, i32, i32) {
    %c0_i32 = arith.constant 0 : i32
    %c0_i32_0 = arith.constant 0 : i32
    %c0_i32_1 = arith.constant 0 : i32
    return %arg0, %c0_i32, %c0_i32_0 : i32, i32, i32
  }
  func.func @transform_6(%arg0: i32, %arg1: i32) -> (i32, i32) {
    %c0_i32 = arith.constant 0 : i32
    %c0_i32_0 = arith.constant 0 : i32
    %c0_i32_1 = arith.constant 0 : i32
    return %c0_i32, %c0_i32_0 : i32, i32
  }
  func.func @transform_7(%arg0: i32, %arg1: i32) -> (i32, i32) {
    %c0_i32 = arith.constant 0 : i32
    %c0_i32_0 = arith.constant 0 : i32
    %c0_i32_1 = arith.constant 0 : i32
    return %c0_i32, %c0_i32_0 : i32, i32
  }
  func.func @transform_8(%arg0: i32, %arg1: i32) -> (i32, i32) {
    %c0_i32 = arith.constant 0 : i32
    %c0_i32_0 = arith.constant 0 : i32
    %c0_i32_1 = arith.constant 0 : i32
    return %c0_i32, %c0_i32_0 : i32, i32
  }
  func.func @transform_9(%arg0: i32, %arg1: i32) -> (i32, i32) {
    %c0_i32 = arith.constant 0 : i32
    %c0_i32_0 = arith.constant 0 : i32
    %c0_i32_1 = arith.constant 0 : i32
    return %c0_i32, %c0_i32_0 : i32, i32
  }
  func.func @transform_10(%arg0: i32, %arg1: i32) -> (i32, i32) {
    %c0_i32 = arith.constant 0 : i32
    %c0_i32_0 = arith.constant 0 : i32
    %c0_i32_1 = arith.constant 0 : i32
    return %c0_i32, %c0_i32_0 : i32, i32
  }
  func.func @transform_11(%arg0: i32, %arg1: i32) -> (i32, i32) {
    %c0_i32 = arith.constant 0 : i32
    %c0_i32_0 = arith.constant 0 : i32
    %c0_i32_1 = arith.constant 0 : i32
    return %c0_i32, %c0_i32_0 : i32, i32
  }
  func.func @transform_12(%arg0: i32, %arg1: i32) -> (i32, i32) {
    %c0_i32 = arith.constant 0 : i32
    %c0_i32_0 = arith.constant 0 : i32
    %c0_i32_1 = arith.constant 0 : i32
    return %c0_i32, %c0_i32_0 : i32, i32
  }
  func.func @transform_13(%arg0: i32, %arg1: i32) -> (i32, i32) {
    %c0_i32 = arith.constant 0 : i32
    %c0_i32_0 = arith.constant 0 : i32
    %c0_i32_1 = arith.constant 0 : i32
    return %c0_i32, %c0_i32_0 : i32, i32
  }
  func.func @transform_14(%arg0: i32, %arg1: i32) -> (i32, i32) {
    %c0_i32 = arith.constant 0 : i32
    %c0_i32_0 = arith.constant 0 : i32
    %c0_i32_1 = arith.constant 0 : i32
    return %c0_i32, %c0_i32_0 : i32, i32
  }
  func.func @transform_15(%arg0: i32, %arg1: i32) -> (i32, i32) {
    %c0_i32 = arith.constant 0 : i32
    %c0_i32_0 = arith.constant 0 : i32
    %c0_i32_1 = arith.constant 0 : i32
    return %c0_i32, %c0_i32_0 : i32, i32
  }
  func.func @transform_16(%arg0: i32, %arg1: i32) -> (i32, i32) {
    %c0_i32 = arith.constant 0 : i32
    %c0_i32_0 = arith.constant 0 : i32
    %c0_i32_1 = arith.constant 0 : i32
    return %c0_i32, %c0_i32_0 : i32, i32
  }
  func.func @transform_17(%arg0: i32, %arg1: i32) -> (i32, i32) {
    %c0_i32 = arith.constant 0 : i32
    %c0_i32_0 = arith.constant 0 : i32
    %c0_i32_1 = arith.constant 0 : i32
    return %c0_i32, %c0_i32_0 : i32, i32
  }
  func.func @transform_18(%arg0: i32, %arg1: i32) -> (i32, i32, i32) {
    %c0_i32 = arith.constant 0 : i32
    %c0_i32_0 = arith.constant 0 : i32
    return %arg0, %c0_i32, %arg1 : i32, i32, i32
  }
}

</mosaic_0001>

<llo_original>
// kernel: tpu_custom_call.1
$region0: #{tpu_custom_call.1}
  #allocation0 [shape = 'u32[]', space=smem, size = 0x4, offset = 0x4, fixed_abs, tag = 'smem constant byte address 0x4 - core index']
  #allocation1 [shape = 'u32[144,128]{1,0:T(1,128)}', space=vmem, size = 0x12000, scoped, tag = 'internal scratch']
  %s0 = inlined_call_operand.vmem [shape: f32[2,64,3], index: 0, kind: input, shape index: {}]
  %s1 = inlined_call_operand.vmem [shape: f32[2,3,512], index: 1, kind: input, shape index: {}]
  %s2 = inlined_call_operand.vmem [shape: f32[2,64,1], index: 2, kind: input, shape index: {}]
  %s3 = inlined_call_operand.vmem [shape: f32[2,1,512], index: 3, kind: input, shape index: {}]
  %s4 = inlined_call_operand.vmem [shape: bf16[2,16,512], index: 4, kind: input, shape index: {}]
  %s5 = inlined_call_operand.vmem [shape: bf16[2,17,64], index: 5, kind: input, shape index: {}]
  %s6 = inlined_call_operand.vmem [shape: bf16[8,32], index: 6, kind: input, shape index: {}]
  %s7 = inlined_call_operand.vmem [shape: f32[8,1], index: 7, kind: input, shape index: {}]
  %s8 = inlined_call_operand.vmem [shape: bf16[32,8], index: 8, kind: input, shape index: {}]
  %s9 = inlined_call_operand.vmem [shape: f32[32,1], index: 9, kind: input, shape index: {}]
  %s10 = inlined_call_operand.vmem [shape: bf16[16,3], index: 10, kind: input, shape index: {}]
  %s11 = inlined_call_operand.vmem [shape: f32[16,1], index: 11, kind: input, shape index: {}]
  %s12 = inlined_call_operand.vmem [shape: bf16[32,16], index: 12, kind: input, shape index: {}]
  %s13 = inlined_call_operand.vmem [shape: f32[32,1], index: 13, kind: input, shape index: {}]
  %s14 = inlined_call_operand.vmem [shape: bf16[32,32], index: 14, kind: input, shape index: {}]
  %s15 = inlined_call_operand.vmem [shape: f32[32,1], index: 15, kind: input, shape index: {}]
  %s16 = inlined_call_operand.vmem [shape: bf16[32,32], index: 16, kind: input, shape index: {}]
  %s17 = inlined_call_operand.vmem [shape: f32[32,1], index: 17, kind: input, shape index: {}]
  %s18 = inlined_call_operand.hbm [shape: f32[2,32,512], index: 18, kind: output, shape index: {}]
  %s19 = sld [smem:[#allocation0]]
  $region105: #{tpu_custom_call.1} parent=0
    _
  %s21 = ssub.s32 1, %s19
  %s22 = scalar_select 0, %s21, %s19
  $region1: #{tpu_custom_call.1} parent=0
    #allocation2 [shape = 'u8[131072]{0}', space=vmem, size = 0x20000, scoped, tag = 'output window, operand 0']
    #allocation3 [shape = 's32[2]{0}', space=sflag, size = 0x8, scoped, tag = 'scoped memory for tpu_custom_call.1']
    %23 = vsyncpa [#allocation3], 0
    %s24 = scalar_lea.sflag [#allocation3], 1
    %25 = vsyncpa %s24, 0
    loop: start=0, step=1, limit=4
    $region2: #{tpu_custom_call.1} parent=1 // loop_pre_header
      _
    $region3: #{tpu_custom_call.1} parent=1 // loop_header
      %s27 = sphi 0, %s31
      %p28 = scmp.ge.s32.totalorder %s27, 4
      %s34 = sphi 0, %s46
      %s35 = sphi 0, %s42
      %s36 = sphi 0, %s34
      %s37 = sphi 0, %s35
      %s38 = sphi 0, %s36
      %s39 = sphi 0, %s37
      %s49 = sphi 0, %s51
      %s52 = sphi 0, %s49
      %s53 = sphi 0, %s52
      %s69 = sphi 0, %s53
      %s77 = sphi 0, %s79
      %s80 = sphi 0, %s77
      %s81 = sphi 0, %s80
      %s97 = sphi 0, %s81
      %s103 = sphi 0, %s105
      %s106 = sphi 0, %s103
      %s107 = sphi 0, %s106
      %s123 = sphi 0, %s107
      %s131 = sphi 0, %s133
      %s134 = sphi 0, %s131
      %s135 = sphi 0, %s134
      %s151 = sphi 0, %s135
      %s159 = sphi 0, %s161
      %s162 = sphi 0, %s159
      %s163 = sphi 0, %s162
      %s179 = sphi 0, %s163
      %s185 = sphi 0, %s187
      %s188 = sphi 0, %s185
      %s189 = sphi 0, %s188
      %s205 = sphi 0, %s189
      %s209 = sphi 0, %s209
      %s211 = sphi 0, %s209
      %s212 = sphi 0, %s211
      %s226 = sphi 0, %s212
      %s230 = sphi 0, %s230
      %s232 = sphi 0, %s230
      %s233 = sphi 0, %s232
      %s247 = sphi 0, %s233
      %s251 = sphi 0, %s251
      %s253 = sphi 0, %s251
      %s254 = sphi 0, %s253
      %s268 = sphi 0, %s254
      %s272 = sphi 0, %s272
      %s274 = sphi 0, %s272
      %s275 = sphi 0, %s274
      %s289 = sphi 0, %s275
      %s293 = sphi 0, %s293
      %s295 = sphi 0, %s293
      %s296 = sphi 0, %s295
      %s310 = sphi 0, %s296
      %s314 = sphi 0, %s314
      %s316 = sphi 0, %s314
      %s317 = sphi 0, %s316
      %s331 = sphi 0, %s317
      %s335 = sphi 0, %s335
      %s337 = sphi 0, %s335
      %s338 = sphi 0, %s337
      %s352 = sphi 0, %s338
      %s356 = sphi 0, %s356
      %s358 = sphi 0, %s356
      %s359 = sphi 0, %s358
      %s373 = sphi 0, %s359
      %s377 = sphi 0, %s377
      %s379 = sphi 0, %s377
      %s380 = sphi 0, %s379
      %s394 = sphi 0, %s380
      %s398 = sphi 0, %s398
      %s400 = sphi 0, %s398
      %s401 = sphi 0, %s400
      %s415 = sphi 0, %s401
      %s419 = sphi 0, %s419
      %s421 = sphi 0, %s419
      %s422 = sphi 0, %s421
      %s436 = sphi 0, %s422
      %s440 = sphi 0, %s440
      %s442 = sphi 0, %s440
      %s443 = sphi 0, %s442
      %s457 = sphi 0, %s443
      %s465 = sphi 0, %s467
      %s468 = sphi 0, %s465
      %s469 = sphi 0, %s468
      %s485 = sphi 0, %s469
    $region4: #{tpu_custom_call.1} parent=1 // loop_header_branch
      %30 = sbr.rel (%p28) target = $region8
    $region5: #{tpu_custom_call.1} parent=1 // loop_body
      %s32 = ssub.s32 %s27, 1
      %s33 = ssub.s32 %s27, 2
      %s40 = sadd.s32 1, %s35
      %p41 = scmp.ge.s32.totalorder %s40, 1
      %s42 = scalar_select %p41, 0, %s40
      %s43 = sadd.s32 1, %s34
      %s44 = scalar_select %p41, %s43, %s34
      %p45 = scmp.ge.s32.totalorder %s44, 2
      %s46 = scalar_select %p45, 0, %s44
      %s47 = ssub.s32 %s34, %s46
      %p48 = scmp.eq.s32.totalorder %s47, 0
      %s50 = sadd.s32 %s49, 1
      %s51 = scalar_select %p48, %s49, %s50
      %p54 = pneg %p48
      %p55 = scmp.eq.s32.totalorder %s27, 1
      %p56 = por %p54, %p55
      %p57 = scmp.ne.s32.totalorder %s49, %s52
      %p58 = scmp.eq.s32.totalorder %s27, 0
      %p59 = por %p57, %p58
      %p60 = scmp.ne.s32.totalorder %s49, %s52
      %p61 = scmp.eq.s32.totalorder %s32, 1
      %p62 = por %p60, %p61
      %p63 = scmp.ne.s32.totalorder %s52, %s53
      %p64 = scmp.eq.s32.totalorder %s32, 0
      %p65 = por %p63, %p64
      %p66 = scmp.ne.s32.totalorder %s52, %s53
      %p67 = scmp.eq.s32.totalorder %s33, 1
      %p68 = por %p66, %p67
      %p70 = scmp.ne.s32.totalorder %s53, %s69
      %p71 = scmp.eq.s32.totalorder %s33, 0
      %p72 = por %p70, %p71
      %s73 = ssub.s32 %s34, %s46
      %s74 = ssub.s32 %s35, %s42
      %s75 = sor.u32 %s73, %s74
      %p76 = scmp.eq.s32.totalorder %s75, 0
      %s78 = sadd.s32 %s77, 1
      %s79 = scalar_select %p76, %s77, %s78
      %p82 = pneg %p76
      %p83 = scmp.eq.s32.totalorder %s27, 1
      %p84 = por %p82, %p83
      %p85 = scmp.ne.s32.totalorder %s77, %s80
      %p86 = scmp.eq.s32.totalorder %s27, 0
      %p87 = por %p85, %p86
      %p88 = scmp.ne.s32.totalorder %s77, %s80
      %p89 = scmp.eq.s32.totalorder %s32, 1
      %p90 = por %p88, %p89
      %p91 = scmp.ne.s32.totalorder %s80, %s81
      %p92 = scmp.eq.s32.totalorder %s32, 0
      %p93 = por %p91, %p92
      %p94 = scmp.ne.s32.totalorder %s80, %s81
      %p95 = scmp.eq.s32.totalorder %s33, 1
      %p96 = por %p94, %p95
      %p98 = scmp.ne.s32.totalorder %s81, %s97
      %p99 = scmp.eq.s32.totalorder %s33, 0
      %p100 = por %p98, %p99
      %s101 = ssub.s32 %s34, %s46
      %p102 = scmp.eq.s32.totalorder %s101, 0
      %s104 = sadd.s32 %s103, 1
      %s105 = scalar_select %p102, %s103, %s104
      %p108 = pneg %p102
      %p109 = scmp.eq.s32.totalorder %s27, 1
      %p110 = por %p108, %p109
      %p111 = scmp.ne.s32.totalorder %s103, %s106
      %p112 = scmp.eq.s32.totalorder %s27, 0
      %p113 = por %p111, %p112
      %p114 = scmp.ne.s32.totalorder %s103, %s106
      %p115 = scmp.eq.s32.totalorder %s32, 1
      %p116 = por %p114, %p115
      %p117 = scmp.ne.s32.totalorder %s106, %s107
      %p118 = scmp.eq.s32.totalorder %s32, 0
      %p119 = por %p117, %p118
      %p120 = scmp.ne.s32.totalorder %s106, %s107
      %p121 = scmp.eq.s32.totalorder %s33, 1
      %p122 = por %p120, %p121
      %p124 = scmp.ne.s32.totalorder %s107, %s123
      %p125 = scmp.eq.s32.totalorder %s33, 0
      %p126 = por %p124, %p125
      %s127 = ssub.s32 %s34, %s46
      %s128 = ssub.s32 %s35, %s42
      %s129 = sor.u32 %s127, %s128
      %p130 = scmp.eq.s32.totalorder %s129, 0
      %s132 = sadd.s32 %s131, 1
      %s133 = scalar_select %p130, %s131, %s132
      %p136 = pneg %p130
      %p137 = scmp.eq.s32.totalorder %s27, 1
      %p138 = por %p136, %p137
      %p139 = scmp.ne.s32.totalorder %s131, %s134
      %p140 = scmp.eq.s32.totalorder %s27, 0
      %p141 = por %p139, %p140
      %p142 = scmp.ne.s32.totalorder %s131, %s134
      %p143 = scmp.eq.s32.totalorder %s32, 1
      %p144 = por %p142, %p143
      %p145 = scmp.ne.s32.totalorder %s134, %s135
      %p146 = scmp.eq.s32.totalorder %s32, 0
      %p147 = por %p145, %p146
      %p148 = scmp.ne.s32.totalorder %s134, %s135
      %p149 = scmp.eq.s32.totalorder %s33, 1
      %p150 = por %p148, %p149
      %p152 = scmp.ne.s32.totalorder %s135, %s151
      %p153 = scmp.eq.s32.totalorder %s33, 0
      %p154 = por %p152, %p153
      %s155 = ssub.s32 %s34, %s46
      %s156 = ssub.s32 %s35, %s42
      %s157 = sor.u32 %s155, %s156
      %p158 = scmp.eq.s32.totalorder %s157, 0
      %s160 = sadd.s32 %s159, 1
      %s161 = scalar_select %p158, %s159, %s160
      %p164 = pneg %p158
      %p165 = scmp.eq.s32.totalorder %s27, 1
      %p166 = por %p164, %p165
      %p167 = scmp.ne.s32.totalorder %s159, %s162
      %p168 = scmp.eq.s32.totalorder %s27, 0
      %p169 = por %p167, %p168
      %p170 = scmp.ne.s32.totalorder %s159, %s162
      %p171 = scmp.eq.s32.totalorder %s32, 1
      %p172 = por %p170, %p171
      %p173 = scmp.ne.s32.totalorder %s162, %s163
      %p174 = scmp.eq.s32.totalorder %s32, 0
      %p175 = por %p173, %p174
      %p176 = scmp.ne.s32.totalorder %s162, %s163
      %p177 = scmp.eq.s32.totalorder %s33, 1
      %p178 = por %p176, %p177
      %p180 = scmp.ne.s32.totalorder %s163, %s179
      %p181 = scmp.eq.s32.totalorder %s33, 0
      %p182 = por %p180, %p181
      %s183 = ssub.s32 %s34, %s46
      %p184 = scmp.eq.s32.totalorder %s183, 0
      %s186 = sadd.s32 %s185, 1
      %s187 = scalar_select %p184, %s185, %s186
      %p190 = pneg %p184
      %p191 = scmp.eq.s32.totalorder %s27, 1
      %p192 = por %p190, %p191
      %p193 = scmp.ne.s32.totalorder %s185, %s188
      %p194 = scmp.eq.s32.totalorder %s27, 0
      %p195 = por %p193, %p194
      %p196 = scmp.ne.s32.totalorder %s185, %s188
      %p197 = scmp.eq.s32.totalorder %s32, 1
      %p198 = por %p196, %p197
      %p199 = scmp.ne.s32.totalorder %s188, %s189
      %p200 = scmp.eq.s32.totalorder %s32, 0
      %p201 = por %p199, %p200
      %p202 = scmp.ne.s32.totalorder %s188, %s189
      %p203 = scmp.eq.s32.totalorder %s33, 1
      %p204 = por %p202, %p203
      %p206 = scmp.ne.s32.totalorder %s189, %s205
      %p207 = scmp.eq.s32.totalorder %s33, 0
      %p208 = por %p206, %p207
      %s210 = sadd.s32 %s209, 1
      %p213 = scmp.eq.s32.totalorder %s27, 1
      %p214 = scmp.ne.s32.totalorder %s209, %s211
      %p215 = scmp.eq.s32.totalorder %s27, 0
      %p216 = por %p214, %p215
      %p217 = scmp.ne.s32.totalorder %s209, %s211
      %p218 = scmp.eq.s32.totalorder %s32, 1
      %p219 = por %p217, %p218
      %p220 = scmp.ne.s32.totalorder %s211, %s212
      %p221 = scmp.eq.s32.totalorder %s32, 0
      %p222 = por %p220, %p221
      %p223 = scmp.ne.s32.totalorder %s211, %s212
      %p224 = scmp.eq.s32.totalorder %s33, 1
      %p225 = por %p223, %p224
      %p227 = scmp.ne.s32.totalorder %s212, %s226
      %p228 = scmp.eq.s32.totalorder %s33, 0
      %p229 = por %p227, %p228
      %s231 = sadd.s32 %s230, 1
      %p234 = scmp.eq.s32.totalorder %s27, 1
      %p235 = scmp.ne.s32.totalorder %s230, %s232
      %p236 = scmp.eq.s32.totalorder %s27, 0
      %p237 = por %p235, %p236
      %p238 = scmp.ne.s32.totalorder %s230, %s232
      %p239 = scmp.eq.s32.totalorder %s32, 1
      %p240 = por %p238, %p239
      %p241 = scmp.ne.s32.totalorder %s232, %s233
      %p242 = scmp.eq.s32.totalorder %s32, 0
      %p243 = por %p241, %p242
      %p244 = scmp.ne.s32.totalorder %s232, %s233
      %p245 = scmp.eq.s32.totalorder %s33, 1
      %p246 = por %p244, %p245
      %p248 = scmp.ne.s32.totalorder %s233, %s247
      %p249 = scmp.eq.s32.totalorder %s33, 0
      %p250 = por %p248, %p249
      %s252 = sadd.s32 %s251, 1
      %p255 = scmp.eq.s32.totalorder %s27, 1
      %p256 = scmp.ne.s32.totalorder %s251, %s253
      %p257 = scmp.eq.s32.totalorder %s27, 0
      %p258 = por %p256, %p257
      %p259 = scmp.ne.s32.totalorder %s251, %s253
      %p260 = scmp.eq.s32.totalorder %s32, 1
      %p261 = por %p259, %p260
      %p262 = scmp.ne.s32.totalorder %s253, %s254
      %p263 = scmp.eq.s32.totalorder %s32, 0
      %p264 = por %p262, %p263
      %p265 = scmp.ne.s32.totalorder %s253, %s254
      %p266 = scmp.eq.s32.totalorder %s33, 1
      %p267 = por %p265, %p266
      %p269 = scmp.ne.s32.totalorder %s254, %s268
      %p270 = scmp.eq.s32.totalorder %s33, 0
      %p271 = por %p269, %p270
      %s273 = sadd.s32 %s272, 1
      %p276 = scmp.eq.s32.totalorder %s27, 1
      %p277 = scmp.ne.s32.totalorder %s272, %s274
      %p278 = scmp.eq.s32.totalorder %s27, 0
      %p279 = por %p277, %p278
      %p280 = scmp.ne.s32.totalorder %s272, %s274
      %p281 = scmp.eq.s32.totalorder %s32, 1
      %p282 = por %p280, %p281
      %p283 = scmp.ne.s32.totalorder %s274, %s275
      %p284 = scmp.eq.s32.totalorder %s32, 0
      %p285 = por %p283, %p284
      %p286 = scmp.ne.s32.totalorder %s274, %s275
      %p287 = scmp.eq.s32.totalorder %s33, 1
      %p288 = por %p286, %p287
      %p290 = scmp.ne.s32.totalorder %s275, %s289
      %p291 = scmp.eq.s32.totalorder %s33, 0
      %p292 = por %p290, %p291
      %s294 = sadd.s32 %s293, 1
      %p297 = scmp.eq.s32.totalorder %s27, 1
      %p298 = scmp.ne.s32.totalorder %s293, %s295
      %p299 = scmp.eq.s32.totalorder %s27, 0
      %p300 = por %p298, %p299
      %p301 = scmp.ne.s32.totalorder %s293, %s295
      %p302 = scmp.eq.s32.totalorder %s32, 1
      %p303 = por %p301, %p302
      %p304 = scmp.ne.s32.totalorder %s295, %s296
      %p305 = scmp.eq.s32.totalorder %s32, 0
      %p306 = por %p304, %p305
      %p307 = scmp.ne.s32.totalorder %s295, %s296
      %p308 = scmp.eq.s32.totalorder %s33, 1
      %p309 = por %p307, %p308
      %p311 = scmp.ne.s32.totalorder %s296, %s310
      %p312 = scmp.eq.s32.totalorder %s33, 0
      %p313 = por %p311, %p312
      %s315 = sadd.s32 %s314, 1
      %p318 = scmp.eq.s32.totalorder %s27, 1
      %p319 = scmp.ne.s32.totalorder %s314, %s316
      %p320 = scmp.eq.s32.totalorder %s27, 0
      %p321 = por %p319, %p320
      %p322 = scmp.ne.s32.totalorder %s314, %s316
      %p323 = scmp.eq.s32.totalorder %s32, 1
      %p324 = por %p322, %p323
      %p325 = scmp.ne.s32.totalorder %s316, %s317
      %p326 = scmp.eq.s32.totalorder %s32, 0
      %p327 = por %p325, %p326
      %p328 = scmp.ne.s32.totalorder %s316, %s317
      %p329 = scmp.eq.s32.totalorder %s33, 1
      %p330 = por %p328, %p329
      %p332 = scmp.ne.s32.totalorder %s317, %s331
      %p333 = scmp.eq.s32.totalorder %s33, 0
      %p334 = por %p332, %p333
      %s336 = sadd.s32 %s335, 1
      %p339 = scmp.eq.s32.totalorder %s27, 1
      %p340 = scmp.ne.s32.totalorder %s335, %s337
      %p341 = scmp.eq.s32.totalorder %s27, 0
      %p342 = por %p340, %p341
      %p343 = scmp.ne.s32.totalorder %s335, %s337
      %p344 = scmp.eq.s32.totalorder %s32, 1
      %p345 = por %p343, %p344
      %p346 = scmp.ne.s32.totalorder %s337, %s338
      %p347 = scmp.eq.s32.totalorder %s32, 0
      %p348 = por %p346, %p347
      %p349 = scmp.ne.s32.totalorder %s337, %s338
      %p350 = scmp.eq.s32.totalorder %s33, 1
      %p351 = por %p349, %p350
      %p353 = scmp.ne.s32.totalorder %s338, %s352
      %p354 = scmp.eq.s32.totalorder %s33, 0
      %p355 = por %p353, %p354
      %s357 = sadd.s32 %s356, 1
      %p360 = scmp.eq.s32.totalorder %s27, 1
      %p361 = scmp.ne.s32.totalorder %s356, %s358
      %p362 = scmp.eq.s32.totalorder %s27, 0
      %p363 = por %p361, %p362
      %p364 = scmp.ne.s32.totalorder %s356, %s358
      %p365 = scmp.eq.s32.totalorder %s32, 1
      %p366 = por %p364, %p365
      %p367 = scmp.ne.s32.totalorder %s358, %s359
      %p368 = scmp.eq.s32.totalorder %s32, 0
      %p369 = por %p367, %p368
      %p370 = scmp.ne.s32.totalorder %s358, %s359
      %p371 = scmp.eq.s32.totalorder %s33, 1
      %p372 = por %p370, %p371
      %p374 = scmp.ne.s32.totalorder %s359, %s373
      %p375 = scmp.eq.s32.totalorder %s33, 0
      %p376 = por %p374, %p375
      %s378 = sadd.s32 %s377, 1
      %p381 = scmp.eq.s32.totalorder %s27, 1
      %p382 = scmp.ne.s32.totalorder %s377, %s379
      %p383 = scmp.eq.s32.totalorder %s27, 0
      %p384 = por %p382, %p383
      %p385 = scmp.ne.s32.totalorder %s377, %s379
      %p386 = scmp.eq.s32.totalorder %s32, 1
      %p387 = por %p385, %p386
      %p388 = scmp.ne.s32.totalorder %s379, %s380
      %p389 = scmp.eq.s32.totalorder %s32, 0
      %p390 = por %p388, %p389
      %p391 = scmp.ne.s32.totalorder %s379, %s380
      %p392 = scmp.eq.s32.totalorder %s33, 1
      %p393 = por %p391, %p392
      %p395 = scmp.ne.s32.totalorder %s380, %s394
      %p396 = scmp.eq.s32.totalorder %s33, 0
      %p397 = por %p395, %p396
      %s399 = sadd.s32 %s398, 1
      %p402 = scmp.eq.s32.totalorder %s27, 1
      %p403 = scmp.ne.s32.totalorder %s398, %s400
      %p404 = scmp.eq.s32.totalorder %s27, 0
      %p405 = por %p403, %p404
      %p406 = scmp.ne.s32.totalorder %s398, %s400
      %p407 = scmp.eq.s32.totalorder %s32, 1
      %p408 = por %p406, %p407
      %p409 = scmp.ne.s32.totalorder %s400, %s401
      %p410 = scmp.eq.s32.totalorder %s32, 0
      %p411 = por %p409, %p410
      %p412 = scmp.ne.s32.totalorder %s400, %s401
      %p413 = scmp.eq.s32.totalorder %s33, 1
      %p414 = por %p412, %p413
      %p416 = scmp.ne.s32.totalorder %s401, %s415
      %p417 = scmp.eq.s32.totalorder %s33, 0
      %p418 = por %p416, %p417
      %s420 = sadd.s32 %s419, 1
      %p423 = scmp.eq.s32.totalorder %s27, 1
      %p424 = scmp.ne.s32.totalorder %s419, %s421
      %p425 = scmp.eq.s32.totalorder %s27, 0
      %p426 = por %p424, %p425
      %p427 = scmp.ne.s32.totalorder %s419, %s421
      %p428 = scmp.eq.s32.totalorder %s32, 1
      %p429 = por %p427, %p428
      %p430 = scmp.ne.s32.totalorder %s421, %s422
      %p431 = scmp.eq.s32.totalorder %s32, 0
      %p432 = por %p430, %p431
      %p433 = scmp.ne.s32.totalorder %s421, %s422
      %p434 = scmp.eq.s32.totalorder %s33, 1
      %p435 = por %p433, %p434
      %p437 = scmp.ne.s32.totalorder %s422, %s436
      %p438 = scmp.eq.s32.totalorder %s33, 0
      %p439 = por %p437, %p438
      %s441 = sadd.s32 %s440, 1
      %p444 = scmp.eq.s32.totalorder %s27, 1
      %p445 = scmp.ne.s32.totalorder %s440, %s442
      %p446 = scmp.eq.s32.totalorder %s27, 0
      %p447 = por %p445, %p446
      %p448 = scmp.ne.s32.totalorder %s440, %s442
      %p449 = scmp.eq.s32.totalorder %s32, 1
      %p450 = por %p448, %p449
      %p451 = scmp.ne.s32.totalorder %s442, %s443
      %p452 = scmp.eq.s32.totalorder %s32, 0
      %p453 = por %p451, %p452
      %p454 = scmp.ne.s32.totalorder %s442, %s443
      %p455 = scmp.eq.s32.totalorder %s33, 1
      %p456 = por %p454, %p455
      %p458 = scmp.ne.s32.totalorder %s443, %s457
      %p459 = scmp.eq.s32.totalorder %s33, 0
      %p460 = por %p458, %p459
      %s461 = ssub.s32 %s34, %s46
      %s462 = ssub.s32 %s35, %s42
      %s463 = sor.u32 %s461, %s462
      %p464 = scmp.eq.s32.totalorder %s463, 0
      %s466 = sadd.s32 %s465, 1
      %s467 = scalar_select %p464, %s465, %s466
      %p470 = pneg %p464
      %p471 = scmp.eq.s32.totalorder %s27, 1
      %p472 = por %p470, %p471
      %p473 = scmp.ne.s32.totalorder %s465, %s468
      %p474 = scmp.eq.s32.totalorder %s27, 0
      %p475 = por %p473, %p474
      %p476 = scmp.ne.s32.totalorder %s465, %s468
      %p477 = scmp.eq.s32.totalorder %s32, 1
      %p478 = por %p476, %p477
      %p479 = scmp.ne.s32.totalorder %s468, %s469
      %p480 = scmp.eq.s32.totalorder %s32, 0
      %p481 = por %p479, %p480
      %p482 = scmp.ne.s32.totalorder %s468, %s469
      %p483 = scmp.eq.s32.totalorder %s33, 1
      %p484 = por %p482, %p483
      %p486 = scmp.ne.s32.totalorder %s469, %s485
      %p487 = scmp.eq.s32.totalorder %s33, 0
      %p488 = por %p486, %p487
      %p489 = scmp.le.s32.totalorder 1, %s27
      %p490 = scmp.lt.s32.totalorder %s27, 3
      %p491 = pnand %p489, %p490
      %p492 = pneg %p491
      // Predicated region
      $region9: #{tpu_custom_call.1} parent=5 // pred_check
        _
      $region10: #{tpu_custom_call.1} parent=5 // pred_check_branch
        %494 = sbr.rel (%p491) target = $region12
      $region11: #{tpu_custom_call.1} parent=5 // pred_region
        %s495 = ssub.s32 %s27, 1
        // Predicated region
        $region13: #{tpu_custom_call.1} parent=11 // pred_check
          %p496 = pneg %p222
        $region14: #{tpu_custom_call.1} parent=11 // pred_check_branch
          %498 = sbr.rel (%p496) target = $region16
        $region15: #{tpu_custom_call.1} parent=11 // pred_region
          _
        $region16: #{tpu_custom_call.1} parent=11 // pred_fallthru
          _
        // Predicated region
        $region17: #{tpu_custom_call.1} parent=11 // pred_check
          %p499 = pneg %p243
        $region18: #{tpu_custom_call.1} parent=11 // pred_check_branch
          %501 = sbr.rel (%p499) target = $region20
        $region19: #{tpu_custom_call.1} parent=11 // pred_region
          _
        $region20: #{tpu_custom_call.1} parent=11 // pred_fallthru
          _
        // Predicated region
        $region21: #{tpu_custom_call.1} parent=11 // pred_check
          %p502 = pneg %p264
        $region22: #{tpu_custom_call.1} parent=11 // pred_check_branch
          %504 = sbr.rel (%p502) target = $region24
        $region23: #{tpu_custom_call.1} parent=11 // pred_region
          _
        $region24: #{tpu_custom_call.1} parent=11 // pred_fallthru
          _
        // Predicated region
        $region25: #{tpu_custom_call.1} parent=11 // pred_check
          %p505 = pneg %p285
        $region26: #{tpu_custom_call.1} parent=11 // pred_check_branch
          %507 = sbr.rel (%p505) target = $region28
        $region27: #{tpu_custom_call.1} parent=11 // pred_region
          _
        $region28: #{tpu_custom_call.1} parent=11 // pred_fallthru
          _
        // Predicated region
        $region29: #{tpu_custom_call.1} parent=11 // pred_check
          %p508 = pneg %p306
        $region30: #{tpu_custom_call.1} parent=11 // pred_check_branch
          %510 = sbr.rel (%p508) target = $region32
        $region31: #{tpu_custom_call.1} parent=11 // pred_region
          _
        $region32: #{tpu_custom_call.1} parent=11 // pred_fallthru
          _
        // Predicated region
        $region33: #{tpu_custom_call.1} parent=11 // pred_check
          %p511 = pneg %p327
        $region34: #{tpu_custom_call.1} parent=11 // pred_check_branch
          %513 = sbr.rel (%p511) target = $region36
        $region35: #{tpu_custom_call.1} parent=11 // pred_region
          _
        $region36: #{tpu_custom_call.1} parent=11 // pred_fallthru
          _
        // Predicated region
        $region37: #{tpu_custom_call.1} parent=11 // pred_check
          %p514 = pneg %p348
        $region38: #{tpu_custom_call.1} parent=11 // pred_check_branch
          %516 = sbr.rel (%p514) target = $region40
        $region39: #{tpu_custom_call.1} parent=11 // pred_region
          _
        $region40: #{tpu_custom_call.1} parent=11 // pred_fallthru
          _
        // Predicated region
        $region41: #{tpu_custom_call.1} parent=11 // pred_check
          %p517 = pneg %p369
        $region42: #{tpu_custom_call.1} parent=11 // pred_check_branch
          %519 = sbr.rel (%p517) target = $region44
        $region43: #{tpu_custom_call.1} parent=11 // pred_region
          _
        $region44: #{tpu_custom_call.1} parent=11 // pred_fallthru
          _
        // Predicated region
        $region45: #{tpu_custom_call.1} parent=11 // pred_check
          %p520 = pneg %p390
        $region46: #{tpu_custom_call.1} parent=11 // pred_check_branch
          %522 = sbr.rel (%p520) target = $region48
        $region47: #{tpu_custom_call.1} parent=11 // pred_region
          _
        $region48: #{tpu_custom_call.1} parent=11 // pred_fallthru
          _
        // Predicated region
        $region49: #{tpu_custom_call.1} parent=11 // pred_check
          %p523 = pneg %p411
        $region50: #{tpu_custom_call.1} parent=11 // pred_check_branch
          %525 = sbr.rel (%p523) target = $region52
        $region51: #{tpu_custom_call.1} parent=11 // pred_region
          _
        $region52: #{tpu_custom_call.1} parent=11 // pred_fallthru
          _
        // Predicated region
        $region53: #{tpu_custom_call.1} parent=11 // pred_check
          %p526 = pneg %p432
        $region54: #{tpu_custom_call.1} parent=11 // pred_check_branch
          %528 = sbr.rel (%p526) target = $region56
        $region55: #{tpu_custom_call.1} parent=11 // pred_region
          _
        $region56: #{tpu_custom_call.1} parent=11 // pred_fallthru
          _
        // Predicated region
        $region57: #{tpu_custom_call.1} parent=11 // pred_check
          %p529 = pneg %p453
        $region58: #{tpu_custom_call.1} parent=11 // pred_check_branch
          %531 = sbr.rel (%p529) target = $region60
        $region59: #{tpu_custom_call.1} parent=11 // pred_region
          _
        $region60: #{tpu_custom_call.1} parent=11 // pred_fallthru
          _
      $region12: #{tpu_custom_call.1} parent=5 // pred_fallthru
        _
      %p532 = scmp.lt.s32.totalorder %s27, 2
      // Predicated region
      $region61: #{tpu_custom_call.1} parent=5 // pred_check
        %p533 = pneg %p532
      $region62: #{tpu_custom_call.1} parent=5 // pred_check_branch
        %535 = sbr.rel (%p533) target = $region64
      $region63: #{tpu_custom_call.1} parent=5 // pred_region
        // Predicated region
        $region65: #{tpu_custom_call.1} parent=63 // pred_check
          %p536 = pneg %p59
        $region66: #{tpu_custom_call.1} parent=63 // pred_check_branch
          %538 = sbr.rel (%p536) target = $region68
        $region67: #{tpu_custom_call.1} parent=63 // pred_region
          %p539 = scmp.lt.s32.totalorder %s34, 1
          %s540 = scalar_select %p539, %s34, 1
          %s541 = smul.addr %s540, 8
          %s542 = smul.addr %s541, 8
          %s543 = scalar_lea.vmem %s0, %s542
        $region68: #{tpu_custom_call.1} parent=63 // pred_fallthru
          _
        // Predicated region
        $region69: #{tpu_custom_call.1} parent=63 // pred_check
          %p544 = pneg %p87
        $region70: #{tpu_custom_call.1} parent=63 // pred_check_branch
          %546 = sbr.rel (%p544) target = $region72
        $region71: #{tpu_custom_call.1} parent=63 // pred_region
          %s547 = smul.u32 4, %s35
          %p548 = scmp.lt.s32.totalorder %s34, 1
          %s549 = scalar_select %p548, %s34, 1
          %p550 = scmp.lt.s32.totalorder %s547, 3
          %s551 = scalar_select %p550, %s547, 3
          %s552 = smul.addr %s549, 4
          %s553 = sadd.s32 %s551, %s552
          %s554 = smul.addr %s553, 4
          %s555 = scalar_lea.vmem %s1, %s554
          %s556 = smul.u32 4, %s35
        $region72: #{tpu_custom_call.1} parent=63 // pred_fallthru
          _
        // Predicated region
        $region73: #{tpu_custom_call.1} parent=63 // pred_check
          %p557 = pneg %p113
        $region74: #{tpu_custom_call.1} parent=63 // pred_check_branch
          %559 = sbr.rel (%p557) target = $region76
        $region75: #{tpu_custom_call.1} parent=63 // pred_region
          %p560 = scmp.lt.s32.totalorder %s34, 1
          %s561 = scalar_select %p560, %s34, 1
          %s562 = smul.addr %s561, 8
          %s563 = smul.addr %s562, 8
          %s564 = scalar_lea.vmem %s2, %s563
        $region76: #{tpu_custom_call.1} parent=63 // pred_fallthru
          _
        // Predicated region
        $region77: #{tpu_custom_call.1} parent=63 // pred_check
          %p565 = pneg %p141
        $region78: #{tpu_custom_call.1} parent=63 // pred_check_branch
          %567 = sbr.rel (%p565) target = $region80
        $region79: #{tpu_custom_call.1} parent=63 // pred_region
          %s568 = smul.u32 4, %s35
          %p569 = scmp.lt.s32.totalorder %s34, 1
          %s570 = scalar_select %p569, %s34, 1
          %p571 = scmp.lt.s32.totalorder %s568, 3
          %s572 = scalar_select %p571, %s568, 3
          %s573 = smul.addr %s570, 4
          %s574 = sadd.s32 %s572, %s573
          %s575 = scalar_lea.vmem %s3, %s574
          %s576 = smul.u32 4, %s35
        $region80: #{tpu_custom_call.1} parent=63 // pred_fallthru
          _
        // Predicated region
        $region81: #{tpu_custom_call.1} parent=63 // pred_check
          %p577 = pneg %p169
        $region82: #{tpu_custom_call.1} parent=63 // pred_check_branch
          %579 = sbr.rel (%p577) target = $region84
        $region83: #{tpu_custom_call.1} parent=63 // pred_region
          %s580 = smul.u32 4, %s35
          %p581 = scmp.lt.s32.totalorder %s34, 1
          %s582 = scalar_select %p581, %s34, 1
          %p583 = scmp.lt.s32.totalorder %s580, 3
          %s584 = scalar_select %p583, %s580, 3
          %s585 = smul.addr %s582, 8
          %s586 = sadd.s32 %s584, %s585
          %s587 = smul.addr %s586, 4
          %s588 = scalar_lea.vmem %s4, %s587
          %s589 = smul.u32 4, %s35
        $region84: #{tpu_custom_call.1} parent=63 // pred_fallthru
          _
        // Predicated region
        $region85: #{tpu_custom_call.1} parent=63 // pred_check
          %p590 = pneg %p195
        $region86: #{tpu_custom_call.1} parent=63 // pred_check_branch
          %592 = sbr.rel (%p590) target = $region88
        $region87: #{tpu_custom_call.1} parent=63 // pred_region
          %p593 = scmp.lt.s32.totalorder %s34, 1
          %s594 = scalar_select %p593, %s34, 1
          %s595 = smul.addr %s594, 3
          %s596 = smul.addr %s595, 4
          %s597 = scalar_lea.vmem %s5, %s596
        $region88: #{tpu_custom_call.1} parent=63 // pred_fallthru
          _
      $region64: #{tpu_custom_call.1} parent=5 // pred_fallthru
        _
      %p598 = scmp.le.s32.totalorder 1, %s27
      %p599 = scmp.lt.s32.totalorder %s27, 3
      %p600 = pnand %p598, %p599
      %p601 = pneg %p600
      // Predicated region
      $region89: #{tpu_custom_call.1} parent=5 // pred_check
        _
      $region90: #{tpu_custom_call.1} parent=5 // pred_check_branch
        %603 = sbr.rel (%p600) target = $region92
      $region91: #{tpu_custom_call.1} parent=5 // pred_region
        %s604 = ssub.s32 %s27, 1
        %p605 = scmp.lt.s32.totalorder %s36, 1
        %s606 = scalar_select %p605, %s36, 1
        %s607 = smul.addr %s606, 8
        %s608 = smul.addr %s607, 8
        %s609 = scalar_lea.vmem %s0, %s608
        %p610 = pneg %p65
        %p611 = pneg %p62
        %s612 = smul.u32 4, %s37
        %p613 = scmp.lt.s32.totalorder %s36, 1
        %s614 = scalar_select %p613, %s36, 1
        %p615 = scmp.lt.s32.totalorder %s612, 3
        %s616 = scalar_select %p615, %s612, 3
        %s617 = smul.addr %s614, 4
        %s618 = sadd.s32 %s616, %s617
        %s619 = smul.addr %s618, 4
        %s620 = scalar_lea.vmem %s1, %s619
        %p621 = pneg %p93
        %p622 = pneg %p90
        %p623 = scmp.lt.s32.totalorder %s36, 1
        %s624 = scalar_select %p623, %s36, 1
        %s625 = smul.addr %s624, 8
        %s626 = smul.addr %s625, 8
        %s627 = scalar_lea.vmem %s2, %s626
        %p628 = pneg %p119
        %p629 = pneg %p116
        %s630 = smul.u32 4, %s37
        %p631 = scmp.lt.s32.totalorder %s36, 1
        %s632 = scalar_select %p631, %s36, 1
        %p633 = scmp.lt.s32.totalorder %s630, 3
        %s634 = scalar_select %p633, %s630, 3
        %s635 = smul.addr %s632, 4
        %s636 = sadd.s32 %s634, %s635
        %s637 = scalar_lea.vmem %s3, %s636
        %p638 = pneg %p147
        %p639 = pneg %p144
        %s640 = smul.u32 4, %s37
        %p641 = scmp.lt.s32.totalorder %s36, 1
        %s642 = scalar_select %p641, %s36, 1
        %p643 = scmp.lt.s32.totalorder %s640, 3
        %s644 = scalar_select %p643, %s640, 3
        %s645 = smul.addr %s642, 8
        %s646 = sadd.s32 %s644, %s645
        %s647 = smul.addr %s646, 4
        %s648 = scalar_lea.vmem %s4, %s647
        %p649 = pneg %p175
        %p650 = pneg %p172
        %p651 = scmp.lt.s32.totalorder %s36, 1
        %s652 = scalar_select %p651, %s36, 1
        %s653 = smul.addr %s652, 3
        %s654 = smul.addr %s653, 4
        %s655 = scalar_lea.vmem %s5, %s654
        %p656 = pneg %p201
        %p657 = pneg %p198
        %p658 = pneg %p222
        %p659 = pneg %p219
        %p660 = pneg %p243
        %p661 = pneg %p240
        %p662 = pneg %p264
        %p663 = pneg %p261
        %p664 = pneg %p285
        %p665 = pneg %p282
        %p666 = pneg %p306
        %p667 = pneg %p303
        %p668 = pneg %p327
        %p669 = pneg %p324
        %p670 = pneg %p348
        %p671 = pneg %p345
        %p672 = pneg %p369
        %p673 = pneg %p366
        %p674 = pneg %p390
        %p675 = pneg %p387
        %p676 = pneg %p411
        %p677 = pneg %p408
        %p678 = pneg %p432
        %p679 = pneg %p429
        %p680 = pneg %p453
        %p681 = pneg %p450
        %p682 = pneg %p481
        %p683 = pneg %p478
        %s684 = sand.u32 %s468, 1
        %s685 = scalar_lea.sflag [#allocation3], %s684
        %s686 = sand.u32 %s468, 1
        %s687 = smul.addr %s686, 128
        %s688 = scalar_lea.vmem [#allocation2], %s687
        %p689 = scmp.lt.s32.totalorder %s36, 1
        %s690 = scalar_select %p689, %s36, 1
        %s691 = smul.addr %s690, 8
        %s692 = smul.addr %s691, 8
        %s693 = scalar_lea.vmem %s0, %s692
        %s694 = smul.u32 4, %s37
        %p695 = scmp.lt.s32.totalorder %s36, 1
        %s696 = scalar_select %p695, %s36, 1
        %p697 = scmp.lt.s32.totalorder %s694, 3
        %s698 = scalar_select %p697, %s694, 3
        %s699 = smul.addr %s696, 4
        %s700 = sadd.s32 %s698, %s699
        %s701 = smul.addr %s700, 4
        %s702 = scalar_lea.vmem %s1, %s701
        %s703 = smul.u32 4, %s37
        %p704 = scmp.lt.s32.totalorder %s36, 1
        %s705 = scalar_select %p704, %s36, 1
        %s706 = smul.addr %s705, 8
        %s707 = smul.addr %s706, 8
        %s708 = scalar_lea.vmem %s2, %s707
        %s709 = smul.u32 4, %s37
        %p710 = scmp.lt.s32.totalorder %s36, 1
        %s711 = scalar_select %p710, %s36, 1
        %p712 = scmp.lt.s32.totalorder %s709, 3
        %s713 = scalar_select %p712, %s709, 3
        %s714 = smul.addr %s711, 4
        %s715 = sadd.s32 %s713, %s714
        %s716 = scalar_lea.vmem %s3, %s715
        %s717 = smul.u32 4, %s37
        %s718 = smul.u32 4, %s37
        %p719 = scmp.lt.s32.totalorder %s36, 1
        %s720 = scalar_select %p719, %s36, 1
        %p721 = scmp.lt.s32.totalorder %s718, 3
        %s722 = scalar_select %p721, %s718, 3
        %s723 = smul.addr %s720, 8
        %s724 = sadd.s32 %s722, %s723
        %s725 = smul.addr %s724, 4
        %s726 = scalar_lea.vmem %s4, %s725
        %s727 = smul.u32 4, %s37
        %p728 = scmp.lt.s32.totalorder %s36, 1
        %s729 = scalar_select %p728, %s36, 1
        %s730 = smul.addr %s729, 3
        %s731 = smul.addr %s730, 4
        %s732 = scalar_lea.vmem %s5, %s731
        %s733 = smul.u32 4, %s37
        %v735 = vld [vmem:[%s693] sm:$0xff]
        %v736 = vld [vmem:[%s693 + $0x8] sm:$0xff]
        %v737 = vld [vmem:[%s693 + $0x10] sm:$0xff]
        %v738 = vld [vmem:[%s693 + $0x18] sm:$0xff]
        %v739 = vld [vmem:[%s693 + $0x20] sm:$0xff]
        %v740 = vld [vmem:[%s693 + $0x28] sm:$0xff]
        %v741 = vld [vmem:[%s693 + $0x30] sm:$0xff]
        %v742 = vld [vmem:[%s693 + $0x38] sm:$0xff]
        %v743 = vld [vmem:[%s702] sm:$0x77]
        %v744 = vld [vmem:[%s702 + $0x8] sm:$0x77]
        %v745 = vld [vmem:[%s708] sm:$0xff]
        %v746 = vld [vmem:[%s708 + $0x8] sm:$0xff]
        %v747 = vld [vmem:[%s708 + $0x10] sm:$0xff]
        %v748 = vld [vmem:[%s708 + $0x18] sm:$0xff]
        %v749 = vld [vmem:[%s708 + $0x20] sm:$0xff]
        %v750 = vld [vmem:[%s708 + $0x28] sm:$0xff]
        %v751 = vld [vmem:[%s708 + $0x30] sm:$0xff]
        %v752 = vld [vmem:[%s708 + $0x38] sm:$0xff]
        %v753 = vld [vmem:[%s716] sm:$0xf]
        %v754 = vld [vmem:[%s726] sm:$0xff]
        %v755 = vld [vmem:[%s726 + $0x8] sm:$0xff]
        %v756 = vld [vmem:[%s726 + $0x10] sm:$0xff]
        %v757 = vld [vmem:[%s726 + $0x18] sm:$0xff]
        %v758 = vld [vmem:[%s732] sm:$0xf]
        %v759 = vld [vmem:[%s732 + $0x4] sm:$0xf]
        %v760 = vld [vmem:[%s732 + $0x8] sm:$0x1]
        %v763 = vcombine.high %v743, %v743
        %v764 = vcombine.high %v744, %v744
        %vm765 = vcmask 23552
        %v767 = vsel %vm765, %v735, 0
        %v770 = vsel %vm765, %v736, 0
        %v773 = vsel %vm765, %v737, 0
        %v776 = vsel %vm765, %v738, 0
        %v779 = vsel %vm765, %v739, 0
        %v782 = vsel %vm765, %v740, 0
        %v785 = vsel %vm765, %v741, 0
        %v788 = vsel %vm765, %v742, 0
        %vm790 = vcmask 1042432
        %v791 = vsel %vm790, %v743, 0
        %v793 = vsel %vm790, %v763, 0
        %v795 = vsel %vm790, %v744, 0
        %v797 = vsel %vm790, %v764, 0
        %799 = vmatprep.subr.mxu0 %v793
        %800 = vmatpush1.msra.mxu0 %v791
        %801 = vmatprep.subr.mxu0 0.0
        %802 = vmatpush1.msra.mxu0 0.0
        %803 = vmatprep.subr.mxu0 0.0
        %804 = vmatpush1.msra.mxu0 0.0
        %805 = vmatprep.subr.mxu0 0.0
        %806 = vmatpush1.msra.mxu0 0.0
        %807 = vmatprep.subr.mxu0 0.0
        %808 = vmatpush1.msra.mxu0 0.0
        %809 = vmatprep.subr.mxu0 0.0
        %810 = vmatpush1.msra.mxu0 0.0
        %811 = vmatprep.subr.mxu0 0.0
        %812 = vmatpush1.msra.mxu0 0.0
        %813 = vmatprep.subr.mxu0 0.0
        %814 = vmatpush1.msra.mxu0 0.0
        %815 = vmatprep.subr.mxu0 0.0
        %816 = vmatpush1.msra.mxu0 0.0
        %817 = vmatprep.subr.mxu0 0.0
        %818 = vmatpush1.msra.mxu0 0.0
        %819 = vmatprep.subr.mxu0 0.0
        %820 = vmatpush1.msra.mxu0 0.0
        %821 = vmatprep.subr.mxu0 0.0
        %822 = vmatpush1.msra.mxu0 0.0
        %823 = vmatprep.subr.mxu0 0.0
        %824 = vmatpush1.msra.mxu0 0.0
        %825 = vmatprep.subr.mxu0 0.0
        %826 = vmatpush1.msra.mxu0 0.0
        %827 = vmatprep.subr.mxu0 0.0
        %828 = vmatpush1.msra.mxu0 0.0
        %829 = vmatprep.subr.mxu0 0.0
        %830 = vmatpush1.msra.mxu0 0.0
        %831 = vmatprep.subr.mxu0 0.0
        %832 = vmatpush1.msra.mxu0 0.0
        %833 = vmatprep.subr.mxu0 0.0
        %834 = vmatpush1.msra.mxu0 0.0
        %835 = vmatprep.subr.mxu0 0.0
        %836 = vmatpush1.msra.mxu0 0.0
        %837 = vmatprep.subr.mxu0 0.0
        %838 = vmatpush1.msra.mxu0 0.0
        %839 = vmatprep.subr.mxu0 0.0
        %840 = vmatpush1.msra.mxu0 0.0
        %841 = vmatprep.subr.mxu0 0.0
        %842 = vmatpush1.msra.mxu0 0.0
        %843 = vmatprep.subr.mxu0 0.0
        %844 = vmatpush1.msra.mxu0 0.0
        %845 = vmatprep.subr.mxu0 0.0
        %846 = vmatpush1.msra.mxu0 0.0
        %847 = vmatprep.subr.mxu0 0.0
        %848 = vmatpush1.msra.mxu0 0.0
        %849 = vmatprep.subr.mxu0 0.0
        %850 = vmatpush1.msra.mxu0 0.0
        %851 = vmatprep.subr.mxu0 0.0
        %852 = vmatpush1.msra.mxu0 0.0
        %853 = vmatprep.subr.mxu0 0.0
        %854 = vmatpush1.msra.mxu0 0.0
        %855 = vmatprep.subr.mxu0 0.0
        %856 = vmatpush1.msra.mxu0 0.0
        %857 = vmatprep.subr.mxu0 0.0
        %858 = vmatpush1.msra.mxu0 0.0
        %859 = vmatprep.subr.mxu0 0.0
        %860 = vmatpush1.msra.mxu0 0.0
        %861 = vmatprep.subr.mxu0 0.0
        %862 = vmatpush1.msra.mxu0 0.0
        %863 = vmatprep.mubr.f32.mxu0 0.0
        %864 = vmatmul.mubr.f32.gmra.mrb[0].mxu0 %v767
        %v865 = vpop.f32.mrb[0].mxu0
        %v866 = vadd.f32 0.0, %v865
        %v867 = vpop.f32.mrb[0].mxu0
        %v868 = vadd.f32 0.0, %v867
        %869 = vmatprep.mubr.f32.mxu0 0.0
        %870 = vmatmul.mubr.f32.gmra.mrb[0].mxu0 %v770
        %v871 = vpop.f32.mrb[0].mxu0
        %v872 = vadd.f32 0.0, %v871
        %v873 = vpop.f32.mrb[0].mxu0
        %v874 = vadd.f32 0.0, %v873
        %875 = vmatprep.mubr.f32.mxu0 0.0
        %876 = vmatmul.mubr.f32.gmra.mrb[0].mxu0 %v773
        %v877 = vpop.f32.mrb[0].mxu0
        %v878 = vadd.f32 0.0, %v877
        %v879 = vpop.f32.mrb[0].mxu0
        %v880 = vadd.f32 0.0, %v879
        %881 = vmatprep.mubr.f32.mxu0 0.0
        %882 = vmatmul.mubr.f32.gmra.mrb[0].mxu0 %v776
        %v883 = vpop.f32.mrb[0].mxu0
        %v884 = vadd.f32 0.0, %v883
        %v885 = vpop.f32.mrb[0].mxu0
        %v886 = vadd.f32 0.0, %v885
        %887 = vmatprep.mubr.f32.mxu0 0.0
        %888 = vmatmul.mubr.f32.gmra.mrb[0].mxu0 %v779
        %v889 = vpop.f32.mrb[0].mxu0
        %v890 = vadd.f32 0.0, %v889
        %v891 = vpop.f32.mrb[0].mxu0
        %v892 = vadd.f32 0.0, %v891
        %893 = vmatprep.mubr.f32.mxu0 0.0
        %894 = vmatmul.mubr.f32.gmra.mrb[0].mxu0 %v782
        %v895 = vpop.f32.mrb[0].mxu0
        %v896 = vadd.f32 0.0, %v895
        %v897 = vpop.f32.mrb[0].mxu0
        %v898 = vadd.f32 0.0, %v897
        %899 = vmatprep.mubr.f32.mxu0 0.0
        %900 = vmatmul.mubr.f32.gmra.mrb[0].mxu0 %v785
        %v901 = vpop.f32.mrb[0].mxu0
        %v902 = vadd.f32 0.0, %v901
        %v903 = vpop.f32.mrb[0].mxu0
        %v904 = vadd.f32 0.0, %v903
        %905 = vmatprep.mubr.f32.mxu0 0.0
        %906 = vmatmul.mubr.f32.gmra.mrb[0].mxu0 %v788
        %v907 = vpop.f32.mrb[0].mxu0
        %v908 = vadd.f32 0.0, %v907
        %v909 = vpop.f32.mrb[0].mxu0
        %v910 = vadd.f32 0.0, %v909
        %911 = vdwg.mxu0
        %912 = vmatprep.subr.mxu0 %v797
        %913 = vmatpush1.msra.mxu0 %v795
        %914 = vmatprep.subr.mxu0 0.0
        %915 = vmatpush1.msra.mxu0 0.0
        %916 = vmatprep.subr.mxu0 0.0
        %917 = vmatpush1.msra.mxu0 0.0
        %918 = vmatprep.subr.mxu0 0.0
        %919 = vmatpush1.msra.mxu0 0.0
        %920 = vmatprep.subr.mxu0 0.0
        %921 = vmatpush1.msra.mxu0 0.0
        %922 = vmatprep.subr.mxu0 0.0
        %923 = vmatpush1.msra.mxu0 0.0
        %924 = vmatprep.subr.mxu0 0.0
        %925 = vmatpush1.msra.mxu0 0.0
        %926 = vmatprep.subr.mxu0 0.0
        %927 = vmatpush1.msra.mxu0 0.0
        %928 = vmatprep.subr.mxu0 0.0
        %929 = vmatpush1.msra.mxu0 0.0
        %930 = vmatprep.subr.mxu0 0.0
        %931 = vmatpush1.msra.mxu0 0.0
        %932 = vmatprep.subr.mxu0 0.0
        %933 = vmatpush1.msra.mxu0 0.0
        %934 = vmatprep.subr.mxu0 0.0
        %935 = vmatpush1.msra.mxu0 0.0
        %936 = vmatprep.subr.mxu0 0.0
        %937 = vmatpush1.msra.mxu0 0.0
        %938 = vmatprep.subr.mxu0 0.0
        %939 = vmatpush1.msra.mxu0 0.0
        %940 = vmatprep.subr.mxu0 0.0
        %941 = vmatpush1.msra.mxu0 0.0
        %942 = vmatprep.subr.mxu0 0.0
        %943 = vmatpush1.msra.mxu0 0.0
        %944 = vmatprep.subr.mxu0 0.0
        %945 = vmatpush1.msra.mxu0 0.0
        %946 = vmatprep.subr.mxu0 0.0
        %947 = vmatpush1.msra.mxu0 0.0
        %948 = vmatprep.subr.mxu0 0.0
        %949 = vmatpush1.msra.mxu0 0.0
        %950 = vmatprep.subr.mxu0 0.0
        %951 = vmatpush1.msra.mxu0 0.0
        %952 = vmatprep.subr.mxu0 0.0
        %953 = vmatpush1.msra.mxu0 0.0
        %954 = vmatprep.subr.mxu0 0.0
        %955 = vmatpush1.msra.mxu0 0.0
        %956 = vmatprep.subr.mxu0 0.0
        %957 = vmatpush1.msra.mxu0 0.0
        %958 = vmatprep.subr.mxu0 0.0
        %959 = vmatpush1.msra.mxu0 0.0
        %960 = vmatprep.subr.mxu0 0.0
        %961 = vmatpush1.msra.mxu0 0.0
        %962 = vmatprep.subr.mxu0 0.0
        %963 = vmatpush1.msra.mxu0 0.0
        %964 = vmatprep.subr.mxu0 0.0
        %965 = vmatpush1.msra.mxu0 0.0
        %966 = vmatprep.subr.mxu0 0.0
        %967 = vmatpush1.msra.mxu0 0.0
        %968 = vmatprep.subr.mxu0 0.0
        %969 = vmatpush1.msra.mxu0 0.0
        %970 = vmatprep.subr.mxu0 0.0
        %971 = vmatpush1.msra.mxu0 0.0
        %972 = vmatprep.subr.mxu0 0.0
        %973 = vmatpush1.msra.mxu0 0.0
        %974 = vmatprep.subr.mxu0 0.0
        %975 = vmatpush1.msra.mxu0 0.0
        %976 = vmatprep.mubr.f32.mxu0 0.0
        %977 = vmatmul.mubr.f32.gmra.mrb[0].mxu0 %v767
        %v978 = vpop.f32.mrb[0].mxu0
        %v979 = vadd.f32 0.0, %v978
        %v980 = vpop.f32.mrb[0].mxu0
        %v981 = vadd.f32 0.0, %v980
        %982 = vmatprep.mubr.f32.mxu0 0.0
        %983 = vmatmul.mubr.f32.gmra.mrb[0].mxu0 %v770
        %v984 = vpop.f32.mrb[0].mxu0
        %v985 = vadd.f32 0.0, %v984
        %v986 = vpop.f32.mrb[0].mxu0
        %v987 = vadd.f32 0.0, %v986
        %988 = vmatprep.mubr.f32.mxu0 0.0
        %989 = vmatmul.mubr.f32.gmra.mrb[0].mxu0 %v773
        %v990 = vpop.f32.mrb[0].mxu0
        %v991 = vadd.f32 0.0, %v990
        %v992 = vpop.f32.mrb[0].mxu0
        %v993 = vadd.f32 0.0, %v992
        %994 = vmatprep.mubr.f32.mxu0 0.0
        %995 = vmatmul.mubr.f32.gmra.mrb[0].mxu0 %v776
        %v996 = vpop.f32.mrb[0].mxu0
        %v997 = vadd.f32 0.0, %v996
        %v998 = vpop.f32.mrb[0].mxu0
        %v999 = vadd.f32 0.0, %v998
        %1000 = vmatprep.mubr.f32.mxu0 0.0
        %1001 = vmatmul.mubr.f32.gmra.mrb[0].mxu0 %v779
        %v1002 = vpop.f32.mrb[0].mxu0
        %v1003 = vadd.f32 0.0, %v1002
        %v1004 = vpop.f32.mrb[0].mxu0
        %v1005 = vadd.f32 0.0, %v1004
        %1006 = vmatprep.mubr.f32.mxu0 0.0
        %1007 = vmatmul.mubr.f32.gmra.mrb[0].mxu0 %v782
        %v1008 = vpop.f32.mrb[0].mxu0
        %v1009 = vadd.f32 0.0, %v1008
        %v1010 = vpop.f32.mrb[0].mxu0
        %v1011 = vadd.f32 0.0, %v1010
        %1012 = vmatprep.mubr.f32.mxu0 0.0
        %1013 = vmatmul.mubr.f32.gmra.mrb[0].mxu0 %v785
        %v1014 = vpop.f32.mrb[0].mxu0
        %v1015 = vadd.f32 0.0, %v1014
        %v1016 = vpop.f32.mrb[0].mxu0
        %v1017 = vadd.f32 0.0, %v1016
        %1018 = vmatprep.mubr.f32.mxu0 0.0
        %1019 = vmatmul.mubr.f32.gmra.mrb[0].mxu0 %v788
        %v1020 = vpop.f32.mrb[0].mxu0
        %v1021 = vadd.f32 0.0, %v1020
        %v1022 = vpop.f32.mrb[0].mxu0
        %v1023 = vadd.f32 0.0, %v1022
        %1024 = vdwg.mxu0
        %v1025 = vmul.f32 %v866, -2.0
        %v1026 = vmul.f32 %v868, -2.0
        %v1027 = vmul.f32 %v979, -2.0
        %v1028 = vmul.f32 %v981, -2.0
        %v1029 = vmul.f32 %v872, -2.0
        %v1030 = vmul.f32 %v874, -2.0
        %v1031 = vmul.f32 %v985, -2.0
        %v1032 = vmul.f32 %v987, -2.0
        %v1033 = vmul.f32 %v878, -2.0
        %v1034 = vmul.f32 %v880, -2.0
        %v1035 = vmul.f32 %v991, -2.0
        %v1036 = vmul.f32 %v993, -2.0
        %v1037 = vmul.f32 %v884, -2.0
        %v1038 = vmul.f32 %v886, -2.0
        %v1039 = vmul.f32 %v997, -2.0
        %v1040 = vmul.f32 %v999, -2.0
        %v1041 = vmul.f32 %v890, -2.0
        %v1042 = vmul.f32 %v892, -2.0
        %v1043 = vmul.f32 %v1003, -2.0
        %v1044 = vmul.f32 %v1005, -2.0
        %v1045 = vmul.f32 %v896, -2.0
        %v1046 = vmul.f32 %v898, -2.0
        %v1047 = vmul.f32 %v1009, -2.0
        %v1048 = vmul.f32 %v1011, -2.0
        %v1049 = vmul.f32 %v902, -2.0
        %v1050 = vmul.f32 %v904, -2.0
        %v1051 = vmul.f32 %v1015, -2.0
        %v1052 = vmul.f32 %v1017, -2.0
        %v1053 = vmul.f32 %v908, -2.0
        %v1054 = vmul.f32 %v910, -2.0
        %v1055 = vmul.f32 %v1021, -2.0
        %v1056 = vmul.f32 %v1023, -2.0
        %1058 = vset.pattern.permute.xlu0 0
        %1059 = vperm.xlu0 %1058, %v745
        %v1060 = vpop.permute.xlu0 %1059
        %1063 = vset.pattern.permute.xlu0 0
        %1064 = vperm.xlu0 %1063, %v746
        %v1065 = vpop.permute.xlu0 %1064
        %1068 = vset.pattern.permute.xlu0 0
        %1069 = vperm.xlu0 %1068, %v747
        %v1070 = vpop.permute.xlu0 %1069
        %1073 = vset.pattern.permute.xlu0 0
        %1074 = vperm.xlu0 %1073, %v748
        %v1075 = vpop.permute.xlu0 %1074
        %1078 = vset.pattern.permute.xlu0 0
        %1079 = vperm.xlu0 %1078, %v749
        %v1080 = vpop.permute.xlu0 %1079
        %1083 = vset.pattern.permute.xlu0 0
        %1084 = vperm.xlu0 %1083, %v750
        %v1085 = vpop.permute.xlu0 %1084
        %1088 = vset.pattern.permute.xlu0 0
        %1089 = vperm.xlu0 %1088, %v751
        %v1090 = vpop.permute.xlu0 %1089
        %1093 = vset.pattern.permute.xlu0 0
        %1094 = vperm.xlu0 %1093, %v752
        %v1095 = vpop.permute.xlu0 %1094
        %v1097 = vadd.f32 %v1025, %v1060
        %v1098 = vadd.f32 %v1026, %v1060
        %v1099 = vadd.f32 %v1027, %v1060
        %v1100 = vadd.f32 %v1028, %v1060
        %v1101 = vadd.f32 %v1029, %v1065
        %v1102 = vadd.f32 %v1030, %v1065
        %v1103 = vadd.f32 %v1031, %v1065
        %v1104 = vadd.f32 %v1032, %v1065
        %v1105 = vadd.f32 %v1033, %v1070
        %v1106 = vadd.f32 %v1034, %v1070
        %v1107 = vadd.f32 %v1035, %v1070
        %v1108 = vadd.f32 %v1036, %v1070
        %v1109 = vadd.f32 %v1037, %v1075
        %v1110 = vadd.f32 %v1038, %v1075
        %v1111 = vadd.f32 %v1039, %v1075
        %v1112 = vadd.f32 %v1040, %v1075
        %v1113 = vadd.f32 %v1041, %v1080
        %v1114 = vadd.f32 %v1042, %v1080
        %v1115 = vadd.f32 %v1043, %v1080
        %v1116 = vadd.f32 %v1044, %v1080
        %v1117 = vadd.f32 %v1045, %v1085
        %v1118 = vadd.f32 %v1046, %v1085
        %v1119 = vadd.f32 %v1047, %v1085
        %v1120 = vadd.f32 %v1048, %v1085
        %v1121 = vadd.f32 %v1049, %v1090
        %v1122 = vadd.f32 %v1050, %v1090
        %v1123 = vadd.f32 %v1051, %v1090
        %v1124 = vadd.f32 %v1052, %v1090
        %v1125 = vadd.f32 %v1053, %v1095
        %v1126 = vadd.f32 %v1054, %v1095
        %v1127 = vadd.f32 %v1055, %v1095
        %v1128 = vadd.f32 %v1056, %v1095
        %v1130 = vlaneseq
        %v1131 = vshrl.u32 %v1130, 7
        %v1132 = vsub.s32 0, %v1131
        %v1133 = vrot.slane %v753, %v1132
        %v1134 = vlaneseq
        %v1135 = vshrl.u32 %v1134, 7
        %v1136 = vsub.s32 1, %v1135
        %v1137 = vrot.slane %v753, %v1136
        %v1138 = vlaneseq
        %v1139 = vshrl.u32 %v1138, 7
        %v1140 = vsub.s32 2, %v1139
        %v1141 = vrot.slane %v753, %v1140
        %v1142 = vlaneseq
        %v1143 = vshrl.u32 %v1142, 7
        %v1144 = vsub.s32 3, %v1143
        %v1145 = vrot.slane %v753, %v1144
        %v1150 = vadd.f32 %v1097, %v1133
        %v1151 = vadd.f32 %v1098, %v1137
        %v1152 = vadd.f32 %v1099, %v1141
        %v1153 = vadd.f32 %v1100, %v1145
        %v1154 = vadd.f32 %v1101, %v1133
        %v1155 = vadd.f32 %v1102, %v1137
        %v1156 = vadd.f32 %v1103, %v1141
        %v1157 = vadd.f32 %v1104, %v1145
        %v1158 = vadd.f32 %v1105, %v1133
        %v1159 = vadd.f32 %v1106, %v1137
        %v1160 = vadd.f32 %v1107, %v1141
        %v1161 = vadd.f32 %v1108, %v1145
        %v1162 = vadd.f32 %v1109, %v1133
        %v1163 = vadd.f32 %v1110, %v1137
        %v1164 = vadd.f32 %v1111, %v1141
        %v1165 = vadd.f32 %v1112, %v1145
        %v1166 = vadd.f32 %v1113, %v1133
        %v1167 = vadd.f32 %v1114, %v1137
        %v1168 = vadd.f32 %v1115, %v1141
        %v1169 = vadd.f32 %v1116, %v1145
        %v1170 = vadd.f32 %v1117, %v1133
        %v1171 = vadd.f32 %v1118, %v1137
        %v1172 = vadd.f32 %v1119, %v1141
        %v1173 = vadd.f32 %v1120, %v1145
        %v1174 = vadd.f32 %v1121, %v1133
        %v1175 = vadd.f32 %v1122, %v1137
        %v1176 = vadd.f32 %v1123, %v1141
        %v1177 = vadd.f32 %v1124, %v1145
        %v1178 = vadd.f32 %v1125, %v1133
        %v1179 = vadd.f32 %v1126, %v1137
        %v1180 = vadd.f32 %v1127, %v1141
        %v1181 = vadd.f32 %v1128, %v1145
        %v1182 = vmax.f32 %v1150, 0.0
        %v1183 = vmax.f32 %v1151, 0.0
        %v1184 = vmax.f32 %v1152, 0.0
        %v1185 = vmax.f32 %v1153, 0.0
        %v1186 = vmax.f32 %v1154, 0.0
        %v1187 = vmax.f32 %v1155, 0.0
        %v1188 = vmax.f32 %v1156, 0.0
        %v1189 = vmax.f32 %v1157, 0.0
        %v1190 = vmax.f32 %v1158, 0.0
        %v1191 = vmax.f32 %v1159, 0.0
        %v1192 = vmax.f32 %v1160, 0.0
        %v1193 = vmax.f32 %v1161, 0.0
        %v1194 = vmax.f32 %v1162, 0.0
        %v1195 = vmax.f32 %v1163, 0.0
        %v1196 = vmax.f32 %v1164, 0.0
        %v1197 = vmax.f32 %v1165, 0.0
        %v1198 = vmax.f32 %v1166, 0.0
        %v1199 = vmax.f32 %v1167, 0.0
        %v1200 = vmax.f32 %v1168, 0.0
        %v1201 = vmax.f32 %v1169, 0.0
        %v1202 = vmax.f32 %v1170, 0.0
        %v1203 = vmax.f32 %v1171, 0.0
        %v1204 = vmax.f32 %v1172, 0.0
        %v1205 = vmax.f32 %v1173, 0.0
        %v1206 = vmax.f32 %v1174, 0.0
        %v1207 = vmax.f32 %v1175, 0.0
        %v1208 = vmax.f32 %v1176, 0.0
        %v1209 = vmax.f32 %v1177, 0.0
        %v1210 = vmax.f32 %v1178, 0.0
        %v1211 = vmax.f32 %v1179, 0.0
        %v1212 = vmax.f32 %v1180, 0.0
        %v1213 = vmax.f32 %v1181, 0.0
        %v1214 = vmin.f32 %v1182, %v1186
        %v1215 = vmin.f32 %v1214, %v1190
        %v1216 = vmin.f32 %v1215, %v1194
        %v1217 = vmin.f32 %v1216, %v1198
        %v1218 = vmin.f32 %v1217, %v1202
        %v1219 = vmin.f32 %v1218, %v1206
        %v1220 = vmin.f32 %v1219, %v1210
        %v1221 = vrot.slane %v1220, 4
        %v1222 = vmin.f32 %v1220, %v1221
        %v1223 = vrot.slane %v1222, 2
        %v1224 = vmin.f32 %v1222, %v1223
        %v1225 = vrot.slane %v1224, 1
        %v1226 = vmin.f32 %v1224, %v1225
        %v1227 = vmin.f32 %v1183, %v1187
        %v1228 = vmin.f32 %v1227, %v1191
        %v1229 = vmin.f32 %v1228, %v1195
        %v1230 = vmin.f32 %v1229, %v1199
        %v1231 = vmin.f32 %v1230, %v1203
        %v1232 = vmin.f32 %v1231, %v1207
        %v1233 = vmin.f32 %v1232, %v1211
        %v1234 = vrot.slane %v1233, 4
        %v1235 = vmin.f32 %v1233, %v1234
        %v1236 = vrot.slane %v1235, 2
        %v1237 = vmin.f32 %v1235, %v1236
        %v1238 = vrot.slane %v1237, 1
        %v1239 = vmin.f32 %v1237, %v1238
        %v1240 = vmin.f32 %v1184, %v1188
        %v1241 = vmin.f32 %v1240, %v1192
        %v1242 = vmin.f32 %v1241, %v1196
        %v1243 = vmin.f32 %v1242, %v1200
        %v1244 = vmin.f32 %v1243, %v1204
        %v1245 = vmin.f32 %v1244, %v1208
        %v1246 = vmin.f32 %v1245, %v1212
        %v1247 = vrot.slane %v1246, 4
        %v1248 = vmin.f32 %v1246, %v1247
        %v1249 = vrot.slane %v1248, 2
        %v1250 = vmin.f32 %v1248, %v1249
        %v1251 = vrot.slane %v1250, 1
        %v1252 = vmin.f32 %v1250, %v1251
        %v1253 = vmin.f32 %v1185, %v1189
        %v1254 = vmin.f32 %v1253, %v1193
        %v1255 = vmin.f32 %v1254, %v1197
        %v1256 = vmin.f32 %v1255, %v1201
        %v1257 = vmin.f32 %v1256, %v1205
        %v1258 = vmin.f32 %v1257, %v1209
        %v1259 = vmin.f32 %v1258, %v1213
        %v1260 = vrot.slane %v1259, 4
        %v1261 = vmin.f32 %v1259, %v1260
        %v1262 = vrot.slane %v1261, 2
        %v1263 = vmin.f32 %v1261, %v1262
        %v1264 = vrot.slane %v1263, 1
        %v1265 = vmin.f32 %v1263, %v1264
        %v1266 = vadd.f32 %v1226, 1e-08
        %v1267 = vadd.f32 %v1239, 1e-08
        %v1268 = vadd.f32 %v1252, 1e-08
        %v1269 = vadd.f32 %v1265, 1e-08
        %v1270 = vrcp.pop %v1266
        %v1271 = vrcp.pop %v1267
        %v1272 = vrcp.pop %v1268
        %v1273 = vrcp.pop %v1269
        %vm1274 = vcmp.eq.f32.partialorder %v1182, %v1226
        %vm1275 = vcmp.eq.f32.partialorder %v1183, %v1239
        %vm1276 = vcmp.eq.f32.partialorder %v1184, %v1252
        %vm1277 = vcmp.eq.f32.partialorder %v1185, %v1265
        %vm1278 = vcmp.eq.f32.partialorder %v1186, %v1226
        %vm1279 = vcmp.eq.f32.partialorder %v1187, %v1239
        %vm1280 = vcmp.eq.f32.partialorder %v1188, %v1252
        %vm1281 = vcmp.eq.f32.partialorder %v1189, %v1265
        %vm1282 = vcmp.eq.f32.partialorder %v1190, %v1226
        %vm1283 = vcmp.eq.f32.partialorder %v1191, %v1239
        %vm1284 = vcmp.eq.f32.partialorder %v1192, %v1252
        %vm1285 = vcmp.eq.f32.partialorder %v1193, %v1265
        %vm1286 = vcmp.eq.f32.partialorder %v1194, %v1226
        %vm1287 = vcmp.eq.f32.partialorder %v1195, %v1239
        %vm1288 = vcmp.eq.f32.partialorder %v1196, %v1252
        %vm1289 = vcmp.eq.f32.partialorder %v1197, %v1265
        %vm1290 = vcmp.eq.f32.partialorder %v1198, %v1226
        %vm1291 = vcmp.eq.f32.partialorder %v1199, %v1239
        %vm1292 = vcmp.eq.f32.partialorder %v1200, %v1252
        %vm1293 = vcmp.eq.f32.partialorder %v1201, %v1265
        %vm1294 = vcmp.eq.f32.partialorder %v1202, %v1226
        %vm1295 = vcmp.eq.f32.partialorder %v1203, %v1239
        %vm1296 = vcmp.eq.f32.partialorder %v1204, %v1252
        %vm1297 = vcmp.eq.f32.partialorder %v1205, %v1265
        %vm1298 = vcmp.eq.f32.partialorder %v1206, %v1226
        %vm1299 = vcmp.eq.f32.partialorder %v1207, %v1239
        %vm1300 = vcmp.eq.f32.partialorder %v1208, %v1252
        %vm1301 = vcmp.eq.f32.partialorder %v1209, %v1265
        %vm1302 = vcmp.eq.f32.partialorder %v1210, %v1226
        %vm1303 = vcmp.eq.f32.partialorder %v1211, %v1239
        %vm1304 = vcmp.eq.f32.partialorder %v1212, %v1252
        %vm1305 = vcmp.eq.f32.partialorder %v1213, %v1265
        %v1306 = vsel %vm1274, %v1270, 0.0
        %v1307 = vsel %vm1275, %v1271, 0.0
        %v1308 = vsel %vm1276, %v1272, 0.0
        %v1309 = vsel %vm1277, %v1273, 0.0
        %v1310 = vsel %vm1278, %v1270, 0.0
        %v1311 = vsel %vm1279, %v1271, 0.0
        %v1312 = vsel %vm1280, %v1272, 0.0
        %v1313 = vsel %vm1281, %v1273, 0.0
        %v1314 = vsel %vm1282, %v1270, 0.0
        %v1315 = vsel %vm1283, %v1271, 0.0
        %v1316 = vsel %vm1284, %v1272, 0.0
        %v1317 = vsel %vm1285, %v1273, 0.0
        %v1318 = vsel %vm1286, %v1270, 0.0
        %v1319 = vsel %vm1287, %v1271, 0.0
        %v1320 = vsel %vm1288, %v1272, 0.0
        %v1321 = vsel %vm1289, %v1273, 0.0
        %v1322 = vsel %vm1290, %v1270, 0.0
        %v1323 = vsel %vm1291, %v1271, 0.0
        %v1324 = vsel %vm1292, %v1272, 0.0
        %v1325 = vsel %vm1293, %v1273, 0.0
        %v1326 = vsel %vm1294, %v1270, 0.0
        %v1327 = vsel %vm1295, %v1271, 0.0
        %v1328 = vsel %vm1296, %v1272, 0.0
        %v1329 = vsel %vm1297, %v1273, 0.0
        %v1330 = vsel %vm1298, %v1270, 0.0
        %v1331 = vsel %vm1299, %v1271, 0.0
        %v1332 = vsel %vm1300, %v1272, 0.0
        %v1333 = vsel %vm1301, %v1273, 0.0
        %v1334 = vsel %vm1302, %v1270, 0.0
        %v1335 = vsel %vm1303, %v1271, 0.0
        %v1336 = vsel %vm1304, %v1272, 0.0
        %v1337 = vsel %vm1305, %v1273, 0.0
        %v1338 = vadd.f32 %v1306, 0.0
        %v1339 = vadd.f32 %v1307, 0.0
        %v1340 = vadd.f32 %v1308, 0.0
        %v1341 = vadd.f32 %v1309, 0.0
        %v1342 = vadd.f32 %v1310, 0.0
        %v1343 = vadd.f32 %v1311, 0.0
        %v1344 = vadd.f32 %v1312, 0.0
        %v1345 = vadd.f32 %v1313, 0.0
        %v1346 = vadd.f32 %v1314, 0.0
        %v1347 = vadd.f32 %v1315, 0.0
        %v1348 = vadd.f32 %v1316, 0.0
        %v1349 = vadd.f32 %v1317, 0.0
        %v1350 = vadd.f32 %v1318, 0.0
        %v1351 = vadd.f32 %v1319, 0.0
        %v1352 = vadd.f32 %v1320, 0.0
        %v1353 = vadd.f32 %v1321, 0.0
        %v1354 = vadd.f32 %v1322, 0.0
        %v1355 = vadd.f32 %v1323, 0.0
        %v1356 = vadd.f32 %v1324, 0.0
        %v1357 = vadd.f32 %v1325, 0.0
        %v1358 = vadd.f32 %v1326, 0.0
        %v1359 = vadd.f32 %v1327, 0.0
        %v1360 = vadd.f32 %v1328, 0.0
        %v1361 = vadd.f32 %v1329, 0.0
        %v1362 = vadd.f32 %v1330, 0.0
        %v1363 = vadd.f32 %v1331, 0.0
        %v1364 = vadd.f32 %v1332, 0.0
        %v1365 = vadd.f32 %v1333, 0.0
        %v1366 = vadd.f32 %v1334, 0.0
        %v1367 = vadd.f32 %v1335, 0.0
        %v1368 = vadd.f32 %v1336, 0.0
        %v1369 = vadd.f32 %v1337, 0.0
        %v1370 = vsel %vm1274, inf, %v1182
        %v1371 = vsel %vm1275, inf, %v1183
        %v1372 = vsel %vm1276, inf, %v1184
        %v1373 = vsel %vm1277, inf, %v1185
        %v1374 = vsel %vm1278, inf, %v1186
        %v1375 = vsel %vm1279, inf, %v1187
        %v1376 = vsel %vm1280, inf, %v1188
        %v1377 = vsel %vm1281, inf, %v1189
        %v1378 = vsel %vm1282, inf, %v1190
        %v1379 = vsel %vm1283, inf, %v1191
        %v1380 = vsel %vm1284, inf, %v1192
        %v1381 = vsel %vm1285, inf, %v1193
        %v1382 = vsel %vm1286, inf, %v1194
        %v1383 = vsel %vm1287, inf, %v1195
        %v1384 = vsel %vm1288, inf, %v1196
        %v1385 = vsel %vm1289, inf, %v1197
        %v1386 = vsel %vm1290, inf, %v1198
        %v1387 = vsel %vm1291, inf, %v1199
        %v1388 = vsel %vm1292, inf, %v1200
        %v1389 = vsel %vm1293, inf, %v1201
        %v1390 = vsel %vm1294, inf, %v1202
        %v1391 = vsel %vm1295, inf, %v1203
        %v1392 = vsel %vm1296, inf, %v1204
        %v1393 = vsel %vm1297, inf, %v1205
        %v1394 = vsel %vm1298, inf, %v1206
        %v1395 = vsel %vm1299, inf, %v1207
        %v1396 = vsel %vm1300, inf, %v1208
        %v1397 = vsel %vm1301, inf, %v1209
        %v1398 = vsel %vm1302, inf, %v1210
        %v1399 = vsel %vm1303, inf, %v1211
        %v1400 = vsel %vm1304, inf, %v1212
        %v1401 = vsel %vm1305, inf, %v1213
        %v1402 = vmin.f32 %v1370, %v1374
        %v1403 = vmin.f32 %v1402, %v1378
        %v1404 = vmin.f32 %v1403, %v1382
        %v1405 = vmin.f32 %v1404, %v1386
        %v1406 = vmin.f32 %v1405, %v1390
        %v1407 = vmin.f32 %v1406, %v1394
        %v1408 = vmin.f32 %v1407, %v1398
        %v1409 = vrot.slane %v1408, 4
        %v1410 = vmin.f32 %v1408, %v1409
        %v1411 = vrot.slane %v1410, 2
        %v1412 = vmin.f32 %v1410, %v1411
        %v1413 = vrot.slane %v1412, 1
        %v1414 = vmin.f32 %v1412, %v1413
        %v1415 = vmin.f32 %v1371, %v1375
        %v1416 = vmin.f32 %v1415, %v1379
        %v1417 = vmin.f32 %v1416, %v1383
        %v1418 = vmin.f32 %v1417, %v1387
        %v1419 = vmin.f32 %v1418, %v1391
        %v1420 = vmin.f32 %v1419, %v1395
        %v1421 = vmin.f32 %v1420, %v1399
        %v1422 = vrot.slane %v1421, 4
        %v1423 = vmin.f32 %v1421, %v1422
        %v1424 = vrot.slane %v1423, 2
        %v1425 = vmin.f32 %v1423, %v1424
        %v1426 = vrot.slane %v1425, 1
        %v1427 = vmin.f32 %v1425, %v1426
        %v1428 = vmin.f32 %v1372, %v1376
        %v1429 = vmin.f32 %v1428, %v1380
        %v1430 = vmin.f32 %v1429, %v1384
        %v1431 = vmin.f32 %v1430, %v1388
        %v1432 = vmin.f32 %v1431, %v1392
        %v1433 = vmin.f32 %v1432, %v1396
        %v1434 = vmin.f32 %v1433, %v1400
        %v1435 = vrot.slane %v1434, 4
        %v1436 = vmin.f32 %v1434, %v1435
        %v1437 = vrot.slane %v1436, 2
        %v1438 = vmin.f32 %v1436, %v1437
        %v1439 = vrot.slane %v1438, 1
        %v1440 = vmin.f32 %v1438, %v1439
        %v1441 = vmin.f32 %v1373, %v1377
        %v1442 = vmin.f32 %v1441, %v1381
        %v1443 = vmin.f32 %v1442, %v1385
        %v1444 = vmin.f32 %v1443, %v1389
        %v1445 = vmin.f32 %v1444, %v1393
        %v1446 = vmin.f32 %v1445, %v1397
        %v1447 = vmin.f32 %v1446, %v1401
        %v1448 = vrot.slane %v1447, 4
        %v1449 = vmin.f32 %v1447, %v1448
        %v1450 = vrot.slane %v1449, 2
        %v1451 = vmin.f32 %v1449, %v1450
        %v1452 = vrot.slane %v1451, 1
        %v1453 = vmin.f32 %v1451, %v1452
        %v1454 = vadd.f32 %v1414, 1e-08
        %v1455 = vadd.f32 %v1427, 1e-08
        %v1456 = vadd.f32 %v1440, 1e-08
        %v1457 = vadd.f32 %v1453, 1e-08
        %v1458 = vrcp.pop %v1454
        %v1459 = vrcp.pop %v1455
        %v1460 = vrcp.pop %v1456
        %v1461 = vrcp.pop %v1457
        %vm1462 = vcmp.eq.f32.partialorder %v1370, %v1414
        %vm1463 = vcmp.eq.f32.partialorder %v1371, %v1427
        %vm1464 = vcmp.eq.f32.partialorder %v1372, %v1440
        %vm1465 = vcmp.eq.f32.partialorder %v1373, %v1453
        %vm1466 = vcmp.eq.f32.partialorder %v1374, %v1414
        %vm1467 = vcmp.eq.f32.partialorder %v1375, %v1427
        %vm1468 = vcmp.eq.f32.partialorder %v1376, %v1440
        %vm1469 = vcmp.eq.f32.partialorder %v1377, %v1453
        %vm1470 = vcmp.eq.f32.partialorder %v1378, %v1414
        %vm1471 = vcmp.eq.f32.partialorder %v1379, %v1427
        %vm1472 = vcmp.eq.f32.partialorder %v1380, %v1440
        %vm1473 = vcmp.eq.f32.partialorder %v1381, %v1453
        %vm1474 = vcmp.eq.f32.partialorder %v1382, %v1414
        %vm1475 = vcmp.eq.f32.partialorder %v1383, %v1427
        %vm1476 = vcmp.eq.f32.partialorder %v1384, %v1440
        %vm1477 = vcmp.eq.f32.partialorder %v1385, %v1453
        %vm1478 = vcmp.eq.f32.partialorder %v1386, %v1414
        %vm1479 = vcmp.eq.f32.partialorder %v1387, %v1427
        %vm1480 = vcmp.eq.f32.partialorder %v1388, %v1440
        %vm1481 = vcmp.eq.f32.partialorder %v1389, %v1453
        %vm1482 = vcmp.eq.f32.partialorder %v1390, %v1414
        %vm1483 = vcmp.eq.f32.partialorder %v1391, %v1427
        %vm1484 = vcmp.eq.f32.partialorder %v1392, %v1440
        %vm1485 = vcmp.eq.f32.partialorder %v1393, %v1453
        %vm1486 = vcmp.eq.f32.partialorder %v1394, %v1414
        %vm1487 = vcmp.eq.f32.partialorder %v1395, %v1427
        %vm1488 = vcmp.eq.f32.partialorder %v1396, %v1440
        %vm1489 = vcmp.eq.f32.partialorder %v1397, %v1453
        %vm1490 = vcmp.eq.f32.partialorder %v1398, %v1414
        %vm1491 = vcmp.eq.f32.partialorder %v1399, %v1427
        %vm1492 = vcmp.eq.f32.partialorder %v1400, %v1440
        %vm1493 = vcmp.eq.f32.partialorder %v1401, %v1453
        %v1494 = vsel %vm1462, %v1458, 0.0
        %v1495 = vsel %vm1463, %v1459, 0.0
        %v1496 = vsel %vm1464, %v1460, 0.0
        %v1497 = vsel %vm1465, %v1461, 0.0
        %v1498 = vsel %vm1466, %v1458, 0.0
        %v1499 = vsel %vm1467, %v1459, 0.0
        %v1500 = vsel %vm1468, %v1460, 0.0
        %v1501 = vsel %vm1469, %v1461, 0.0
        %v1502 = vsel %vm1470, %v1458, 0.0
        %v1503 = vsel %vm1471, %v1459, 0.0
        %v1504 = vsel %vm1472, %v1460, 0.0
        %v1505 = vsel %vm1473, %v1461, 0.0
        %v1506 = vsel %vm1474, %v1458, 0.0
        %v1507 = vsel %vm1475, %v1459, 0.0
        %v1508 = vsel %vm1476, %v1460, 0.0
        %v1509 = vsel %vm1477, %v1461, 0.0
        %v1510 = vsel %vm1478, %v1458, 0.0
        %v1511 = vsel %vm1479, %v1459, 0.0
        %v1512 = vsel %vm1480, %v1460, 0.0
        %v1513 = vsel %vm1481, %v1461, 0.0
        %v1514 = vsel %vm1482, %v1458, 0.0
        %v1515 = vsel %vm1483, %v1459, 0.0
        %v1516 = vsel %vm1484, %v1460, 0.0
        %v1517 = vsel %vm1485, %v1461, 0.0
        %v1518 = vsel %vm1486, %v1458, 0.0
        %v1519 = vsel %vm1487, %v1459, 0.0
        %v1520 = vsel %vm1488, %v1460, 0.0
        %v1521 = vsel %vm1489, %v1461, 0.0
        %v1522 = vsel %vm1490, %v1458, 0.0
        %v1523 = vsel %vm1491, %v1459, 0.0
        %v1524 = vsel %vm1492, %v1460, 0.0
        %v1525 = vsel %vm1493, %v1461, 0.0
        %v1526 = vadd.f32 %v1338, %v1494
        %v1527 = vadd.f32 %v1339, %v1495
        %v1528 = vadd.f32 %v1340, %v1496
        %v1529 = vadd.f32 %v1341, %v1497
        %v1530 = vadd.f32 %v1342, %v1498
        %v1531 = vadd.f32 %v1343, %v1499
        %v1532 = vadd.f32 %v1344, %v1500
        %v1533 = vadd.f32 %v1345, %v1501
        %v1534 = vadd.f32 %v1346, %v1502
        %v1535 = vadd.f32 %v1347, %v1503
        %v1536 = vadd.f32 %v1348, %v1504
        %v1537 = vadd.f32 %v1349, %v1505
        %v1538 = vadd.f32 %v1350, %v1506
        %v1539 = vadd.f32 %v1351, %v1507
        %v1540 = vadd.f32 %v1352, %v1508
        %v1541 = vadd.f32 %v1353, %v1509
        %v1542 = vadd.f32 %v1354, %v1510
        %v1543 = vadd.f32 %v1355, %v1511
        %v1544 = vadd.f32 %v1356, %v1512
        %v1545 = vadd.f32 %v1357, %v1513
        %v1546 = vadd.f32 %v1358, %v1514
        %v1547 = vadd.f32 %v1359, %v1515
        %v1548 = vadd.f32 %v1360, %v1516
        %v1549 = vadd.f32 %v1361, %v1517
        %v1550 = vadd.f32 %v1362, %v1518
        %v1551 = vadd.f32 %v1363, %v1519
        %v1552 = vadd.f32 %v1364, %v1520
        %v1553 = vadd.f32 %v1365, %v1521
        %v1554 = vadd.f32 %v1366, %v1522
        %v1555 = vadd.f32 %v1367, %v1523
        %v1556 = vadd.f32 %v1368, %v1524
        %v1557 = vadd.f32 %v1369, %v1525
        %v1558 = vsel %vm1462, inf, %v1370
        %v1559 = vsel %vm1463, inf, %v1371
        %v1560 = vsel %vm1464, inf, %v1372
        %v1561 = vsel %vm1465, inf, %v1373
        %v1562 = vsel %vm1466, inf, %v1374
        %v1563 = vsel %vm1467, inf, %v1375
        %v1564 = vsel %vm1468, inf, %v1376
        %v1565 = vsel %vm1469, inf, %v1377
        %v1566 = vsel %vm1470, inf, %v1378
        %v1567 = vsel %vm1471, inf, %v1379
        %v1568 = vsel %vm1472, inf, %v1380
        %v1569 = vsel %vm1473, inf, %v1381
        %v1570 = vsel %vm1474, inf, %v1382
        %v1571 = vsel %vm1475, inf, %v1383
        %v1572 = vsel %vm1476, inf, %v1384
        %v1573 = vsel %vm1477, inf, %v1385
        %v1574 = vsel %vm1478, inf, %v1386
        %v1575 = vsel %vm1479, inf, %v1387
        %v1576 = vsel %vm1480, inf, %v1388
        %v1577 = vsel %vm1481, inf, %v1389
        %v1578 = vsel %vm1482, inf, %v1390
        %v1579 = vsel %vm1483, inf, %v1391
        %v1580 = vsel %vm1484, inf, %v1392
        %v1581 = vsel %vm1485, inf, %v1393
        %v1582 = vsel %vm1486, inf, %v1394
        %v1583 = vsel %vm1487, inf, %v1395
        %v1584 = vsel %vm1488, inf, %v1396
        %v1585 = vsel %vm1489, inf, %v1397
        %v1586 = vsel %vm1490, inf, %v1398
        %v1587 = vsel %vm1491, inf, %v1399
        %v1588 = vsel %vm1492, inf, %v1400
        %v1589 = vsel %vm1493, inf, %v1401
        %v1590 = vmin.f32 %v1558, %v1562
        %v1591 = vmin.f32 %v1590, %v1566
        %v1592 = vmin.f32 %v1591, %v1570
        %v1593 = vmin.f32 %v1592, %v1574
        %v1594 = vmin.f32 %v1593, %v1578
        %v1595 = vmin.f32 %v1594, %v1582
        %v1596 = vmin.f32 %v1595, %v1586
        %v1597 = vrot.slane %v1596, 4
        %v1598 = vmin.f32 %v1596, %v1597
        %v1599 = vrot.slane %v1598, 2
        %v1600 = vmin.f32 %v1598, %v1599
        %v1601 = vrot.slane %v1600, 1
        %v1602 = vmin.f32 %v1600, %v1601
        %v1603 = vmin.f32 %v1559, %v1563
        %v1604 = vmin.f32 %v1603, %v1567
        %v1605 = vmin.f32 %v1604, %v1571
        %v1606 = vmin.f32 %v1605, %v1575
        %v1607 = vmin.f32 %v1606, %v1579
        %v1608 = vmin.f32 %v1607, %v1583
        %v1609 = vmin.f32 %v1608, %v1587
        %v1610 = vrot.slane %v1609, 4
        %v1611 = vmin.f32 %v1609, %v1610
        %v1612 = vrot.slane %v1611, 2
        %v1613 = vmin.f32 %v1611, %v1612
        %v1614 = vrot.slane %v1613, 1
        %v1615 = vmin.f32 %v1613, %v1614
        %v1616 = vmin.f32 %v1560, %v1564
        %v1617 = vmin.f32 %v1616, %v1568
        %v1618 = vmin.f32 %v1617, %v1572
        %v1619 = vmin.f32 %v1618, %v1576
        %v1620 = vmin.f32 %v1619, %v1580
        %v1621 = vmin.f32 %v1620, %v1584
        %v1622 = vmin.f32 %v1621, %v1588
        %v1623 = vrot.slane %v1622, 4
        %v1624 = vmin.f32 %v1622, %v1623
        %v1625 = vrot.slane %v1624, 2
        %v1626 = vmin.f32 %v1624, %v1625
        %v1627 = vrot.slane %v1626, 1
        %v1628 = vmin.f32 %v1626, %v1627
        %v1629 = vmin.f32 %v1561, %v1565
        %v1630 = vmin.f32 %v1629, %v1569
        %v1631 = vmin.f32 %v1630, %v1573
        %v1632 = vmin.f32 %v1631, %v1577
        %v1633 = vmin.f32 %v1632, %v1581
        %v1634 = vmin.f32 %v1633, %v1585
        %v1635 = vmin.f32 %v1634, %v1589
        %v1636 = vrot.slane %v1635, 4
        %v1637 = vmin.f32 %v1635, %v1636
        %v1638 = vrot.slane %v1637, 2
        %v1639 = vmin.f32 %v1637, %v1638
        %v1640 = vrot.slane %v1639, 1
        %v1641 = vmin.f32 %v1639, %v1640
        %v1642 = vadd.f32 %v1602, 1e-08
        %v1643 = vadd.f32 %v1615, 1e-08
        %v1644 = vadd.f32 %v1628, 1e-08
        %v1645 = vadd.f32 %v1641, 1e-08
        %v1646 = vrcp.pop %v1642
        %v1647 = vrcp.pop %v1643
        %v1648 = vrcp.pop %v1644
        %v1649 = vrcp.pop %v1645
        %vm1650 = vcmp.eq.f32.partialorder %v1558, %v1602
        %vm1651 = vcmp.eq.f32.partialorder %v1559, %v1615
        %vm1652 = vcmp.eq.f32.partialorder %v1560, %v1628
        %vm1653 = vcmp.eq.f32.partialorder %v1561, %v1641
        %vm1654 = vcmp.eq.f32.partialorder %v1562, %v1602
        %vm1655 = vcmp.eq.f32.partialorder %v1563, %v1615
        %vm1656 = vcmp.eq.f32.partialorder %v1564, %v1628
        %vm1657 = vcmp.eq.f32.partialorder %v1565, %v1641
        %vm1658 = vcmp.eq.f32.partialorder %v1566, %v1602
        %vm1659 = vcmp.eq.f32.partialorder %v1567, %v1615
        %vm1660 = vcmp.eq.f32.partialorder %v1568, %v1628
        %vm1661 = vcmp.eq.f32.partialorder %v1569, %v1641
        %vm1662 = vcmp.eq.f32.partialorder %v1570, %v1602
        %vm1663 = vcmp.eq.f32.partialorder %v1571, %v1615
        %vm1664 = vcmp.eq.f32.partialorder %v1572, %v1628
        %vm1665 = vcmp.eq.f32.partialorder %v1573, %v1641
        %vm1666 = vcmp.eq.f32.partialorder %v1574, %v1602
        %vm1667 = vcmp.eq.f32.partialorder %v1575, %v1615
        %vm1668 = vcmp.eq.f32.partialorder %v1576, %v1628
        %vm1669 = vcmp.eq.f32.partialorder %v1577, %v1641
        %vm1670 = vcmp.eq.f32.partialorder %v1578, %v1602
        %vm1671 = vcmp.eq.f32.partialorder %v1579, %v1615
        %vm1672 = vcmp.eq.f32.partialorder %v1580, %v1628
        %vm1673 = vcmp.eq.f32.partialorder %v1581, %v1641
        %vm1674 = vcmp.eq.f32.partialorder %v1582, %v1602
        %vm1675 = vcmp.eq.f32.partialorder %v1583, %v1615
        %vm1676 = vcmp.eq.f32.partialorder %v1584, %v1628
        %vm1677 = vcmp.eq.f32.partialorder %v1585, %v1641
        %vm1678 = vcmp.eq.f32.partialorder %v1586, %v1602
        %vm1679 = vcmp.eq.f32.partialorder %v1587, %v1615
        %vm1680 = vcmp.eq.f32.partialorder %v1588, %v1628
        %vm1681 = vcmp.eq.f32.partialorder %v1589, %v1641
        %v1682 = vsel %vm1650, %v1646, 0.0
        %v1683 = vsel %vm1651, %v1647, 0.0
        %v1684 = vsel %vm1652, %v1648, 0.0
        %v1685 = vsel %vm1653, %v1649, 0.0
        %v1686 = vsel %vm1654, %v1646, 0.0
        %v1687 = vsel %vm1655, %v1647, 0.0
        %v1688 = vsel %vm1656, %v1648, 0.0
        %v1689 = vsel %vm1657, %v1649, 0.0
        %v1690 = vsel %vm1658, %v1646, 0.0
        %v1691 = vsel %vm1659, %v1647, 0.0
        %v1692 = vsel %vm1660, %v1648, 0.0
        %v1693 = vsel %vm1661, %v1649, 0.0
        %v1694 = vsel %vm1662, %v1646, 0.0
        %v1695 = vsel %vm1663, %v1647, 0.0
        %v1696 = vsel %vm1664, %v1648, 0.0
        %v1697 = vsel %vm1665, %v1649, 0.0
        %v1698 = vsel %vm1666, %v1646, 0.0
        %v1699 = vsel %vm1667, %v1647, 0.0
        %v1700 = vsel %vm1668, %v1648, 0.0
        %v1701 = vsel %vm1669, %v1649, 0.0
        %v1702 = vsel %vm1670, %v1646, 0.0
        %v1703 = vsel %vm1671, %v1647, 0.0
        %v1704 = vsel %vm1672, %v1648, 0.0
        %v1705 = vsel %vm1673, %v1649, 0.0
        %v1706 = vsel %vm1674, %v1646, 0.0
        %v1707 = vsel %vm1675, %v1647, 0.0
        %v1708 = vsel %vm1676, %v1648, 0.0
        %v1709 = vsel %vm1677, %v1649, 0.0
        %v1710 = vsel %vm1678, %v1646, 0.0
        %v1711 = vsel %vm1679, %v1647, 0.0
        %v1712 = vsel %vm1680, %v1648, 0.0
        %v1713 = vsel %vm1681, %v1649, 0.0
        %v1714 = vadd.f32 %v1526, %v1682
        %v1715 = vadd.f32 %v1527, %v1683
        %v1716 = vadd.f32 %v1528, %v1684
        %v1717 = vadd.f32 %v1529, %v1685
        %v1718 = vadd.f32 %v1530, %v1686
        %v1719 = vadd.f32 %v1531, %v1687
        %v1720 = vadd.f32 %v1532, %v1688
        %v1721 = vadd.f32 %v1533, %v1689
        %v1722 = vadd.f32 %v1534, %v1690
        %v1723 = vadd.f32 %v1535, %v1691
        %v1724 = vadd.f32 %v1536, %v1692
        %v1725 = vadd.f32 %v1537, %v1693
        %v1726 = vadd.f32 %v1538, %v1694
        %v1727 = vadd.f32 %v1539, %v1695
        %v1728 = vadd.f32 %v1540, %v1696
        %v1729 = vadd.f32 %v1541, %v1697
        %v1730 = vadd.f32 %v1542, %v1698
        %v1731 = vadd.f32 %v1543, %v1699
        %v1732 = vadd.f32 %v1544, %v1700
        %v1733 = vadd.f32 %v1545, %v1701
        %v1734 = vadd.f32 %v1546, %v1702
        %v1735 = vadd.f32 %v1547, %v1703
        %v1736 = vadd.f32 %v1548, %v1704
        %v1737 = vadd.f32 %v1549, %v1705
        %v1738 = vadd.f32 %v1550, %v1706
        %v1739 = vadd.f32 %v1551, %v1707
        %v1740 = vadd.f32 %v1552, %v1708
        %v1741 = vadd.f32 %v1553, %v1709
        %v1742 = vadd.f32 %v1554, %v1710
        %v1743 = vadd.f32 %v1555, %v1711
        %v1744 = vadd.f32 %v1556, %v1712
        %v1745 = vadd.f32 %v1557, %v1713
        %v1746 = vsel %vm1650, inf, %v1558
        %v1747 = vsel %vm1651, inf, %v1559
        %v1748 = vsel %vm1652, inf, %v1560
        %v1749 = vsel %vm1653, inf, %v1561
        %v1750 = vsel %vm1654, inf, %v1562
        %v1751 = vsel %vm1655, inf, %v1563
        %v1752 = vsel %vm1656, inf, %v1564
        %v1753 = vsel %vm1657, inf, %v1565
        %v1754 = vsel %vm1658, inf, %v1566
        %v1755 = vsel %vm1659, inf, %v1567
        %v1756 = vsel %vm1660, inf, %v1568
        %v1757 = vsel %vm1661, inf, %v1569
        %v1758 = vsel %vm1662, inf, %v1570
        %v1759 = vsel %vm1663, inf, %v1571
        %v1760 = vsel %vm1664, inf, %v1572
        %v1761 = vsel %vm1665, inf, %v1573
        %v1762 = vsel %vm1666, inf, %v1574
        %v1763 = vsel %vm1667, inf, %v1575
        %v1764 = vsel %vm1668, inf, %v1576
        %v1765 = vsel %vm1669, inf, %v1577
        %v1766 = vsel %vm1670, inf, %v1578
        %v1767 = vsel %vm1671, inf, %v1579
        %v1768 = vsel %vm1672, inf, %v1580
        %v1769 = vsel %vm1673, inf, %v1581
        %v1770 = vsel %vm1674, inf, %v1582
        %v1771 = vsel %vm1675, inf, %v1583
        %v1772 = vsel %vm1676, inf, %v1584
        %v1773 = vsel %vm1677, inf, %v1585
        %v1774 = vsel %vm1678, inf, %v1586
        %v1775 = vsel %vm1679, inf, %v1587
        %v1776 = vsel %vm1680, inf, %v1588
        %v1777 = vsel %vm1681, inf, %v1589
        %v1778 = vmin.f32 %v1746, %v1750
        %v1779 = vmin.f32 %v1778, %v1754
        %v1780 = vmin.f32 %v1779, %v1758
        %v1781 = vmin.f32 %v1780, %v1762
        %v1782 = vmin.f32 %v1781, %v1766
        %v1783 = vmin.f32 %v1782, %v1770
        %v1784 = vmin.f32 %v1783, %v1774
        %v1785 = vrot.slane %v1784, 4
        %v1786 = vmin.f32 %v1784, %v1785
        %v1787 = vrot.slane %v1786, 2
        %v1788 = vmin.f32 %v1786, %v1787
        %v1789 = vrot.slane %v1788, 1
        %v1790 = vmin.f32 %v1788, %v1789
        %v1791 = vmin.f32 %v1747, %v1751
        %v1792 = vmin.f32 %v1791, %v1755
        %v1793 = vmin.f32 %v1792, %v1759
        %v1794 = vmin.f32 %v1793, %v1763
        %v1795 = vmin.f32 %v1794, %v1767
        %v1796 = vmin.f32 %v1795, %v1771
        %v1797 = vmin.f32 %v1796, %v1775
        %v1798 = vrot.slane %v1797, 4
        %v1799 = vmin.f32 %v1797, %v1798
        %v1800 = vrot.slane %v1799, 2
        %v1801 = vmin.f32 %v1799, %v1800
        %v1802 = vrot.slane %v1801, 1
        %v1803 = vmin.f32 %v1801, %v1802
        %v1804 = vmin.f32 %v1748, %v1752
        %v1805 = vmin.f32 %v1804, %v1756
        %v1806 = vmin.f32 %v1805, %v1760
        %v1807 = vmin.f32 %v1806, %v1764
        %v1808 = vmin.f32 %v1807, %v1768
        %v1809 = vmin.f32 %v1808, %v1772
        %v1810 = vmin.f32 %v1809, %v1776
        %v1811 = vrot.slane %v1810, 4
        %v1812 = vmin.f32 %v1810, %v1811
        %v1813 = vrot.slane %v1812, 2
        %v1814 = vmin.f32 %v1812, %v1813
        %v1815 = vrot.slane %v1814, 1
        %v1816 = vmin.f32 %v1814, %v1815
        %v1817 = vmin.f32 %v1749, %v1753
        %v1818 = vmin.f32 %v1817, %v1757
        %v1819 = vmin.f32 %v1818, %v1761
        %v1820 = vmin.f32 %v1819, %v1765
        %v1821 = vmin.f32 %v1820, %v1769
        %v1822 = vmin.f32 %v1821, %v1773
        %v1823 = vmin.f32 %v1822, %v1777
        %v1824 = vrot.slane %v1823, 4
        %v1825 = vmin.f32 %v1823, %v1824
        %v1826 = vrot.slane %v1825, 2
        %v1827 = vmin.f32 %v1825, %v1826
        %v1828 = vrot.slane %v1827, 1
        %v1829 = vmin.f32 %v1827, %v1828
        %v1830 = vadd.f32 %v1790, 1e-08
        %v1831 = vadd.f32 %v1803, 1e-08
        %v1832 = vadd.f32 %v1816, 1e-08
        %v1833 = vadd.f32 %v1829, 1e-08
        %v1834 = vrcp.pop %v1830
        %v1835 = vrcp.pop %v1831
        %v1836 = vrcp.pop %v1832
        %v1837 = vrcp.pop %v1833
        %vm1838 = vcmp.eq.f32.partialorder %v1746, %v1790
        %vm1839 = vcmp.eq.f32.partialorder %v1747, %v1803
        %vm1840 = vcmp.eq.f32.partialorder %v1748, %v1816
        %vm1841 = vcmp.eq.f32.partialorder %v1749, %v1829
        %vm1842 = vcmp.eq.f32.partialorder %v1750, %v1790
        %vm1843 = vcmp.eq.f32.partialorder %v1751, %v1803
        %vm1844 = vcmp.eq.f32.partialorder %v1752, %v1816
        %vm1845 = vcmp.eq.f32.partialorder %v1753, %v1829
        %vm1846 = vcmp.eq.f32.partialorder %v1754, %v1790
        %vm1847 = vcmp.eq.f32.partialorder %v1755, %v1803
        %vm1848 = vcmp.eq.f32.partialorder %v1756, %v1816
        %vm1849 = vcmp.eq.f32.partialorder %v1757, %v1829
        %vm1850 = vcmp.eq.f32.partialorder %v1758, %v1790
        %vm1851 = vcmp.eq.f32.partialorder %v1759, %v1803
        %vm1852 = vcmp.eq.f32.partialorder %v1760, %v1816
        %vm1853 = vcmp.eq.f32.partialorder %v1761, %v1829
        %vm1854 = vcmp.eq.f32.partialorder %v1762, %v1790
        %vm1855 = vcmp.eq.f32.partialorder %v1763, %v1803
        %vm1856 = vcmp.eq.f32.partialorder %v1764, %v1816
        %vm1857 = vcmp.eq.f32.partialorder %v1765, %v1829
        %vm1858 = vcmp.eq.f32.partialorder %v1766, %v1790
        %vm1859 = vcmp.eq.f32.partialorder %v1767, %v1803
        %vm1860 = vcmp.eq.f32.partialorder %v1768, %v1816
        %vm1861 = vcmp.eq.f32.partialorder %v1769, %v1829
        %vm1862 = vcmp.eq.f32.partialorder %v1770, %v1790
        %vm1863 = vcmp.eq.f32.partialorder %v1771, %v1803
        %vm1864 = vcmp.eq.f32.partialorder %v1772, %v1816
        %vm1865 = vcmp.eq.f32.partialorder %v1773, %v1829
        %vm1866 = vcmp.eq.f32.partialorder %v1774, %v1790
        %vm1867 = vcmp.eq.f32.partialorder %v1775, %v1803
        %vm1868 = vcmp.eq.f32.partialorder %v1776, %v1816
        %vm1869 = vcmp.eq.f32.partialorder %v1777, %v1829
        %v1870 = vsel %vm1838, %v1834, 0.0
        %v1871 = vsel %vm1839, %v1835, 0.0
        %v1872 = vsel %vm1840, %v1836, 0.0
        %v1873 = vsel %vm1841, %v1837, 0.0
        %v1874 = vsel %vm1842, %v1834, 0.0
        %v1875 = vsel %vm1843, %v1835, 0.0
        %v1876 = vsel %vm1844, %v1836, 0.0
        %v1877 = vsel %vm1845, %v1837, 0.0
        %v1878 = vsel %vm1846, %v1834, 0.0
        %v1879 = vsel %vm1847, %v1835, 0.0
        %v1880 = vsel %vm1848, %v1836, 0.0
        %v1881 = vsel %vm1849, %v1837, 0.0
        %v1882 = vsel %vm1850, %v1834, 0.0
        %v1883 = vsel %vm1851, %v1835, 0.0
        %v1884 = vsel %vm1852, %v1836, 0.0
        %v1885 = vsel %vm1853, %v1837, 0.0
        %v1886 = vsel %vm1854, %v1834, 0.0
        %v1887 = vsel %vm1855, %v1835, 0.0
        %v1888 = vsel %vm1856, %v1836, 0.0
        %v1889 = vsel %vm1857, %v1837, 0.0
        %v1890 = vsel %vm1858, %v1834, 0.0
        %v1891 = vsel %vm1859, %v1835, 0.0
        %v1892 = vsel %vm1860, %v1836, 0.0
        %v1893 = vsel %vm1861, %v1837, 0.0
        %v1894 = vsel %vm1862, %v1834, 0.0
        %v1895 = vsel %vm1863, %v1835, 0.0
        %v1896 = vsel %vm1864, %v1836, 0.0
        %v1897 = vsel %vm1865, %v1837, 0.0
        %v1898 = vsel %vm1866, %v1834, 0.0
        %v1899 = vsel %vm1867, %v1835, 0.0
        %v1900 = vsel %vm1868, %v1836, 0.0
        %v1901 = vsel %vm1869, %v1837, 0.0
        %v1902 = vadd.f32 %v1714, %v1870
        %v1903 = vadd.f32 %v1715, %v1871
        %v1904 = vadd.f32 %v1716, %v1872
        %v1905 = vadd.f32 %v1717, %v1873
        %v1906 = vadd.f32 %v1718, %v1874
        %v1907 = vadd.f32 %v1719, %v1875
        %v1908 = vadd.f32 %v1720, %v1876
        %v1909 = vadd.f32 %v1721, %v1877
        %v1910 = vadd.f32 %v1722, %v1878
        %v1911 = vadd.f32 %v1723, %v1879
        %v1912 = vadd.f32 %v1724, %v1880
        %v1913 = vadd.f32 %v1725, %v1881
        %v1914 = vadd.f32 %v1726, %v1882
        %v1915 = vadd.f32 %v1727, %v1883
        %v1916 = vadd.f32 %v1728, %v1884
        %v1917 = vadd.f32 %v1729, %v1885
        %v1918 = vadd.f32 %v1730, %v1886
        %v1919 = vadd.f32 %v1731, %v1887
        %v1920 = vadd.f32 %v1732, %v1888
        %v1921 = vadd.f32 %v1733, %v1889
        %v1922 = vadd.f32 %v1734, %v1890
        %v1923 = vadd.f32 %v1735, %v1891
        %v1924 = vadd.f32 %v1736, %v1892
        %v1925 = vadd.f32 %v1737, %v1893
        %v1926 = vadd.f32 %v1738, %v1894
        %v1927 = vadd.f32 %v1739, %v1895
        %v1928 = vadd.f32 %v1740, %v1896
        %v1929 = vadd.f32 %v1741, %v1897
        %v1930 = vadd.f32 %v1742, %v1898
        %v1931 = vadd.f32 %v1743, %v1899
        %v1932 = vadd.f32 %v1744, %v1900
        %v1933 = vadd.f32 %v1745, %v1901
        %v1934 = vpack.c.bf16 %v1906, %v1902
        %v1935 = vpack.c.bf16 %v1907, %v1903
        %v1936 = vpack.c.bf16 %v1908, %v1904
        %v1937 = vpack.c.bf16 %v1909, %v1905
        %v1938 = vpack.c.bf16 %v1914, %v1910
        %v1939 = vpack.c.bf16 %v1915, %v1911
        %v1940 = vpack.c.bf16 %v1916, %v1912
        %v1941 = vpack.c.bf16 %v1917, %v1913
        %v1942 = vpack.c.bf16 %v1922, %v1918
        %v1943 = vpack.c.bf16 %v1923, %v1919
        %v1944 = vpack.c.bf16 %v1924, %v1920
        %v1945 = vpack.c.bf16 %v1925, %v1921
        %v1946 = vpack.c.bf16 %v1930, %v1926
        %v1947 = vpack.c.bf16 %v1931, %v1927
        %v1948 = vpack.c.bf16 %v1932, %v1928
        %v1949 = vpack.c.bf16 %v1933, %v1929
        %v1953 = vunpack.c.l.b16 %v758
        %v1954 = vunpack.c.l.b16 %v759
        %v1955 = vunpack.c.l.b16 %v760
        %v1956 = vpack.c.b16 %v1954, %v1953
        %v1957 = vpack.c.b16 %v1955, %v1955
        %vm1958 = vcmask 523264
        %v1960 = vsel %vm1958, %v1956, 0
        %v1963 = vsel %vm1958, %v1957, 0
        %1965 = vmatprep.subr.bf16.mxu0 %v1935
        %1966 = vmatpush1.bf16.msra.mxu0 %v1934
        %1967 = vmatprep.subr.bf16.mxu0 %v1939
        %1968 = vmatpush1.bf16.msra.mxu0 %v1938
        %1969 = vmatprep.subr.bf16.mxu0 %v1943
        %1970 = vmatpush1.bf16.msra.mxu0 %v1942
        %1971 = vmatprep.subr.bf16.mxu0 %v1947
        %1972 = vmatpush1.bf16.msra.mxu0 %v1946
        %1973 = vmatprep.subr.bf16.mxu0 0
        %1974 = vmatpush1.bf16.msra.mxu0 0
        %1975 = vmatprep.subr.bf16.mxu0 0
        %1976 = vmatpush1.bf16.msra.mxu0 0
        %1977 = vmatprep.subr.bf16.mxu0 0
        %1978 = vmatpush1.bf16.msra.mxu0 0
        %1979 = vmatprep.subr.bf16.mxu0 0
        %1980 = vmatpush1.bf16.msra.mxu0 0
        %1981 = vmatprep.subr.bf16.mxu0 0
        %1982 = vmatpush1.bf16.msra.mxu0 0
        %1983 = vmatprep.subr.bf16.mxu0 0
        %1984 = vmatpush1.bf16.msra.mxu0 0
        %1985 = vmatprep.subr.bf16.mxu0 0
        %1986 = vmatpush1.bf16.msra.mxu0 0
        %1987 = vmatprep.subr.bf16.mxu0 0
        %1988 = vmatpush1.bf16.msra.mxu0 0
        %1989 = vmatprep.subr.bf16.mxu0 0
        %1990 = vmatpush1.bf16.msra.mxu0 0
        %1991 = vmatprep.subr.bf16.mxu0 0
        %1992 = vmatpush1.bf16.msra.mxu0 0
        %1993 = vmatprep.subr.bf16.mxu0 0
        %1994 = vmatpush1.bf16.msra.mxu0 0
        %1995 = vmatprep.subr.bf16.mxu0 0
        %1996 = vmatpush1.bf16.msra.mxu0 0
        %1997 = vmatprep.mubr.bf16.mxu0 0
        %1998 = vmatmul.mubr.bf16.gmra.mrb[0].mxu0 %v1960
        %v1999 = vpop.f32.mrb[0].mxu0
        %v2000 = vadd.f32 0.0, %v1999
        %v2001 = vpop.f32.mrb[0].mxu0
        %v2002 = vadd.f32 0.0, %v2001
        %v2003 = vpop.f32.mrb[0].mxu0
        %v2004 = vadd.f32 0.0, %v2003
        %v2005 = vpop.f32.mrb[0].mxu0
        %v2006 = vadd.f32 0.0, %v2005
        %2007 = vmatprep.mubr.bf16.mxu0 0
        %2008 = vmatmul.mubr.bf16.gmra.mrb[0].mxu0 %v1963
        %v2009 = vpop.f32.mrb[0].mxu0
        %v2010 = vadd.f32 0.0, %v2009
        %v2011 = vpop.f32.mrb[0].mxu0
        %v2012 = vadd.f32 0.0, %v2011
        %v2013 = vpop.f32.mrb[0].mxu0
        %v2014 = vpop.f32.mrb[0].mxu0
        %2015 = vdwg.mxu0
        %2016 = vmatprep.subr.bf16.mxu0 %v1937
        %2017 = vmatpush1.bf16.msra.mxu0 %v1936
        %2018 = vmatprep.subr.bf16.mxu0 %v1941
        %2019 = vmatpush1.bf16.msra.mxu0 %v1940
        %2020 = vmatprep.subr.bf16.mxu0 %v1945
        %2021 = vmatpush1.bf16.msra.mxu0 %v1944
        %2022 = vmatprep.subr.bf16.mxu0 %v1949
        %2023 = vmatpush1.bf16.msra.mxu0 %v1948
        %2024 = vmatprep.subr.bf16.mxu0 0
        %2025 = vmatpush1.bf16.msra.mxu0 0
        %2026 = vmatprep.subr.bf16.mxu0 0
        %2027 = vmatpush1.bf16.msra.mxu0 0
        %2028 = vmatprep.subr.bf16.mxu0 0
        %2029 = vmatpush1.bf16.msra.mxu0 0
        %2030 = vmatprep.subr.bf16.mxu0 0
        %2031 = vmatpush1.bf16.msra.mxu0 0
        %2032 = vmatprep.subr.bf16.mxu0 0
        %2033 = vmatpush1.bf16.msra.mxu0 0
        %2034 = vmatprep.subr.bf16.mxu0 0
        %2035 = vmatpush1.bf16.msra.mxu0 0
        %2036 = vmatprep.subr.bf16.mxu0 0
        %2037 = vmatpush1.bf16.msra.mxu0 0
        %2038 = vmatprep.subr.bf16.mxu0 0
        %2039 = vmatpush1.bf16.msra.mxu0 0
        %2040 = vmatprep.subr.bf16.mxu0 0
        %2041 = vmatpush1.bf16.msra.mxu0 0
        %2042 = vmatprep.subr.bf16.mxu0 0
        %2043 = vmatpush1.bf16.msra.mxu0 0
        %2044 = vmatprep.subr.bf16.mxu0 0
        %2045 = vmatpush1.bf16.msra.mxu0 0
        %2046 = vmatprep.subr.bf16.mxu0 0
        %2047 = vmatpush1.bf16.msra.mxu0 0
        %2048 = vmatprep.mubr.bf16.mxu0 0
        %2049 = vmatmul.mubr.bf16.gmra.mrb[0].mxu0 %v1960
        %v2050 = vpop.f32.mrb[0].mxu0
        %v2051 = vadd.f32 0.0, %v2050
        %v2052 = vpop.f32.mrb[0].mxu0
        %v2053 = vadd.f32 0.0, %v2052
        %v2054 = vpop.f32.mrb[0].mxu0
        %v2055 = vadd.f32 0.0, %v2054
        %v2056 = vpop.f32.mrb[0].mxu0
        %v2057 = vadd.f32 0.0, %v2056
        %2058 = vmatprep.mubr.bf16.mxu0 0
        %2059 = vmatmul.mubr.bf16.gmra.mrb[0].mxu0 %v1963
        %v2060 = vpop.f32.mrb[0].mxu0
        %v2061 = vadd.f32 0.0, %v2060
        %v2062 = vpop.f32.mrb[0].mxu0
        %v2063 = vadd.f32 0.0, %v2062
        %v2064 = vpop.f32.mrb[0].mxu0
        %v2065 = vpop.f32.mrb[0].mxu0
        %2066 = vdwg.mxu0
        %v2067 = vrcp.pop %v2010
        %v2068 = vrcp.pop %v2012
        %v2069 = vrcp.pop %v2061
        %v2070 = vrcp.pop %v2063
        %v2071 = vlaneseq
        %v2072 = vshrl.u32 %v2071, 7
        %v2073 = vsub.s32 0, %v2072
        %v2074 = vrot.slane %v2067, %v2073
        %v2075 = vlaneseq
        %v2076 = vshrl.u32 %v2075, 7
        %v2077 = vsub.s32 0, %v2076
        %v2078 = vrot.slane %v2068, %v2077
        %v2079 = vlaneseq
        %v2080 = vshrl.u32 %v2079, 7
        %v2081 = vsub.s32 0, %v2080
        %v2082 = vrot.slane %v2069, %v2081
        %v2083 = vlaneseq
        %v2084 = vshrl.u32 %v2083, 7
        %v2085 = vsub.s32 0, %v2084
        %v2086 = vrot.slane %v2070, %v2085
        %v2087 = vmul.f32 %v2000, %v2074
        %v2088 = vmul.f32 %v2002, %v2078
        %v2089 = vmul.f32 %v2051, %v2082
        %v2090 = vmul.f32 %v2053, %v2086
        %v2091 = vmul.f32 %v2004, %v2074
        %v2092 = vmul.f32 %v2006, %v2078
        %v2093 = vmul.f32 %v2055, %v2082
        %v2094 = vmul.f32 %v2057, %v2086
        %v2095 = vunpack.c.l.bf16 %v754
        %v2096 = vunpack.c.h.bf16 %v754
        %v2097 = vunpack.c.l.bf16 %v755
        %v2098 = vunpack.c.h.bf16 %v755
        %v2099 = vunpack.c.l.bf16 %v756
        %v2100 = vunpack.c.h.bf16 %v756
        %v2101 = vunpack.c.l.bf16 %v757
        %v2102 = vunpack.c.h.bf16 %v757
        %v2103 = vpack.c.bf16 %v2099, %v2095
        %v2104 = vpack.c.bf16 %v2100, %v2096
        %v2105 = vpack.c.bf16 %v2101, %v2097
        %v2106 = vpack.c.bf16 %v2102, %v2098
        %v2107 = vpack.c.bf16 %v2091, %v2087
        %v2108 = vpack.c.bf16 %v2092, %v2088
        %v2109 = vpack.c.bf16 %v2093, %v2089
        %v2110 = vpack.c.bf16 %v2094, %v2090
        %v2111 = vld [vmem:[%s6] sm:$0xf]
        %v2112 = vld [vmem:[%s7] sm:$0xff]
        %2114 = vset.pattern.permute.xlu0 0
        %2115 = vperm.xlu0 %2114, %v2112
        %v2116 = vpop.permute.xlu0 %2115
        %vm2118 = vcmask 261120
        %v2120 = vsel %vm2118, %v2111, 0
        %2122 = vmatprep.subr.bf16.mxu0 %v2104
        %2123 = vmatpush1.bf16.msra.mxu0 %v2103
        %2124 = vmatprep.subr.bf16.mxu0 %v2108
        %2125 = vmatpush1.bf16.msra.mxu0 %v2107
        %2126 = vmatprep.subr.bf16.mxu0 0
        %2127 = vmatpush1.bf16.msra.mxu0 0
        %2128 = vmatprep.subr.bf16.mxu0 0
        %2129 = vmatpush1.bf16.msra.mxu0 0
        %2130 = vmatprep.subr.bf16.mxu0 0
        %2131 = vmatpush1.bf16.msra.mxu0 0
        %2132 = vmatprep.subr.bf16.mxu0 0
        %2133 = vmatpush1.bf16.msra.mxu0 0
        %2134 = vmatprep.subr.bf16.mxu0 0
        %2135 = vmatpush1.bf16.msra.mxu0 0
        %2136 = vmatprep.subr.bf16.mxu0 0
        %2137 = vmatpush1.bf16.msra.mxu0 0
        %2138 = vmatprep.subr.bf16.mxu0 0
        %2139 = vmatpush1.bf16.msra.mxu0 0
        %2140 = vmatprep.subr.bf16.mxu0 0
        %2141 = vmatpush1.bf16.msra.mxu0 0
        %2142 = vmatprep.subr.bf16.mxu0 0
        %2143 = vmatpush1.bf16.msra.mxu0 0
        %2144 = vmatprep.subr.bf16.mxu0 0
        %2145 = vmatpush1.bf16.msra.mxu0 0
        %2146 = vmatprep.subr.bf16.mxu0 0
        %2147 = vmatpush1.bf16.msra.mxu0 0
        %2148 = vmatprep.subr.bf16.mxu0 0
        %2149 = vmatpush1.bf16.msra.mxu0 0
        %2150 = vmatprep.subr.bf16.mxu0 0
        %2151 = vmatpush1.bf16.msra.mxu0 0
        %2152 = vmatprep.subr.bf16.mxu0 0
        %2153 = vmatpush1.bf16.msra.mxu0 0
        %2154 = vmatprep.mubr.bf16.mxu0 0
        %2155 = vmatmul.mubr.bf16.gmra.mrb[0].mxu0 %v2120
        %v2156 = vpop.f32.mrb[0].mxu0
        %v2157 = vadd.f32 %v2116, %v2156
        %v2158 = vpop.f32.mrb[0].mxu0
        %v2159 = vadd.f32 %v2116, %v2158
        %v2160 = vpop.f32.mrb[0].mxu0
        %v2161 = vpop.f32.mrb[0].mxu0
        %2162 = vdwg.mxu0
        %2163 = vmatprep.subr.bf16.mxu0 %v2106
        %2164 = vmatpush1.bf16.msra.mxu0 %v2105
        %2165 = vmatprep.subr.bf16.mxu0 %v2110
        %2166 = vmatpush1.bf16.msra.mxu0 %v2109
        %2167 = vmatprep.subr.bf16.mxu0 0
        %2168 = vmatpush1.bf16.msra.mxu0 0
        %2169 = vmatprep.subr.bf16.mxu0 0
        %2170 = vmatpush1.bf16.msra.mxu0 0
        %2171 = vmatprep.subr.bf16.mxu0 0
        %2172 = vmatpush1.bf16.msra.mxu0 0
        %2173 = vmatprep.subr.bf16.mxu0 0
        %2174 = vmatpush1.bf16.msra.mxu0 0
        %2175 = vmatprep.subr.bf16.mxu0 0
        %2176 = vmatpush1.bf16.msra.mxu0 0
        %2177 = vmatprep.subr.bf16.mxu0 0
        %2178 = vmatpush1.bf16.msra.mxu0 0
        %2179 = vmatprep.subr.bf16.mxu0 0
        %2180 = vmatpush1.bf16.msra.mxu0 0
        %2181 = vmatprep.subr.bf16.mxu0 0
        %2182 = vmatpush1.bf16.msra.mxu0 0
        %2183 = vmatprep.subr.bf16.mxu0 0
        %2184 = vmatpush1.bf16.msra.mxu0 0
        %2185 = vmatprep.subr.bf16.mxu0 0
        %2186 = vmatpush1.bf16.msra.mxu0 0
        %2187 = vmatprep.subr.bf16.mxu0 0
        %2188 = vmatpush1.bf16.msra.mxu0 0
        %2189 = vmatprep.subr.bf16.mxu0 0
        %2190 = vmatpush1.bf16.msra.mxu0 0
        %2191 = vmatprep.subr.bf16.mxu0 0
        %2192 = vmatpush1.bf16.msra.mxu0 0
        %2193 = vmatprep.subr.bf16.mxu0 0
        %2194 = vmatpush1.bf16.msra.mxu0 0
        %2195 = vmatprep.mubr.bf16.mxu0 0
        %2196 = vmatmul.mubr.bf16.gmra.mrb[0].mxu0 %v2120
        %v2197 = vpop.f32.mrb[0].mxu0
        %v2198 = vadd.f32 %v2116, %v2197
        %v2199 = vpop.f32.mrb[0].mxu0
        %v2200 = vadd.f32 %v2116, %v2199
        %v2201 = vpop.f32.mrb[0].mxu0
        %v2202 = vpop.f32.mrb[0].mxu0
        %2203 = vdwg.mxu0
        %v2204 = vmax.f32 %v2157, 0.0
        %v2205 = vmax.f32 %v2159, 0.0
        %v2206 = vmax.f32 %v2198, 0.0
        %v2207 = vmax.f32 %v2200, 0.0
        %v2208 = vld [vmem:[%s8] sm:$0xf]
        %v2209 = vld [vmem:[%s8 + $0x4] sm:$0xf]
        %v2210 = vld [vmem:[%s8 + $0x8] sm:$0xf]
        %v2211 = vld [vmem:[%s8 + $0xc] sm:$0xf]
        %v2212 = vpack.c.bf16 %v2204, %v2204
        %v2213 = vpack.c.bf16 %v2205, %v2205
        %v2214 = vpack.c.bf16 %v2206, %v2206
        %v2215 = vpack.c.bf16 %v2207, %v2207
        %v2216 = vld [vmem:[%s9] sm:$0xff]
        %v2217 = vld [vmem:[%s9 + $0x8] sm:$0xff]
        %v2218 = vld [vmem:[%s9 + $0x10] sm:$0xff]
        %v2219 = vld [vmem:[%s9 + $0x18] sm:$0xff]
        %2221 = vset.pattern.permute.xlu0 0
        %2222 = vperm.xlu0 %2221, %v2216
        %v2223 = vpop.permute.xlu0 %2222
        %2226 = vset.pattern.permute.xlu0 0
        %2227 = vperm.xlu0 %2226, %v2217
        %v2228 = vpop.permute.xlu0 %2227
        %2231 = vset.pattern.permute.xlu0 0
        %2232 = vperm.xlu0 %2231, %v2218
        %v2233 = vpop.permute.xlu0 %2232
        %2236 = vset.pattern.permute.xlu0 0
        %2237 = vperm.xlu0 %2236, %v2219
        %v2238 = vpop.permute.xlu0 %2237
        %v2244 = vunpack.c.l.b16 %v2208
        %v2245 = vunpack.c.l.b16 %v2209
        %v2246 = vunpack.c.l.b16 %v2210
        %v2247 = vunpack.c.l.b16 %v2211
        %v2248 = vpack.c.b16 %v2245, %v2244
        %v2249 = vpack.c.b16 %v2247, %v2246
        %vm2250 = vcmask 64512
        %v2252 = vsel %vm2250, %v2248, 0
        %v2255 = vsel %vm2250, %v2249, 0
        %vm2257 = vcmask 1043456
        %v2259 = vsel %vm2257, %v2212, 0
        %v2262 = vsel %vm2257, %v2213, 0
        %v2265 = vsel %vm2257, %v2214, 0
        %v2268 = vsel %vm2257, %v2215, 0
        %2270 = vmatprep.subr.bf16.mxu0 %v2262
        %2271 = vmatpush1.bf16.msra.mxu0 %v2259
        %2272 = vmatprep.subr.bf16.mxu0 0
        %2273 = vmatpush1.bf16.msra.mxu0 0
        %2274 = vmatprep.subr.bf16.mxu0 0
        %2275 = vmatpush1.bf16.msra.mxu0 0
        %2276 = vmatprep.subr.bf16.mxu0 0
        %2277 = vmatpush1.bf16.msra.mxu0 0
        %2278 = vmatprep.subr.bf16.mxu0 0
        %2279 = vmatpush1.bf16.msra.mxu0 0
        %2280 = vmatprep.subr.bf16.mxu0 0
        %2281 = vmatpush1.bf16.msra.mxu0 0
        %2282 = vmatprep.subr.bf16.mxu0 0
        %2283 = vmatpush1.bf16.msra.mxu0 0
        %2284 = vmatprep.subr.bf16.mxu0 0
        %2285 = vmatpush1.bf16.msra.mxu0 0
        %2286 = vmatprep.subr.bf16.mxu0 0
        %2287 = vmatpush1.bf16.msra.mxu0 0
        %2288 = vmatprep.subr.bf16.mxu0 0
        %2289 = vmatpush1.bf16.msra.mxu0 0
        %2290 = vmatprep.subr.bf16.mxu0 0
        %2291 = vmatpush1.bf16.msra.mxu0 0
        %2292 = vmatprep.subr.bf16.mxu0 0
        %2293 = vmatpush1.bf16.msra.mxu0 0
        %2294 = vmatprep.subr.bf16.mxu0 0
        %2295 = vmatpush1.bf16.msra.mxu0 0
        %2296 = vmatprep.subr.bf16.mxu0 0
        %2297 = vmatpush1.bf16.msra.mxu0 0
        %2298 = vmatprep.subr.bf16.mxu0 0
        %2299 = vmatpush1.bf16.msra.mxu0 0
        %2300 = vmatprep.subr.bf16.mxu0 0
        %2301 = vmatpush1.bf16.msra.mxu0 0
        %2302 = vmatprep.mubr.bf16.mxu0 0
        %2303 = vmatmul.mubr.bf16.gmra.mrb[0].mxu0 %v2252
        %v2304 = vpop.f32.mrb[0].mxu0
        %v2305 = vadd.f32 %v2223, %v2304
        %v2306 = vpop.f32.mrb[0].mxu0
        %v2307 = vadd.f32 %v2223, %v2306
        %v2308 = vpop.f32.mrb[0].mxu0
        %v2309 = vadd.f32 %v2228, %v2308
        %v2310 = vpop.f32.mrb[0].mxu0
        %v2311 = vadd.f32 %v2228, %v2310
        %2312 = vmatprep.mubr.bf16.mxu0 0
        %2313 = vmatmul.mubr.bf16.gmra.mrb[0].mxu0 %v2255
        %v2314 = vpop.f32.mrb[0].mxu0
        %v2315 = vadd.f32 %v2233, %v2314
        %v2316 = vpop.f32.mrb[0].mxu0
        %v2317 = vadd.f32 %v2233, %v2316
        %v2318 = vpop.f32.mrb[0].mxu0
        %v2319 = vadd.f32 %v2238, %v2318
        %v2320 = vpop.f32.mrb[0].mxu0
        %v2321 = vadd.f32 %v2238, %v2320
        %2322 = vdwg.mxu0
        %2323 = vmatprep.subr.bf16.mxu0 %v2268
        %2324 = vmatpush1.bf16.msra.mxu0 %v2265
        %2325 = vmatprep.subr.bf16.mxu0 0
        %2326 = vmatpush1.bf16.msra.mxu0 0
        %2327 = vmatprep.subr.bf16.mxu0 0
        %2328 = vmatpush1.bf16.msra.mxu0 0
        %2329 = vmatprep.subr.bf16.mxu0 0
        %2330 = vmatpush1.bf16.msra.mxu0 0
        %2331 = vmatprep.subr.bf16.mxu0 0
        %2332 = vmatpush1.bf16.msra.mxu0 0
        %2333 = vmatprep.subr.bf16.mxu0 0
        %2334 = vmatpush1.bf16.msra.mxu0 0
        %2335 = vmatprep.subr.bf16.mxu0 0
        %2336 = vmatpush1.bf16.msra.mxu0 0
        %2337 = vmatprep.subr.bf16.mxu0 0
        %2338 = vmatpush1.bf16.msra.mxu0 0
        %2339 = vmatprep.subr.bf16.mxu0 0
        %2340 = vmatpush1.bf16.msra.mxu0 0
        %2341 = vmatprep.subr.bf16.mxu0 0
        %2342 = vmatpush1.bf16.msra.mxu0 0
        %2343 = vmatprep.subr.bf16.mxu0 0
        %2344 = vmatpush1.bf16.msra.mxu0 0
        %2345 = vmatprep.subr.bf16.mxu0 0
        %2346 = vmatpush1.bf16.msra.mxu0 0
        %2347 = vmatprep.subr.bf16.mxu0 0
        %2348 = vmatpush1.bf16.msra.mxu0 0
        %2349 = vmatprep.subr.bf16.mxu0 0
        %2350 = vmatpush1.bf16.msra.mxu0 0
        %2351 = vmatprep.subr.bf16.mxu0 0
        %2352 = vmatpush1.bf16.msra.mxu0 0
        %2353 = vmatprep.subr.bf16.mxu0 0
        %2354 = vmatpush1.bf16.msra.mxu0 0
        %2355 = vmatprep.mubr.bf16.mxu0 0
        %2356 = vmatmul.mubr.bf16.gmra.mrb[0].mxu0 %v2252
        %v2357 = vpop.f32.mrb[0].mxu0
        %v2358 = vadd.f32 %v2223, %v2357
        %v2359 = vpop.f32.mrb[0].mxu0
        %v2360 = vadd.f32 %v2223, %v2359
        %v2361 = vpop.f32.mrb[0].mxu0
        %v2362 = vadd.f32 %v2228, %v2361
        %v2363 = vpop.f32.mrb[0].mxu0
        %v2364 = vadd.f32 %v2228, %v2363
        %2365 = vmatprep.mubr.bf16.mxu0 0
        %2366 = vmatmul.mubr.bf16.gmra.mrb[0].mxu0 %v2255
        %v2367 = vpop.f32.mrb[0].mxu0
        %v2368 = vadd.f32 %v2233, %v2367
        %v2369 = vpop.f32.mrb[0].mxu0
        %v2370 = vadd.f32 %v2233, %v2369
        %v2371 = vpop.f32.mrb[0].mxu0
        %v2372 = vadd.f32 %v2238, %v2371
        %v2373 = vpop.f32.mrb[0].mxu0
        %v2374 = vadd.f32 %v2238, %v2373
        %2375 = vdwg.mxu0
        %v2376 = vxor.u32 %v2305, 2147483648
        %v2377 = vxor.u32 %v2307, 2147483648
        %v2378 = vxor.u32 %v2358, 2147483648
        %v2379 = vxor.u32 %v2360, 2147483648
        %v2380 = vxor.u32 %v2309, 2147483648
        %v2381 = vxor.u32 %v2311, 2147483648
        %v2382 = vxor.u32 %v2362, 2147483648
        %v2383 = vxor.u32 %v2364, 2147483648
        %v2384 = vxor.u32 %v2315, 2147483648
        %v2385 = vxor.u32 %v2317, 2147483648
        %v2386 = vxor.u32 %v2368, 2147483648
        %v2387 = vxor.u32 %v2370, 2147483648
        %v2388 = vxor.u32 %v2319, 2147483648
        %v2389 = vxor.u32 %v2321, 2147483648
        %v2390 = vxor.u32 %v2372, 2147483648
        %v2391 = vxor.u32 %v2374, 2147483648
        %v2392 = vmul.f32 %v2376, 1.442695
        %v2393 = vpow.pop %v2392
        %v2394 = vmul.f32 %v2377, 1.442695
        %v2395 = vpow.pop %v2394
        %v2396 = vmul.f32 %v2378, 1.442695
        %v2397 = vpow.pop %v2396
        %v2398 = vmul.f32 %v2379, 1.442695
        %v2399 = vpow.pop %v2398
        %v2400 = vmul.f32 %v2380, 1.442695
        %v2401 = vpow.pop %v2400
        %v2402 = vmul.f32 %v2381, 1.442695
        %v2403 = vpow.pop %v2402
        %v2404 = vmul.f32 %v2382, 1.442695
        %v2405 = vpow.pop %v2404
        %v2406 = vmul.f32 %v2383, 1.442695
        %v2407 = vpow.pop %v2406
        %v2408 = vmul.f32 %v2384, 1.442695
        %v2409 = vpow.pop %v2408
        %v2410 = vmul.f32 %v2385, 1.442695
        %v2411 = vpow.pop %v2410
        %v2412 = vmul.f32 %v2386, 1.442695
        %v2413 = vpow.pop %v2412
        %v2414 = vmul.f32 %v2387, 1.442695
        %v2415 = vpow.pop %v2414
        %v2416 = vmul.f32 %v2388, 1.442695
        %v2417 = vpow.pop %v2416
        %v2418 = vmul.f32 %v2389, 1.442695
        %v2419 = vpow.pop %v2418
        %v2420 = vmul.f32 %v2390, 1.442695
        %v2421 = vpow.pop %v2420
        %v2422 = vmul.f32 %v2391, 1.442695
        %v2423 = vpow.pop %v2422
        %v2424 = vadd.f32 %v2393, 1.0
        %v2425 = vadd.f32 %v2395, 1.0
        %v2426 = vadd.f32 %v2397, 1.0
        %v2427 = vadd.f32 %v2399, 1.0
        %v2428 = vadd.f32 %v2401, 1.0
        %v2429 = vadd.f32 %v2403, 1.0
        %v2430 = vadd.f32 %v2405, 1.0
        %v2431 = vadd.f32 %v2407, 1.0
        %v2432 = vadd.f32 %v2409, 1.0
        %v2433 = vadd.f32 %v2411, 1.0
        %v2434 = vadd.f32 %v2413, 1.0
        %v2435 = vadd.f32 %v2415, 1.0
        %v2436 = vadd.f32 %v2417, 1.0
        %v2437 = vadd.f32 %v2419, 1.0
        %v2438 = vadd.f32 %v2421, 1.0
        %v2439 = vadd.f32 %v2423, 1.0
        %v2440 = vrcp.pop %v2424
        %v2441 = vmul.f32 1.0, %v2440
        %v2442 = vrcp.pop %v2425
        %v2443 = vmul.f32 1.0, %v2442
        %v2444 = vrcp.pop %v2426
        %v2445 = vmul.f32 1.0, %v2444
        %v2446 = vrcp.pop %v2427
        %v2447 = vmul.f32 1.0, %v2446
        %v2448 = vrcp.pop %v2428
        %v2449 = vmul.f32 1.0, %v2448
        %v2450 = vrcp.pop %v2429
        %v2451 = vmul.f32 1.0, %v2450
        %v2452 = vrcp.pop %v2430
        %v2453 = vmul.f32 1.0, %v2452
        %v2454 = vrcp.pop %v2431
        %v2455 = vmul.f32 1.0, %v2454
        %v2456 = vrcp.pop %v2432
        %v2457 = vmul.f32 1.0, %v2456
        %v2458 = vrcp.pop %v2433
        %v2459 = vmul.f32 1.0, %v2458
        %v2460 = vrcp.pop %v2434
        %v2461 = vmul.f32 1.0, %v2460
        %v2462 = vrcp.pop %v2435
        %v2463 = vmul.f32 1.0, %v2462
        %v2464 = vrcp.pop %v2436
        %v2465 = vmul.f32 1.0, %v2464
        %v2466 = vrcp.pop %v2437
        %v2467 = vmul.f32 1.0, %v2466
        %v2468 = vrcp.pop %v2438
        %v2469 = vmul.f32 1.0, %v2468
        %v2470 = vrcp.pop %v2439
        %v2471 = vmul.f32 1.0, %v2470
        %v2472 = vmul.f32 %v2095, %v2441
        %v2473 = vmul.f32 %v2096, %v2443
        %v2474 = vmul.f32 %v2097, %v2445
        %v2475 = vmul.f32 %v2098, %v2447
        %v2476 = vmul.f32 %v2099, %v2449
        %v2477 = vmul.f32 %v2100, %v2451
        %v2478 = vmul.f32 %v2101, %v2453
        %v2479 = vmul.f32 %v2102, %v2455
        %v2480 = vmul.f32 %v2087, %v2457
        %v2481 = vmul.f32 %v2088, %v2459
        %v2482 = vmul.f32 %v2089, %v2461
        %v2483 = vmul.f32 %v2090, %v2463
        %v2484 = vmul.f32 %v2091, %v2465
        %v2485 = vmul.f32 %v2092, %v2467
        %v2486 = vmul.f32 %v2093, %v2469
        %v2487 = vmul.f32 %v2094, %v2471
        %v2488 = vld [vmem:[%s10] sm:$0xf]
        %v2489 = vld [vmem:[%s10 + $0x4] sm:$0xf]
        %v2492 = vpack.c.bf16 %v743, %v743
        %v2493 = vpack.c.bf16 %v763, %v763
        %v2494 = vpack.c.bf16 %v744, %v744
        %v2495 = vpack.c.bf16 %v764, %v764
        %v2496 = vld [vmem:[%s11] sm:$0xff]
        %v2497 = vld [vmem:[%s11 + $0x8] sm:$0xff]
        %2499 = vset.pattern.permute.xlu0 0
        %2500 = vperm.xlu0 %2499, %v2496
        %v2501 = vpop.permute.xlu0 %2500
        %2504 = vset.pattern.permute.xlu0 0
        %2505 = vperm.xlu0 %2504, %v2497
        %v2506 = vpop.permute.xlu0 %2505
        %v2510 = vunpack.c.l.b16 %v2488
        %v2511 = vunpack.c.l.b16 %v2489
        %v2512 = vpack.c.b16 %v2511, %v2510
        %v2514 = vsel %vm765, %v2512, 0
        %vm2516 = vcmask 1040384
        %vm2517 = vcmask 1041408
        %v2518 = vsel %vm2516, 4294967295, 65535
        %v2519 = vsel %vm2517, %v2518, 0
        %v2521 = vand.u32 %v2492, %v2519
        %v2524 = vand.u32 %v2493, %v2519
        %v2527 = vand.u32 %v2494, %v2519
        %v2530 = vand.u32 %v2495, %v2519
        %2532 = vmatprep.subr.bf16.mxu0 %v2524
        %2533 = vmatpush1.bf16.msra.mxu0 %v2521
        %2534 = vmatprep.subr.bf16.mxu0 0
        %2535 = vmatpush1.bf16.msra.mxu0 0
        %2536 = vmatprep.subr.bf16.mxu0 0
        %2537 = vmatpush1.bf16.msra.mxu0 0
        %2538 = vmatprep.subr.bf16.mxu0 0
        %2539 = vmatpush1.bf16.msra.mxu0 0
        %2540 = vmatprep.subr.bf16.mxu0 0
        %2541 = vmatpush1.bf16.msra.mxu0 0
        %2542 = vmatprep.subr.bf16.mxu0 0
        %2543 = vmatpush1.bf16.msra.mxu0 0
        %2544 = vmatprep.subr.bf16.mxu0 0
        %2545 = vmatpush1.bf16.msra.mxu0 0
        %2546 = vmatprep.subr.bf16.mxu0 0
        %2547 = vmatpush1.bf16.msra.mxu0 0
        %2548 = vmatprep.subr.bf16.mxu0 0
        %2549 = vmatpush1.bf16.msra.mxu0 0
        %2550 = vmatprep.subr.bf16.mxu0 0
        %2551 = vmatpush1.bf16.msra.mxu0 0
        %2552 = vmatprep.subr.bf16.mxu0 0
        %2553 = vmatpush1.bf16.msra.mxu0 0
        %2554 = vmatprep.subr.bf16.mxu0 0
        %2555 = vmatpush1.bf16.msra.mxu0 0
        %2556 = vmatprep.subr.bf16.mxu0 0
        %2557 = vmatpush1.bf16.msra.mxu0 0
        %2558 = vmatprep.subr.bf16.mxu0 0
        %2559 = vmatpush1.bf16.msra.mxu0 0
        %2560 = vmatprep.subr.bf16.mxu0 0
        %2561 = vmatpush1.bf16.msra.mxu0 0
        %2562 = vmatprep.subr.bf16.mxu0 0
        %2563 = vmatpush1.bf16.msra.mxu0 0
        %2564 = vmatprep.mubr.bf16.mxu0 0
        %2565 = vmatmul.mubr.bf16.gmra.mrb[0].mxu0 %v2514
        %v2566 = vpop.f32.mrb[0].mxu0
        %v2567 = vadd.f32 %v2501, %v2566
        %v2568 = vpop.f32.mrb[0].mxu0
        %v2569 = vadd.f32 %v2501, %v2568
        %v2570 = vpop.f32.mrb[0].mxu0
        %v2571 = vadd.f32 %v2506, %v2570
        %v2572 = vpop.f32.mrb[0].mxu0
        %v2573 = vadd.f32 %v2506, %v2572
        %2574 = vdwg.mxu0
        %2575 = vmatprep.subr.bf16.mxu0 %v2530
        %2576 = vmatpush1.bf16.msra.mxu0 %v2527
        %2577 = vmatprep.subr.bf16.mxu0 0
        %2578 = vmatpush1.bf16.msra.mxu0 0
        %2579 = vmatprep.subr.bf16.mxu0 0
        %2580 = vmatpush1.bf16.msra.mxu0 0
        %2581 = vmatprep.subr.bf16.mxu0 0
        %2582 = vmatpush1.bf16.msra.mxu0 0
        %2583 = vmatprep.subr.bf16.mxu0 0
        %2584 = vmatpush1.bf16.msra.mxu0 0
        %2585 = vmatprep.subr.bf16.mxu0 0
        %2586 = vmatpush1.bf16.msra.mxu0 0
        %2587 = vmatprep.subr.bf16.mxu0 0
        %2588 = vmatpush1.bf16.msra.mxu0 0
        %2589 = vmatprep.subr.bf16.mxu0 0
        %2590 = vmatpush1.bf16.msra.mxu0 0
        %2591 = vmatprep.subr.bf16.mxu0 0
        %2592 = vmatpush1.bf16.msra.mxu0 0
        %2593 = vmatprep.subr.bf16.mxu0 0
        %2594 = vmatpush1.bf16.msra.mxu0 0
        %2595 = vmatprep.subr.bf16.mxu0 0
        %2596 = vmatpush1.bf16.msra.mxu0 0
        %2597 = vmatprep.subr.bf16.mxu0 0
        %2598 = vmatpush1.bf16.msra.mxu0 0
        %2599 = vmatprep.subr.bf16.mxu0 0
        %2600 = vmatpush1.bf16.msra.mxu0 0
        %2601 = vmatprep.subr.bf16.mxu0 0
        %2602 = vmatpush1.bf16.msra.mxu0 0
        %2603 = vmatprep.subr.bf16.mxu0 0
        %2604 = vmatpush1.bf16.msra.mxu0 0
        %2605 = vmatprep.subr.bf16.mxu0 0
        %2606 = vmatpush1.bf16.msra.mxu0 0
        %2607 = vmatprep.mubr.bf16.mxu0 0
        %2608 = vmatmul.mubr.bf16.gmra.mrb[0].mxu0 %v2514
        %v2609 = vpop.f32.mrb[0].mxu0
        %v2610 = vadd.f32 %v2501, %v2609
        %v2611 = vpop.f32.mrb[0].mxu0
        %v2612 = vadd.f32 %v2501, %v2611
        %v2613 = vpop.f32.mrb[0].mxu0
        %v2614 = vadd.f32 %v2506, %v2613
        %v2615 = vpop.f32.mrb[0].mxu0
        %v2616 = vadd.f32 %v2506, %v2615
        %2617 = vdwg.mxu0
        %v2618 = vmax.f32 %v2567, 0.0
        %v2619 = vmax.f32 %v2569, 0.0
        %v2620 = vmax.f32 %v2610, 0.0
        %v2621 = vmax.f32 %v2612, 0.0
        %v2622 = vmax.f32 %v2571, 0.0
        %v2623 = vmax.f32 %v2573, 0.0
        %v2624 = vmax.f32 %v2614, 0.0
        %v2625 = vmax.f32 %v2616, 0.0
        %v2626 = vld [vmem:[%s12] sm:$0xf]
        %v2627 = vld [vmem:[%s12 + $0x4] sm:$0xf]
        %v2628 = vld [vmem:[%s12 + $0x8] sm:$0xf]
        %v2629 = vld [vmem:[%s12 + $0xc] sm:$0xf]
        %v2630 = vpack.c.bf16 %v2622, %v2618
        %v2631 = vpack.c.bf16 %v2623, %v2619
        %v2632 = vpack.c.bf16 %v2624, %v2620
        %v2633 = vpack.c.bf16 %v2625, %v2621
        %v2634 = vld [vmem:[%s13] sm:$0xff]
        %v2635 = vld [vmem:[%s13 + $0x8] sm:$0xff]
        %v2636 = vld [vmem:[%s13 + $0x10] sm:$0xff]
        %v2637 = vld [vmem:[%s13 + $0x18] sm:$0xff]
        %2639 = vset.pattern.permute.xlu0 0
        %2640 = vperm.xlu0 %2639, %v2634
        %v2641 = vpop.permute.xlu0 %2640
        %2644 = vset.pattern.permute.xlu0 0
        %2645 = vperm.xlu0 %2644, %v2635
        %v2646 = vpop.permute.xlu0 %2645
        %2649 = vset.pattern.permute.xlu0 0
        %2650 = vperm.xlu0 %2649, %v2636
        %v2651 = vpop.permute.xlu0 %2650
        %2654 = vset.pattern.permute.xlu0 0
        %2655 = vperm.xlu0 %2654, %v2637
        %v2656 = vpop.permute.xlu0 %2655
        %v2662 = vunpack.c.l.b16 %v2626
        %v2663 = vunpack.c.l.b16 %v2627
        %v2664 = vunpack.c.l.b16 %v2628
        %v2665 = vunpack.c.l.b16 %v2629
        %v2666 = vpack.c.b16 %v2663, %v2662
        %v2667 = vpack.c.b16 %v2665, %v2664
        %vm2668 = vcmask 130048
        %v2670 = vsel %vm2668, %v2666, 0
        %v2673 = vsel %vm2668, %v2667, 0
        %2675 = vmatprep.subr.bf16.mxu0 %v2631
        %2676 = vmatpush1.bf16.msra.mxu0 %v2630
        %2677 = vmatprep.subr.bf16.mxu0 0
        %2678 = vmatpush1.bf16.msra.mxu0 0
        %2679 = vmatprep.subr.bf16.mxu0 0
        %2680 = vmatpush1.bf16.msra.mxu0 0
        %2681 = vmatprep.subr.bf16.mxu0 0
        %2682 = vmatpush1.bf16.msra.mxu0 0
        %2683 = vmatprep.subr.bf16.mxu0 0
        %2684 = vmatpush1.bf16.msra.mxu0 0
        %2685 = vmatprep.subr.bf16.mxu0 0
        %2686 = vmatpush1.bf16.msra.mxu0 0
        %2687 = vmatprep.subr.bf16.mxu0 0
        %2688 = vmatpush1.bf16.msra.mxu0 0
        %2689 = vmatprep.subr.bf16.mxu0 0
        %2690 = vmatpush1.bf16.msra.mxu0 0
        %2691 = vmatprep.subr.bf16.mxu0 0
        %2692 = vmatpush1.bf16.msra.mxu0 0
        %2693 = vmatprep.subr.bf16.mxu0 0
        %2694 = vmatpush1.bf16.msra.mxu0 0
        %2695 = vmatprep.subr.bf16.mxu0 0
        %2696 = vmatpush1.bf16.msra.mxu0 0
        %2697 = vmatprep.subr.bf16.mxu0 0
        %2698 = vmatpush1.bf16.msra.mxu0 0
        %2699 = vmatprep.subr.bf16.mxu0 0
        %2700 = vmatpush1.bf16.msra.mxu0 0
        %2701 = vmatprep.subr.bf16.mxu0 0
        %2702 = vmatpush1.bf16.msra.mxu0 0
        %2703 = vmatprep.subr.bf16.mxu0 0
        %2704 = vmatpush1.bf16.msra.mxu0 0
        %2705 = vmatprep.subr.bf16.mxu0 0
        %2706 = vmatpush1.bf16.msra.mxu0 0
        %2707 = vmatprep.mubr.bf16.mxu0 0
        %2708 = vmatmul.mubr.bf16.gmra.mrb[0].mxu0 %v2670
        %v2709 = vpop.f32.mrb[0].mxu0
        %v2710 = vadd.f32 %v2641, %v2709
        %v2711 = vpop.f32.mrb[0].mxu0
        %v2712 = vadd.f32 %v2641, %v2711
        %v2713 = vpop.f32.mrb[0].mxu0
        %v2714 = vadd.f32 %v2646, %v2713
        %v2715 = vpop.f32.mrb[0].mxu0
        %v2716 = vadd.f32 %v2646, %v2715
        %2717 = vmatprep.mubr.bf16.mxu0 0
        %2718 = vmatmul.mubr.bf16.gmra.mrb[0].mxu0 %v2673
        %v2719 = vpop.f32.mrb[0].mxu0
        %v2720 = vadd.f32 %v2651, %v2719
        %v2721 = vpop.f32.mrb[0].mxu0
        %v2722 = vadd.f32 %v2651, %v2721
        %v2723 = vpop.f32.mrb[0].mxu0
        %v2724 = vadd.f32 %v2656, %v2723
        %v2725 = vpop.f32.mrb[0].mxu0
        %v2726 = vadd.f32 %v2656, %v2725
        %2727 = vdwg.mxu0
        %2728 = vmatprep.subr.bf16.mxu0 %v2633
        %2729 = vmatpush1.bf16.msra.mxu0 %v2632
        %2730 = vmatprep.subr.bf16.mxu0 0
        %2731 = vmatpush1.bf16.msra.mxu0 0
        %2732 = vmatprep.subr.bf16.mxu0 0
        %2733 = vmatpush1.bf16.msra.mxu0 0
        %2734 = vmatprep.subr.bf16.mxu0 0
        %2735 = vmatpush1.bf16.msra.mxu0 0
        %2736 = vmatprep.subr.bf16.mxu0 0
        %2737 = vmatpush1.bf16.msra.mxu0 0
        %2738 = vmatprep.subr.bf16.mxu0 0
        %2739 = vmatpush1.bf16.msra.mxu0 0
        %2740 = vmatprep.subr.bf16.mxu0 0
        %2741 = vmatpush1.bf16.msra.mxu0 0
        %2742 = vmatprep.subr.bf16.mxu0 0
        %2743 = vmatpush1.bf16.msra.mxu0 0
        %2744 = vmatprep.subr.bf16.mxu0 0
        %2745 = vmatpush1.bf16.msra.mxu0 0
        %2746 = vmatprep.subr.bf16.mxu0 0
        %2747 = vmatpush1.bf16.msra.mxu0 0
        %2748 = vmatprep.subr.bf16.mxu0 0
        %2749 = vmatpush1.bf16.msra.mxu0 0
        %2750 = vmatprep.subr.bf16.mxu0 0
        %2751 = vmatpush1.bf16.msra.mxu0 0
        %2752 = vmatprep.subr.bf16.mxu0 0
        %2753 = vmatpush1.bf16.msra.mxu0 0
        %2754 = vmatprep.subr.bf16.mxu0 0
        %2755 = vmatpush1.bf16.msra.mxu0 0
        %2756 = vmatprep.subr.bf16.mxu0 0
        %2757 = vmatpush1.bf16.msra.mxu0 0
        %2758 = vmatprep.subr.bf16.mxu0 0
        %2759 = vmatpush1.bf16.msra.mxu0 0
        %2760 = vmatprep.mubr.bf16.mxu0 0
        %2761 = vmatmul.mubr.bf16.gmra.mrb[0].mxu0 %v2670
        %v2762 = vpop.f32.mrb[0].mxu0
        %v2763 = vadd.f32 %v2641, %v2762
        %v2764 = vpop.f32.mrb[0].mxu0
        %v2765 = vadd.f32 %v2641, %v2764
        %v2766 = vpop.f32.mrb[0].mxu0
        %v2767 = vadd.f32 %v2646, %v2766
        %v2768 = vpop.f32.mrb[0].mxu0
        %v2769 = vadd.f32 %v2646, %v2768
        %2770 = vmatprep.mubr.bf16.mxu0 0
        %2771 = vmatmul.mubr.bf16.gmra.mrb[0].mxu0 %v2673
        %v2772 = vpop.f32.mrb[0].mxu0
        %v2773 = vadd.f32 %v2651, %v2772
        %v2774 = vpop.f32.mrb[0].mxu0
        %v2775 = vadd.f32 %v2651, %v2774
        %v2776 = vpop.f32.mrb[0].mxu0
        %v2777 = vadd.f32 %v2656, %v2776
        %v2778 = vpop.f32.mrb[0].mxu0
        %v2779 = vadd.f32 %v2656, %v2778
        %2780 = vdwg.mxu0
        %v2781 = vld [vmem:[%s14] sm:$0xf]
        %v2782 = vld [vmem:[%s14 + $0x4] sm:$0xf]
        %v2783 = vld [vmem:[%s14 + $0x8] sm:$0xf]
        %v2784 = vld [vmem:[%s14 + $0xc] sm:$0xf]
        %v2785 = vld [vmem:[%s15] sm:$0xff]
        %v2786 = vld [vmem:[%s15 + $0x8] sm:$0xff]
        %v2787 = vld [vmem:[%s15 + $0x10] sm:$0xff]
        %v2788 = vld [vmem:[%s15 + $0x18] sm:$0xff]
        %v2789 = vpack.c.bf16 %v2476, %v2472
        %v2790 = vpack.c.bf16 %v2477, %v2473
        %v2791 = vpack.c.bf16 %v2478, %v2474
        %v2792 = vpack.c.bf16 %v2479, %v2475
        %v2793 = vpack.c.bf16 %v2484, %v2480
        %v2794 = vpack.c.bf16 %v2485, %v2481
        %v2795 = vpack.c.bf16 %v2486, %v2482
        %v2796 = vpack.c.bf16 %v2487, %v2483
        %2798 = vset.pattern.permute.xlu0 0
        %2799 = vperm.xlu0 %2798, %v2785
        %v2800 = vpop.permute.xlu0 %2799
        %2803 = vset.pattern.permute.xlu0 0
        %2804 = vperm.xlu0 %2803, %v2786
        %v2805 = vpop.permute.xlu0 %2804
        %2808 = vset.pattern.permute.xlu0 0
        %2809 = vperm.xlu0 %2808, %v2787
        %v2810 = vpop.permute.xlu0 %2809
        %2813 = vset.pattern.permute.xlu0 0
        %2814 = vperm.xlu0 %2813, %v2788
        %v2815 = vpop.permute.xlu0 %2814
        %v2821 = vunpack.c.l.b16 %v2781
        %v2822 = vunpack.c.l.b16 %v2782
        %v2823 = vunpack.c.l.b16 %v2783
        %v2824 = vunpack.c.l.b16 %v2784
        %v2825 = vpack.c.b16 %v2822, %v2821
        %v2826 = vpack.c.b16 %v2824, %v2823
        %v2828 = vsel %vm2118, %v2825, 0
        %v2831 = vsel %vm2118, %v2826, 0
        %2833 = vmatprep.subr.bf16.mxu0 %v2790
        %2834 = vmatpush1.bf16.msra.mxu0 %v2789
        %2835 = vmatprep.subr.bf16.mxu0 %v2794
        %2836 = vmatpush1.bf16.msra.mxu0 %v2793
        %2837 = vmatprep.subr.bf16.mxu0 0
        %2838 = vmatpush1.bf16.msra.mxu0 0
        %2839 = vmatprep.subr.bf16.mxu0 0
        %2840 = vmatpush1.bf16.msra.mxu0 0
        %2841 = vmatprep.subr.bf16.mxu0 0
        %2842 = vmatpush1.bf16.msra.mxu0 0
        %2843 = vmatprep.subr.bf16.mxu0 0
        %2844 = vmatpush1.bf16.msra.mxu0 0
        %2845 = vmatprep.subr.bf16.mxu0 0
        %2846 = vmatpush1.bf16.msra.mxu0 0
        %2847 = vmatprep.subr.bf16.mxu0 0
        %2848 = vmatpush1.bf16.msra.mxu0 0
        %2849 = vmatprep.subr.bf16.mxu0 0
        %2850 = vmatpush1.bf16.msra.mxu0 0
        %2851 = vmatprep.subr.bf16.mxu0 0
        %2852 = vmatpush1.bf16.msra.mxu0 0
        %2853 = vmatprep.subr.bf16.mxu0 0
        %2854 = vmatpush1.bf16.msra.mxu0 0
        %2855 = vmatprep.subr.bf16.mxu0 0
        %2856 = vmatpush1.bf16.msra.mxu0 0
        %2857 = vmatprep.subr.bf16.mxu0 0
        %2858 = vmatpush1.bf16.msra.mxu0 0
        %2859 = vmatprep.subr.bf16.mxu0 0
        %2860 = vmatpush1.bf16.msra.mxu0 0
        %2861 = vmatprep.subr.bf16.mxu0 0
        %2862 = vmatpush1.bf16.msra.mxu0 0
        %2863 = vmatprep.subr.bf16.mxu0 0
        %2864 = vmatpush1.bf16.msra.mxu0 0
        %2865 = vmatprep.mubr.bf16.mxu0 0
        %2866 = vmatmul.mubr.bf16.gmra.mrb[0].mxu0 %v2828
        %v2867 = vpop.f32.mrb[0].mxu0
        %v2868 = vadd.f32 %v2800, %v2867
        %v2869 = vpop.f32.mrb[0].mxu0
        %v2870 = vadd.f32 %v2800, %v2869
        %v2871 = vpop.f32.mrb[0].mxu0
        %v2872 = vadd.f32 %v2805, %v2871
        %v2873 = vpop.f32.mrb[0].mxu0
        %v2874 = vadd.f32 %v2805, %v2873
        %2875 = vmatprep.mubr.bf16.mxu0 0
        %2876 = vmatmul.mubr.bf16.gmra.mrb[0].mxu0 %v2831
        %v2877 = vpop.f32.mrb[0].mxu0
        %v2878 = vadd.f32 %v2810, %v2877
        %v2879 = vpop.f32.mrb[0].mxu0
        %v2880 = vadd.f32 %v2810, %v2879
        %v2881 = vpop.f32.mrb[0].mxu0
        %v2882 = vadd.f32 %v2815, %v2881
        %v2883 = vpop.f32.mrb[0].mxu0
        %v2884 = vadd.f32 %v2815, %v2883
        %2885 = vdwg.mxu0
        %2886 = vmatprep.subr.bf16.mxu0 %v2792
        %2887 = vmatpush1.bf16.msra.mxu0 %v2791
        %2888 = vmatprep.subr.bf16.mxu0 %v2796
        %2889 = vmatpush1.bf16.msra.mxu0 %v2795
        %2890 = vmatprep.subr.bf16.mxu0 0
        %2891 = vmatpush1.bf16.msra.mxu0 0
        %2892 = vmatprep.subr.bf16.mxu0 0
        %2893 = vmatpush1.bf16.msra.mxu0 0
        %2894 = vmatprep.subr.bf16.mxu0 0
        %2895 = vmatpush1.bf16.msra.mxu0 0
        %2896 = vmatprep.subr.bf16.mxu0 0
        %2897 = vmatpush1.bf16.msra.mxu0 0
        %2898 = vmatprep.subr.bf16.mxu0 0
        %2899 = vmatpush1.bf16.msra.mxu0 0
        %2900 = vmatprep.subr.bf16.mxu0 0
        %2901 = vmatpush1.bf16.msra.mxu0 0
        %2902 = vmatprep.subr.bf16.mxu0 0
        %2903 = vmatpush1.bf16.msra.mxu0 0
        %2904 = vmatprep.subr.bf16.mxu0 0
        %2905 = vmatpush1.bf16.msra.mxu0 0
        %2906 = vmatprep.subr.bf16.mxu0 0
        %2907 = vmatpush1.bf16.msra.mxu0 0
        %2908 = vmatprep.subr.bf16.mxu0 0
        %2909 = vmatpush1.bf16.msra.mxu0 0
        %2910 = vmatprep.subr.bf16.mxu0 0
        %2911 = vmatpush1.bf16.msra.mxu0 0
        %2912 = vmatprep.subr.bf16.mxu0 0
        %2913 = vmatpush1.bf16.msra.mxu0 0
        %2914 = vmatprep.subr.bf16.mxu0 0
        %2915 = vmatpush1.bf16.msra.mxu0 0
        %2916 = vmatprep.subr.bf16.mxu0 0
        %2917 = vmatpush1.bf16.msra.mxu0 0
        %2918 = vmatprep.mubr.bf16.mxu0 0
        %2919 = vmatmul.mubr.bf16.gmra.mrb[0].mxu0 %v2828
        %v2920 = vpop.f32.mrb[0].mxu0
        %v2921 = vadd.f32 %v2800, %v2920
        %v2922 = vpop.f32.mrb[0].mxu0
        %v2923 = vadd.f32 %v2800, %v2922
        %v2924 = vpop.f32.mrb[0].mxu0
        %v2925 = vadd.f32 %v2805, %v2924
        %v2926 = vpop.f32.mrb[0].mxu0
        %v2927 = vadd.f32 %v2805, %v2926
        %2928 = vmatprep.mubr.bf16.mxu0 0
        %2929 = vmatmul.mubr.bf16.gmra.mrb[0].mxu0 %v2831
        %v2930 = vpop.f32.mrb[0].mxu0
        %v2931 = vadd.f32 %v2810, %v2930
        %v2932 = vpop.f32.mrb[0].mxu0
        %v2933 = vadd.f32 %v2810, %v2932
        %v2934 = vpop.f32.mrb[0].mxu0
        %v2935 = vadd.f32 %v2815, %v2934
        %v2936 = vpop.f32.mrb[0].mxu0
        %v2937 = vadd.f32 %v2815, %v2936
        %2938 = vdwg.mxu0
        %v2939 = vmax.f32 %v2868, 0.0
        %v2940 = vmax.f32 %v2870, 0.0
        %v2941 = vmax.f32 %v2921, 0.0
        %v2942 = vmax.f32 %v2923, 0.0
        %v2943 = vmax.f32 %v2872, 0.0
        %v2944 = vmax.f32 %v2874, 0.0
        %v2945 = vmax.f32 %v2925, 0.0
        %v2946 = vmax.f32 %v2927, 0.0
        %v2947 = vmax.f32 %v2878, 0.0
        %v2948 = vmax.f32 %v2880, 0.0
        %v2949 = vmax.f32 %v2931, 0.0
        %v2950 = vmax.f32 %v2933, 0.0
        %v2951 = vmax.f32 %v2882, 0.0
        %v2952 = vmax.f32 %v2884, 0.0
        %v2953 = vmax.f32 %v2935, 0.0
        %v2954 = vmax.f32 %v2937, 0.0
        %v2955 = vld [vmem:[%s16] sm:$0xf]
        %v2956 = vld [vmem:[%s16 + $0x4] sm:$0xf]
        %v2957 = vld [vmem:[%s16 + $0x8] sm:$0xf]
        %v2958 = vld [vmem:[%s16 + $0xc] sm:$0xf]
        %v2959 = vld [vmem:[%s17] sm:$0xff]
        %v2960 = vld [vmem:[%s17 + $0x8] sm:$0xff]
        %v2961 = vld [vmem:[%s17 + $0x10] sm:$0xff]
        %v2962 = vld [vmem:[%s17 + $0x18] sm:$0xff]
        %v2963 = vpack.c.bf16 %v2943, %v2939
        %v2964 = vpack.c.bf16 %v2944, %v2940
        %v2965 = vpack.c.bf16 %v2945, %v2941
        %v2966 = vpack.c.bf16 %v2946, %v2942
        %v2967 = vpack.c.bf16 %v2951, %v2947
        %v2968 = vpack.c.bf16 %v2952, %v2948
        %v2969 = vpack.c.bf16 %v2953, %v2949
        %v2970 = vpack.c.bf16 %v2954, %v2950
        %2972 = vset.pattern.permute.xlu0 0
        %2973 = vperm.xlu0 %2972, %v2959
        %v2974 = vpop.permute.xlu0 %2973
        %2977 = vset.pattern.permute.xlu0 0
        %2978 = vperm.xlu0 %2977, %v2960
        %v2979 = vpop.permute.xlu0 %2978
        %2982 = vset.pattern.permute.xlu0 0
        %2983 = vperm.xlu0 %2982, %v2961
        %v2984 = vpop.permute.xlu0 %2983
        %2987 = vset.pattern.permute.xlu0 0
        %2988 = vperm.xlu0 %2987, %v2962
        %v2989 = vpop.permute.xlu0 %2988
        %v2995 = vunpack.c.l.b16 %v2955
        %v2996 = vunpack.c.l.b16 %v2956
        %v2997 = vunpack.c.l.b16 %v2957
        %v2998 = vunpack.c.l.b16 %v2958
        %v2999 = vpack.c.b16 %v2996, %v2995
        %v3000 = vpack.c.b16 %v2998, %v2997
        %v3002 = vsel %vm2118, %v2999, 0
        %v3005 = vsel %vm2118, %v3000, 0
        %3007 = vmatprep.subr.bf16.mxu0 %v2964
        %3008 = vmatpush1.bf16.msra.mxu0 %v2963
        %3009 = vmatprep.subr.bf16.mxu0 %v2968
        %3010 = vmatpush1.bf16.msra.mxu0 %v2967
        %3011 = vmatprep.subr.bf16.mxu0 0
        %3012 = vmatpush1.bf16.msra.mxu0 0
        %3013 = vmatprep.subr.bf16.mxu0 0
        %3014 = vmatpush1.bf16.msra.mxu0 0
        %3015 = vmatprep.subr.bf16.mxu0 0
        %3016 = vmatpush1.bf16.msra.mxu0 0
        %3017 = vmatprep.subr.bf16.mxu0 0
        %3018 = vmatpush1.bf16.msra.mxu0 0
        %3019 = vmatprep.subr.bf16.mxu0 0
        %3020 = vmatpush1.bf16.msra.mxu0 0
        %3021 = vmatprep.subr.bf16.mxu0 0
        %3022 = vmatpush1.bf16.msra.mxu0 0
        %3023 = vmatprep.subr.bf16.mxu0 0
        %3024 = vmatpush1.bf16.msra.mxu0 0
        %3025 = vmatprep.subr.bf16.mxu0 0
        %3026 = vmatpush1.bf16.msra.mxu0 0
        %3027 = vmatprep.subr.bf16.mxu0 0
        %3028 = vmatpush1.bf16.msra.mxu0 0
        %3029 = vmatprep.subr.bf16.mxu0 0
        %3030 = vmatpush1.bf16.msra.mxu0 0
        %3031 = vmatprep.subr.bf16.mxu0 0
        %3032 = vmatpush1.bf16.msra.mxu0 0
        %3033 = vmatprep.subr.bf16.mxu0 0
        %3034 = vmatpush1.bf16.msra.mxu0 0
        %3035 = vmatprep.subr.bf16.mxu0 0
        %3036 = vmatpush1.bf16.msra.mxu0 0
        %3037 = vmatprep.subr.bf16.mxu0 0
        %3038 = vmatpush1.bf16.msra.mxu0 0
        %3039 = vmatprep.mubr.bf16.mxu0 0
        %3040 = vmatmul.mubr.bf16.gmra.mrb[0].mxu0 %v3002
        %v3041 = vpop.f32.mrb[0].mxu0
        %v3042 = vadd.f32 %v2974, %v3041
        %v3043 = vpop.f32.mrb[0].mxu0
        %v3044 = vadd.f32 %v2974, %v3043
        %v3045 = vpop.f32.mrb[0].mxu0
        %v3046 = vadd.f32 %v2979, %v3045
        %v3047 = vpop.f32.mrb[0].mxu0
        %v3048 = vadd.f32 %v2979, %v3047
        %3049 = vmatprep.mubr.bf16.mxu0 0
        %3050 = vmatmul.mubr.bf16.gmra.mrb[0].mxu0 %v3005
        %v3051 = vpop.f32.mrb[0].mxu0
        %v3052 = vadd.f32 %v2984, %v3051
        %v3053 = vpop.f32.mrb[0].mxu0
        %v3054 = vadd.f32 %v2984, %v3053
        %v3055 = vpop.f32.mrb[0].mxu0
        %v3056 = vadd.f32 %v2989, %v3055
        %v3057 = vpop.f32.mrb[0].mxu0
        %v3058 = vadd.f32 %v2989, %v3057
        %3059 = vdwg.mxu0
        %3060 = vmatprep.subr.bf16.mxu0 %v2966
        %3061 = vmatpush1.bf16.msra.mxu0 %v2965
        %3062 = vmatprep.subr.bf16.mxu0 %v2970
        %3063 = vmatpush1.bf16.msra.mxu0 %v2969
        %3064 = vmatprep.subr.bf16.mxu0 0
        %3065 = vmatpush1.bf16.msra.mxu0 0
        %3066 = vmatprep.subr.bf16.mxu0 0
        %3067 = vmatpush1.bf16.msra.mxu0 0
        %3068 = vmatprep.subr.bf16.mxu0 0
        %3069 = vmatpush1.bf16.msra.mxu0 0
        %3070 = vmatprep.subr.bf16.mxu0 0
        %3071 = vmatpush1.bf16.msra.mxu0 0
        %3072 = vmatprep.subr.bf16.mxu0 0
        %3073 = vmatpush1.bf16.msra.mxu0 0
        %3074 = vmatprep.subr.bf16.mxu0 0
        %3075 = vmatpush1.bf16.msra.mxu0 0
        %3076 = vmatprep.subr.bf16.mxu0 0
        %3077 = vmatpush1.bf16.msra.mxu0 0
        %3078 = vmatprep.subr.bf16.mxu0 0
        %3079 = vmatpush1.bf16.msra.mxu0 0
        %3080 = vmatprep.subr.bf16.mxu0 0
        %3081 = vmatpush1.bf16.msra.mxu0 0
        %3082 = vmatprep.subr.bf16.mxu0 0
        %3083 = vmatpush1.bf16.msra.mxu0 0
        %3084 = vmatprep.subr.bf16.mxu0 0
        %3085 = vmatpush1.bf16.msra.mxu0 0
        %3086 = vmatprep.subr.bf16.mxu0 0
        %3087 = vmatpush1.bf16.msra.mxu0 0
        %3088 = vmatprep.subr.bf16.mxu0 0
        %3089 = vmatpush1.bf16.msra.mxu0 0
        %3090 = vmatprep.subr.bf16.mxu0 0
        %3091 = vmatpush1.bf16.msra.mxu0 0
        %3092 = vmatprep.mubr.bf16.mxu0 0
        %3093 = vmatmul.mubr.bf16.gmra.mrb[0].mxu0 %v3002
        %v3094 = vpop.f32.mrb[0].mxu0
        %v3095 = vadd.f32 %v2974, %v3094
        %v3096 = vpop.f32.mrb[0].mxu0
        %v3097 = vadd.f32 %v2974, %v3096
        %v3098 = vpop.f32.mrb[0].mxu0
        %v3099 = vadd.f32 %v2979, %v3098
        %v3100 = vpop.f32.mrb[0].mxu0
        %v3101 = vadd.f32 %v2979, %v3100
        %3102 = vmatprep.mubr.bf16.mxu0 0
        %3103 = vmatmul.mubr.bf16.gmra.mrb[0].mxu0 %v3005
        %v3104 = vpop.f32.mrb[0].mxu0
        %v3105 = vadd.f32 %v2984, %v3104
        %v3106 = vpop.f32.mrb[0].mxu0
        %v3107 = vadd.f32 %v2984, %v3106
        %v3108 = vpop.f32.mrb[0].mxu0
        %v3109 = vadd.f32 %v2989, %v3108
        %v3110 = vpop.f32.mrb[0].mxu0
        %v3111 = vadd.f32 %v2989, %v3110
        %3112 = vdwg.mxu0
        %v3113 = vmax.f32 %v3042, 0.0
        %v3114 = vmax.f32 %v3044, 0.0
        %v3115 = vmax.f32 %v3095, 0.0
        %v3116 = vmax.f32 %v3097, 0.0
        %v3117 = vmax.f32 %v3046, 0.0
        %v3118 = vmax.f32 %v3048, 0.0
        %v3119 = vmax.f32 %v3099, 0.0
        %v3120 = vmax.f32 %v3101, 0.0
        %v3121 = vmax.f32 %v3052, 0.0
        %v3122 = vmax.f32 %v3054, 0.0
        %v3123 = vmax.f32 %v3105, 0.0
        %v3124 = vmax.f32 %v3107, 0.0
        %v3125 = vmax.f32 %v3056, 0.0
        %v3126 = vmax.f32 %v3058, 0.0
        %v3127 = vmax.f32 %v3109, 0.0
        %v3128 = vmax.f32 %v3111, 0.0
        %v3129 = vadd.f32 %v3113, %v2472
        %v3130 = vadd.f32 %v3114, %v2473
        %v3131 = vadd.f32 %v3115, %v2474
        %v3132 = vadd.f32 %v3116, %v2475
        %v3133 = vadd.f32 %v3117, %v2476
        %v3134 = vadd.f32 %v3118, %v2477
        %v3135 = vadd.f32 %v3119, %v2478
        %v3136 = vadd.f32 %v3120, %v2479
        %v3137 = vadd.f32 %v3121, %v2480
        %v3138 = vadd.f32 %v3122, %v2481
        %v3139 = vadd.f32 %v3123, %v2482
        %v3140 = vadd.f32 %v3124, %v2483
        %v3141 = vadd.f32 %v3125, %v2484
        %v3142 = vadd.f32 %v3126, %v2485
        %v3143 = vadd.f32 %v3127, %v2486
        %v3144 = vadd.f32 %v3128, %v2487
        %v3145 = vadd.f32 %v3129, %v2710
        %v3146 = vadd.f32 %v3130, %v2712
        %v3147 = vadd.f32 %v3131, %v2763
        %v3148 = vadd.f32 %v3132, %v2765
        %v3149 = vadd.f32 %v3133, %v2714
        %v3150 = vadd.f32 %v3134, %v2716
        %v3151 = vadd.f32 %v3135, %v2767
        %v3152 = vadd.f32 %v3136, %v2769
        %v3153 = vadd.f32 %v3137, %v2720
        %v3154 = vadd.f32 %v3138, %v2722
        %v3155 = vadd.f32 %v3139, %v2773
        %v3156 = vadd.f32 %v3140, %v2775
        %v3157 = vadd.f32 %v3141, %v2724
        %v3158 = vadd.f32 %v3142, %v2726
        %v3159 = vadd.f32 %v3143, %v2777
        %v3160 = vadd.f32 %v3144, %v2779
        %3161 = vst [vmem:[%s688] sm:$0xff] %v3145
        %3162 = vst [vmem:[%s688 + $0x8] sm:$0xff] %v3146
        %3163 = vst [vmem:[%s688 + $0x10] sm:$0xff] %v3147
        %3164 = vst [vmem:[%s688 + $0x18] sm:$0xff] %v3148
        %3165 = vst [vmem:[%s688 + $0x20] sm:$0xff] %v3149
        %3166 = vst [vmem:[%s688 + $0x28] sm:$0xff] %v3150
        %3167 = vst [vmem:[%s688 + $0x30] sm:$0xff] %v3151
        %3168 = vst [vmem:[%s688 + $0x38] sm:$0xff] %v3152
        %3169 = vst [vmem:[%s688 + $0x40] sm:$0xff] %v3153
        %3170 = vst [vmem:[%s688 + $0x48] sm:$0xff] %v3154
        %3171 = vst [vmem:[%s688 + $0x50] sm:$0xff] %v3155
        %3172 = vst [vmem:[%s688 + $0x58] sm:$0xff] %v3156
        %3173 = vst [vmem:[%s688 + $0x60] sm:$0xff] %v3157
        %3174 = vst [vmem:[%s688 + $0x68] sm:$0xff] %v3158
        %3175 = vst [vmem:[%s688 + $0x70] sm:$0xff] %v3159
        %3176 = vst [vmem:[%s688 + $0x78] sm:$0xff] %v3160
        %s3177 = sand.u32 %s468, 1
        %s3178 = scalar_lea.sflag [#allocation3], %s3177
        %s3179 = sand.u32 %s468, 1
        %s3180 = smul.addr %s3179, 128
        %s3181 = scalar_lea.vmem [#allocation2], %s3180
        // Predicated region
        $region93: #{tpu_custom_call.1} parent=91 // pred_check
          %p3182 = pneg %p478
        $region94: #{tpu_custom_call.1} parent=91 // pred_check_branch
          %3184 = sbr.rel (%p3182) target = $region96
        $region95: #{tpu_custom_call.1} parent=91 // pred_region
          %s3185 = smul.u32 4, %s37
          %s3187 = ssub.s32 2048, 2048
          %3188 = vsyncadd %s3178, %s3187
          %s3189 = smul.addr %s36, 16
          %s3190 = sadd.s32 %s3185, %s3189
          %s3191 = smul.addr %s3190, 128
          %s3192 = scalar_lea.hbm %s18, %s3191
          %s3193 = sshll.u32 %s3181, 4
          %s3194 = int_to_ptr.vmem [resolvable:$true] %s3193
          %3199 = dma.vmem_to_hbm [thread:$0]  %s3194, 2048, %s3192, %s3178, 512, 512, 32
        $region96: #{tpu_custom_call.1} parent=91 // pred_fallthru
          _
      $region92: #{tpu_custom_call.1} parent=5 // pred_fallthru
        _
      %p3200 = scmp.le.s32.totalorder 2, %s27
      // Predicated region
      $region97: #{tpu_custom_call.1} parent=5 // pred_check
        %p3201 = pneg %p3200
      $region98: #{tpu_custom_call.1} parent=5 // pred_check_branch
        %3203 = sbr.rel (%p3201) target = $region100
      $region99: #{tpu_custom_call.1} parent=5 // pred_region
        %s3204 = ssub.s32 %s27, 2
        // Predicated region
        $region101: #{tpu_custom_call.1} parent=99 // pred_check
          %p3205 = pneg %p484
        $region102: #{tpu_custom_call.1} parent=99 // pred_check_branch
          %3207 = sbr.rel (%p3205) target = $region104
        $region103: #{tpu_custom_call.1} parent=99 // pred_region
          %s3208 = sand.u32 %s469, 1
          %s3209 = scalar_lea.sflag [#allocation3], %s3208
          %s3210 = sand.u32 %s469, 1
          %s3211 = smul.addr %s3210, 128
          %s3212 = scalar_lea.vmem [#allocation2], %s3211
          %3213 = dma.done %s3209, 2048
        $region104: #{tpu_custom_call.1} parent=99 // pred_fallthru
          _
      $region100: #{tpu_custom_call.1} parent=5 // pred_fallthru
        _
    $region6: #{tpu_custom_call.1} parent=1 // loop_footer
      %s31 = sadd.s32 1, %s27
    $region7: #{tpu_custom_call.1} parent=1 // loop_footer_branch
      %26 = sbr.rel target = $region3
    $region8: #{tpu_custom_call.1} parent=1 // loop_exit
      _
    %3214 = vsyncpa [#allocation3], 1
    %s3215 = scalar_lea.sflag [#allocation3], 1
    %3216 = vsyncpa %s3215, 1

</llo_original>
